<compile_context>
chip_gen: v7x
topology: tpu7x:2x2x1
jax: 0.10.0
libtpu: 0.0.40
codegen_flags: <defaults>
</compile_context>

<pallas_src>
import functools

import numpy as np
import jax
import jax.numpy as jnp
from jax.experimental import pallas as pl
from jax.experimental.pallas import tpu as pltpu


def _encoder_cnn_kernel(*refs, dims, eps):
    """Fused forward for all EncoderBlocks.

    refs layout:
      refs[0]              : a0   (N*(H0+2), W0*Cin0) bf16 - block-1 input, zero rows = v-pad
      refs[1+6k .. 6+6k]   : per-block params
                               WL    (3, in_cols, W*Cout) bf16  row-lowered (Toeplitz) conv weight
                               G     (W*Cout, Cout) f32         0/1 channel-group sum matrix
                               GT    (Cout, W*Cout) f32         its transpose (broadcast back)
                               gamma (1, Cout) f32, beta (1, Cout) f32
                               mask  (M, 1) f32                 1 on valid conv rows, 0 on seam junk
      refs[1+6*nb]         : out (N, n_classes) f32
      refs[2+6*nb ..]      : scratch: A_2..A_nb (bf16 padded inputs of blocks 2..nb),
                             P (f32 pool-staging slab, shared by all blocks)
    """
    nb = len(dims)
    a_ref = refs[0]
    blk = [refs[1 + 6 * k: 7 + 6 * k] for k in range(nb)]
    out_ref = refs[1 + 6 * nb]
    scratch = refs[2 + 6 * nb:]
    a_scr = scratch[:nb - 1]
    p_ref = scratch[nb - 1]

    a_in = a_ref
    for k in range(nb):
        N, H, W, _Cin, Cout, _stride = dims[k]
        Hp = H + 2
        L = W * Cout
        M = N * Hp - 2                      # batched conv rows (2 junk rows per image seam)
        Ho = H // 2
        wl_ref, g_ref, gt_ref, gam_ref, bet_ref, msk_ref = blk[k]

        # ---- Conv2d(3x3, pad=1): 3 batch-wide MXU matmuls (bf16 x bf16 -> f32) --------------
        # acc[r] = sum_dy a_in[r+dy] @ WL[dy]; row r = n*Hp + h is image n's output row h for
        # h < H, rows n*Hp+H / n*Hp+H+1 straddle image seams (masked from BN, never copied on).
        # The conv bias is dropped: it cancels exactly inside train-mode BatchNorm.
        acc = None
        for dy in range(3):
            part = jnp.dot(a_in[dy:dy + M, :], wl_ref[dy],
                           preferred_element_type=jnp.float32)
            acc = part if acc is None else acc + part
        y = acc                                                        # (M, L) f32

        # ---- BatchNorm2d (biased batch stats over N*H*W) in ONE pass + affine + ReLU --------
        mask = msk_ref[...]                                            # (M, 1)
        cnt = float(N * H * W)
        ym = y * mask
        stats = jnp.concatenate([jnp.sum(ym, axis=0, keepdims=True),
                                 jnp.sum(ym * ym, axis=0, keepdims=True)], axis=0)    # (2, L)
        st_c = jnp.dot(stats, g_ref[...], preferred_element_type=jnp.float32) / cnt   # (2, Cout)
        mean_c = st_c[0:1, :]
        var_c = st_c[1:2, :] - mean_c * mean_c
        scale_c = gam_ref[...] * jax.lax.rsqrt(var_c + eps)
        shift_c = bet_ref[...] - mean_c * scale_c
        rows = jnp.dot(jnp.concatenate([scale_c, shift_c], axis=0), gt_ref[...],
                       preferred_element_type=jnp.float32)             # (2, L)
        y = jnp.maximum(y * rows[0:1, :] + rows[1:2, :], 0.0)          # BN affine + ReLU

        # ---- MaxPool2d(2) from registers: adjacent-row max + lane-shift max -----------------
        v = jnp.maximum(y[:-1, :], y[1:, :])                           # (M-1, L)
        m = jnp.maximum(v[:, :L - Cout], v[:, Cout:])                  # (M-1, L-Cout)
        pr, pc = M - 1, L - Cout
        p_ref[0:pr, 0:pc] = m            # f32 staging so the even-row picks can use strided reads

        if k == nb - 1:
            # Final block pools to 1x1: row n*Hp of the staging slab is image n's flat output.
            out_ref[...] = p_ref[pl.ds(0, N, stride=Hp), 0:pc]
        else:
            a_next = a_scr[k]
            Hp2 = Ho + 2
            a_next[...] = jnp.zeros_like(a_next)                       # zero rows = vertical pad
            for n in range(N):                                         # one Ho-row bulk copy/image
                a_next[n * Hp2 + 1:n * Hp2 + 1 + Ho, :] = (
                    p_ref[pl.ds(n * Hp, Ho, stride=2), 0:pc].astype(a_next.dtype))
            a_in = a_next


def _lower_conv_weight(wconv, in_stride, w_out, in_cols):
    """Row-lowered (Toeplitz) 3x3 conv weight.

    wl[dy, win*in_stride + ci, w*cout + co] = wconv[dy, win - w + 1, ci, co] for valid taps.
    Zero rows implement the horizontal zero padding and skip the junk odd-w lane groups left by
    the previous block's horizontal max-pool.
    """
    wc = np.asarray(wconv, np.float32)          # (3, 3, cin, cout)
    _, _, cin, cout = wc.shape
    wl = np.zeros((3, in_cols, w_out * cout), np.float32)
    for dy in range(3):
        for w in range(w_out):
            for dx in range(3):
                win = w + dx - 1
                if 0 <= win < w_out:
                    wl[dy, win * in_stride:win * in_stride + cin,
                       w * cout:(w + 1) * cout] = wc[dy, dx]
    return jnp.asarray(wl, jnp.bfloat16)


def encoder_cnn(x_nchw, params, eps=1e-5):
    """Forward pass of EncoderCNN (NCHW input, flattened output) via one fused Pallas kernel."""
    N, Cin0, H0, W0 = (int(s) for s in x_nchw.shape)

    # Per-block static dims: (N, H, W, Cin, Cout, lane stride of one input pixel).
    dims = []
    H, W, Cin, stride = H0, W0, Cin0, Cin0
    for (wconv, _b, _g, _t) in params:
        assert H % 2 == 0 and W % 2 == 0, "MaxPool2d(2) needs even spatial dims"
        Cout = int(wconv.shape[-1])
        dims.append((N, H, W, Cin, Cout, stride))
        stride, Cin, H, W = 2 * Cout, Cout, H // 2, W // 2
    assert H == 1 and W == 1, "wrapper assumes the final pooled feature map is 1x1"
    n_classes = dims[-1][4]

    # Block-1 input slab (bf16): rows = n*(H0+2)+h (zero rows = vertical pad), lanes = w*Cin0 + c.
    xt = jnp.transpose(x_nchw, (0, 2, 3, 1)).reshape(N, H0, W0 * Cin0)
    a0 = jnp.pad(xt, ((0, 0), (1, 1), (0, 0))).reshape(
        N * (H0 + 2), W0 * Cin0).astype(jnp.bfloat16)

    inputs = [a0]
    flops = 0
    trans = 0
    for k, (wconv, _b, g, t) in enumerate(params):
        _, Hk, Wk, Cink, Coutk, stridek = dims[k]
        Hpk, Mk = Hk + 2, N * (Hk + 2) - 2
        in_cols = (Wk - 1) * stridek + Cink
        wl = _lower_conv_weight(wconv, stridek, Wk, in_cols)
        gmat = jnp.tile(jnp.eye(Coutk, dtype=jnp.float32), (Wk, 1))    # (Wk*Coutk, Coutk)
        gmt = jnp.transpose(gmat)
        gam = jnp.reshape(g, (1, Coutk)).astype(jnp.float32)
        bet = jnp.reshape(t, (1, Coutk)).astype(jnp.float32)
        mask = jnp.asarray(((np.arange(Mk) % Hpk) < Hk).astype(np.float32).reshape(Mk, 1))
        inputs += [wl, gmat, gmt, gam, bet, mask]
        flops += 2 * N * Hk * Wk * 9 * Cink * Coutk
        trans += Coutk

    scratch_shapes = []
    scratch_bytes = 0
    for k in range(1, len(params)):            # bf16 padded inputs of blocks 2..nb
        _, Hk, Wk, Cink, _Coutk, stridek = dims[k]
        shape = (N * (Hk + 2), (Wk - 1) * stridek + Cink)
        scratch_shapes.append(pltpu.VMEM(shape, jnp.bfloat16))
        scratch_bytes += shape[0] * shape[1] * 2
    prow = max(N * (d[1] + 2) - 3 for d in dims)               # max over blocks of (M_k - 1)
    pcol = max(d[2] * d[4] - d[4] for d in dims)               # max over blocks of (L_k - Cout_k)
    scratch_shapes.append(pltpu.VMEM((prow, pcol), jnp.float32))
    scratch_bytes += prow * pcol * 4

    in_bytes = sum(int(a.size) * a.dtype.itemsize for a in inputs)
    out_bytes = N * n_classes * 4
    need = in_bytes + out_bytes + scratch_bytes
    try:                                       # size the VMEM budget from the real footprint
        vmem_cap = int(pltpu.get_tpu_info().vmem_capacity_bytes)
    except Exception:
        vmem_cap = 64 * 1024 * 1024            # v7x physical capacity as a safe lower bound
    vmem_limit = int(min(vmem_cap, max(16 * 1024 * 1024, 2 * need)))

    kernel = functools.partial(_encoder_cnn_kernel, dims=tuple(dims), eps=float(eps))
    out = pl.pallas_call(
        kernel,
        out_shape=jax.ShapeDtypeStruct((N, n_classes), jnp.float32),
        in_specs=[pl.BlockSpec(memory_space=pltpu.MemorySpace.VMEM)] * len(inputs),
        out_specs=pl.BlockSpec(memory_space=pltpu.MemorySpace.VMEM),
        scratch_shapes=scratch_shapes,
        compiler_params=pltpu.CompilerParams(vmem_limit_bytes=vmem_limit),
        cost_estimate=pl.CostEstimate(flops=int(flops), transcendentals=int(trans),
                                      bytes_accessed=int(in_bytes + out_bytes)),
    )(*inputs)
    return out


def init_params(key, in_channels, out_channels, n_classes):
    """Deterministic synthetic parameters matching EncoderCNN.__init__ shapes."""
    chans = [
        (in_channels, out_channels),
        (out_channels, out_channels),
        (out_channels, out_channels),
        (out_channels, n_classes),
    ]
    params = []
    for cin, cout in chans:
        key, kw, kb = jax.random.split(key, 3)
        bound = (1.0 / (cin * 9)) ** 0.5  # PyTorch Conv2d default init range
        w = jax.random.uniform(kw, (3, 3, cin, cout), jnp.float32, -bound, bound)
        b = jax.random.uniform(kb, (1, cout), jnp.float32, -bound, bound)
        gamma = jnp.ones((1, cout), jnp.float32)   # BatchNorm2d default weight
        beta = jnp.zeros((1, cout), jnp.float32)   # BatchNorm2d default bias
        params.append((w, b, gamma, beta))
    return params


def _reference_forward(x_nchw, params, eps=1e-5):
    """Pure-JAX reference (weights/activations rounded to bf16 like the kernel's MXU operands)."""
    x = jnp.transpose(x_nchw, (0, 2, 3, 1)).astype(jnp.float32)      # NHWC
    for (w, b, g, t) in params:
        wq = w.astype(jnp.bfloat16).astype(jnp.float32)
        xq = x.astype(jnp.bfloat16).astype(jnp.float32)
        y = jax.lax.conv_general_dilated(
            xq, wq, window_strides=(1, 1), padding="SAME",
            dimension_numbers=("NHWC", "HWIO", "NHWC"),
            precision=jax.lax.Precision.HIGHEST)
        y = y + b.reshape(1, 1, 1, -1)
        mean = jnp.mean(y, axis=(0, 1, 2), keepdims=True)
        var = jnp.mean(jnp.square(y - mean), axis=(0, 1, 2), keepdims=True)
        y = (y - mean) * jax.lax.rsqrt(var + eps)
        y = y * g.reshape(1, 1, 1, -1) + t.reshape(1, 1, 1, -1)
        y = jnp.maximum(y, 0.0)
        Nb, Hb, Wb, Cb = y.shape
        x = y.reshape(Nb, Hb // 2, 2, Wb // 2, 2, Cb).max(axis=(2, 4))
    xn = jnp.transpose(x, (0, 3, 1, 2))
    return xn.reshape(xn.shape[0], -1)


if __name__ == "__main__":
    key = jax.random.PRNGKey(0)
    kx, kp = jax.random.split(key)

    N, Cin, Hs, Ws = 2, 4, 16, 16          # 16 -> 8 -> 4 -> 2 -> 1 after four 2x2 pools
    out_channels, n_classes = 8, 4

    x = jax.random.normal(kx, (N, Cin, Hs, Ws), jnp.float32)
    params = init_params(kp, Cin, out_channels, n_classes)

    out = encoder_cnn(x, params)
    out = jax.block_until_ready(out)

    assert out.shape == (N, n_classes), out.shape
    assert bool(jnp.all(jnp.isfinite(out)))

    # Sanity check against a pure-JAX reference (loose tolerance: bf16 matmul operands).
    ref = _reference_forward(x, params)
    assert bool(jnp.max(jnp.abs(out - ref)) < 0.15), "kernel/reference mismatch"

    print("KERNEL_OK")
</pallas_src>

<mosaic_0001>
module attributes {stable_mosaic.version = 11 : i64} {
  func.func @_encoder_cnn_kernel(%arg0: memref<36x64xbf16, #tpu.memory_space<vmem>>, %arg1: memref<3x64x128xbf16, #tpu.memory_space<vmem>>, %arg2: memref<128x8xf32, #tpu.memory_space<vmem>>, %arg3: memref<8x128xf32, #tpu.memory_space<vmem>>, %arg4: memref<1x8xf32, #tpu.memory_space<vmem>>, %arg5: memref<1x8xf32, #tpu.memory_space<vmem>>, %arg6: memref<34x1xf32, #tpu.memory_space<vmem>>, %arg7: memref<3x120x64xbf16, #tpu.memory_space<vmem>>, %arg8: memref<64x8xf32, #tpu.memory_space<vmem>>, %arg9: memref<8x64xf32, #tpu.memory_space<vmem>>, %arg10: memref<1x8xf32, #tpu.memory_space<vmem>>, %arg11: memref<1x8xf32, #tpu.memory_space<vmem>>, %arg12: memref<18x1xf32, #tpu.memory_space<vmem>>, %arg13: memref<3x56x32xbf16, #tpu.memory_space<vmem>>, %arg14: memref<32x8xf32, #tpu.memory_space<vmem>>, %arg15: memref<8x32xf32, #tpu.memory_space<vmem>>, %arg16: memref<1x8xf32, #tpu.memory_space<vmem>>, %arg17: memref<1x8xf32, #tpu.memory_space<vmem>>, %arg18: memref<10x1xf32, #tpu.memory_space<vmem>>, %arg19: memref<3x24x8xbf16, #tpu.memory_space<vmem>>, %arg20: memref<8x4xf32, #tpu.memory_space<vmem>>, %arg21: memref<4x8xf32, #tpu.memory_space<vmem>>, %arg22: memref<1x4xf32, #tpu.memory_space<vmem>>, %arg23: memref<1x4xf32, #tpu.memory_space<vmem>>, %arg24: memref<6x1xf32, #tpu.memory_space<vmem>>, %arg25: memref<2x4xf32, #tpu.memory_space<vmem>>, %arg26: memref<20x120xbf16, #tpu.memory_space<vmem>>, %arg27: memref<12x56xbf16, #tpu.memory_space<vmem>>, %arg28: memref<8x24xbf16, #tpu.memory_space<vmem>>, %arg29: memref<33x120xf32, #tpu.memory_space<vmem>>) attributes {dimension_semantics = [], scalar_prefetch = 0 : i64, scratch_operands = 4 : i64, tpu.core_type = #tpu.core_type<tc>} {
    %c0 = arith.constant 0 : index
    %c0_0 = arith.constant 0 : index
    %0 = vector.load %arg0[%c0, %c0_0] : memref<36x64xbf16, #tpu.memory_space<vmem>>, vector<34x64xbf16>
    %c0_1 = arith.constant 0 : index
    %c0_2 = arith.constant 0 : index
    %c0_3 = arith.constant 0 : index
    %1 = vector.load %arg1[%c0_1, %c0_2, %c0_3] : memref<3x64x128xbf16, #tpu.memory_space<vmem>>, vector<1x64x128xbf16>
    %2 = vector.shape_cast %1 : vector<1x64x128xbf16> to vector<64x128xbf16>
    %cst = arith.constant dense<0.000000e+00> : vector<34x128xf32>
    %3 = tpu.matmul %0, %2, %cst {dimension_numbers = #tpu.dot_dimension_numbers<[1], [0], [0], [1], [0, 0, 1, 1], [], []>} : vector<34x64xbf16>, vector<64x128xbf16>, vector<34x128xf32> -> vector<34x128xf32>
    %c1 = arith.constant 1 : index
    %c0_4 = arith.constant 0 : index
    %4 = vector.load %arg0[%c1, %c0_4] : memref<36x64xbf16, #tpu.memory_space<vmem>>, vector<34x64xbf16>
    %c1_5 = arith.constant 1 : index
    %c0_6 = arith.constant 0 : index
    %c0_7 = arith.constant 0 : index
    %5 = vector.load %arg1[%c1_5, %c0_6, %c0_7] : memref<3x64x128xbf16, #tpu.memory_space<vmem>>, vector<1x64x128xbf16>
    %6 = vector.shape_cast %5 : vector<1x64x128xbf16> to vector<64x128xbf16>
    %cst_8 = arith.constant dense<0.000000e+00> : vector<34x128xf32>
    %7 = tpu.matmul %4, %6, %cst_8 {dimension_numbers = #tpu.dot_dimension_numbers<[1], [0], [0], [1], [0, 0, 1, 1], [], []>} : vector<34x64xbf16>, vector<64x128xbf16>, vector<34x128xf32> -> vector<34x128xf32>
    %8 = arith.addf %3, %7 : vector<34x128xf32>
    %c2 = arith.constant 2 : index
    %c0_9 = arith.constant 0 : index
    %9 = vector.load %arg0[%c2, %c0_9] : memref<36x64xbf16, #tpu.memory_space<vmem>>, vector<34x64xbf16>
    %c2_10 = arith.constant 2 : index
    %c0_11 = arith.constant 0 : index
    %c0_12 = arith.constant 0 : index
    %10 = vector.load %arg1[%c2_10, %c0_11, %c0_12] : memref<3x64x128xbf16, #tpu.memory_space<vmem>>, vector<1x64x128xbf16>
    %11 = vector.shape_cast %10 : vector<1x64x128xbf16> to vector<64x128xbf16>
    %cst_13 = arith.constant dense<0.000000e+00> : vector<34x128xf32>
    %12 = tpu.matmul %9, %11, %cst_13 {dimension_numbers = #tpu.dot_dimension_numbers<[1], [0], [0], [1], [0, 0, 1, 1], [], []>} : vector<34x64xbf16>, vector<64x128xbf16>, vector<34x128xf32> -> vector<34x128xf32>
    %13 = arith.addf %8, %12 : vector<34x128xf32>
    %c0_14 = arith.constant 0 : index
    %c0_15 = arith.constant 0 : index
    %14 = vector.load %arg6[%c0_14, %c0_15] : memref<34x1xf32, #tpu.memory_space<vmem>>, vector<34x1xf32>
    %15 = vector.broadcast %14 : vector<34x1xf32> to vector<34x128xf32>
    %16 = arith.mulf %13, %15 : vector<34x128xf32>
    %cst_16 = arith.constant dense<0.000000e+00> : vector<128xf32>
    %17 = vector.multi_reduction <add>, %16, %cst_16 [0] : vector<34x128xf32> to vector<128xf32>
    %18 = vector.shape_cast %17 : vector<128xf32> to vector<1x128xf32>
    %19 = arith.mulf %16, %16 : vector<34x128xf32>
    %cst_17 = arith.constant dense<0.000000e+00> : vector<128xf32>
    %20 = vector.multi_reduction <add>, %19, %cst_17 [0] : vector<34x128xf32> to vector<128xf32>
    %21 = vector.shape_cast %20 : vector<128xf32> to vector<1x128xf32>
    %22 = tpu.concatenate %18, %21 in 0 : vector<1x128xf32>, vector<1x128xf32> -> vector<2x128xf32>
    %c0_18 = arith.constant 0 : index
    %c0_19 = arith.constant 0 : index
    %23 = vector.load %arg2[%c0_18, %c0_19] : memref<128x8xf32, #tpu.memory_space<vmem>>, vector<128x8xf32>
    %cst_20 = arith.constant dense<0.000000e+00> : vector<2x8xf32>
    %24 = tpu.matmul %22, %23, %cst_20 {dimension_numbers = #tpu.dot_dimension_numbers<[1], [0], [0], [1], [0, 0, 1, 1], [], []>} : vector<2x128xf32>, vector<128x8xf32>, vector<2x8xf32> -> vector<2x8xf32>
    %cst_21 = arith.constant 5.120000e+02 : f32
    %25 = vector.broadcast %cst_21 : f32 to vector<2x8xf32>
    %26 = arith.divf %24, %25 : vector<2x8xf32>
    %27 = vector.extract_strided_slice %26 {offsets = [0, 0], sizes = [1, 8], strides = [1, 1]} : vector<2x8xf32> to vector<1x8xf32>
    %28 = vector.extract_strided_slice %26 {offsets = [1, 0], sizes = [1, 8], strides = [1, 1]} : vector<2x8xf32> to vector<1x8xf32>
    %29 = arith.mulf %27, %27 : vector<1x8xf32>
    %30 = arith.subf %28, %29 : vector<1x8xf32>
    %c0_22 = arith.constant 0 : index
    %c0_23 = arith.constant 0 : index
    %31 = vector.load %arg4[%c0_22, %c0_23] : memref<1x8xf32, #tpu.memory_space<vmem>>, vector<1x8xf32>
    %cst_24 = arith.constant 9.99999974E-6 : f32
    %32 = vector.broadcast %cst_24 : f32 to vector<1x8xf32>
    %33 = arith.addf %30, %32 : vector<1x8xf32>
    %34 = math.rsqrt %33 : vector<1x8xf32>
    %35 = arith.mulf %31, %34 : vector<1x8xf32>
    %c0_25 = arith.constant 0 : index
    %c0_26 = arith.constant 0 : index
    %36 = vector.load %arg5[%c0_25, %c0_26] : memref<1x8xf32, #tpu.memory_space<vmem>>, vector<1x8xf32>
    %37 = arith.mulf %27, %35 : vector<1x8xf32>
    %38 = arith.subf %36, %37 : vector<1x8xf32>
    %39 = tpu.concatenate %35, %38 in 0 : vector<1x8xf32>, vector<1x8xf32> -> vector<2x8xf32>
    %c0_27 = arith.constant 0 : index
    %c0_28 = arith.constant 0 : index
    %40 = vector.load %arg3[%c0_27, %c0_28] : memref<8x128xf32, #tpu.memory_space<vmem>>, vector<8x128xf32>
    %cst_29 = arith.constant dense<0.000000e+00> : vector<2x128xf32>
    %41 = tpu.matmul %39, %40, %cst_29 {dimension_numbers = #tpu.dot_dimension_numbers<[1], [0], [0], [1], [0, 0, 1, 1], [], []>} : vector<2x8xf32>, vector<8x128xf32>, vector<2x128xf32> -> vector<2x128xf32>
    %42 = vector.extract_strided_slice %41 {offsets = [0, 0], sizes = [1, 128], strides = [1, 1]} : vector<2x128xf32> to vector<1x128xf32>
    %43 = vector.broadcast %42 : vector<1x128xf32> to vector<34x128xf32>
    %44 = arith.mulf %13, %43 : vector<34x128xf32>
    %45 = vector.extract_strided_slice %41 {offsets = [1, 0], sizes = [1, 128], strides = [1, 1]} : vector<2x128xf32> to vector<1x128xf32>
    %46 = vector.broadcast %45 : vector<1x128xf32> to vector<34x128xf32>
    %47 = arith.addf %44, %46 : vector<34x128xf32>
    %cst_30 = arith.constant 0.000000e+00 : f32
    %48 = vector.broadcast %cst_30 : f32 to vector<34x128xf32>
    %49 = arith.maximumf %47, %48 : vector<34x128xf32>
    %50 = vector.extract_strided_slice %49 {offsets = [0, 0], sizes = [33, 128], strides = [1, 1]} : vector<34x128xf32> to vector<33x128xf32>
    %51 = vector.extract_strided_slice %49 {offsets = [1, 0], sizes = [33, 128], strides = [1, 1]} : vector<34x128xf32> to vector<33x128xf32>
    %52 = arith.maximumf %50, %51 : vector<33x128xf32>
    %53 = vector.extract_strided_slice %52 {offsets = [0, 0], sizes = [33, 120], strides = [1, 1]} : vector<33x128xf32> to vector<33x120xf32>
    %54 = vector.extract_strided_slice %52 {offsets = [0, 8], sizes = [33, 120], strides = [1, 1]} : vector<33x128xf32> to vector<33x120xf32>
    %55 = arith.maximumf %53, %54 : vector<33x120xf32>
    %c0_31 = arith.constant 0 : index
    %c0_32 = arith.constant 0 : index
    %56 = vector.load %arg29[%c0_31, %c0_32] : memref<33x120xf32, #tpu.memory_space<vmem>>, vector<33x120xf32>
    tpu.vector_store %arg29[%c0_31, %c0_32], %55 {strides = array<i32>} : memref<33x120xf32, #tpu.memory_space<vmem>>, vector<33x120xf32>,
    %cst_33 = arith.constant 0.000000e+00 : bf16
    %57 = vector.broadcast %cst_33 : bf16 to vector<20x120xbf16>
    %c0_34 = arith.constant 0 : index
    %c0_35 = arith.constant 0 : index
    %58 = vector.load %arg26[%c0_34, %c0_35] : memref<20x120xbf16, #tpu.memory_space<vmem>>, vector<20x120xbf16>
    tpu.vector_store %arg26[%c0_34, %c0_35], %57 {strides = array<i32>} : memref<20x120xbf16, #tpu.memory_space<vmem>>, vector<20x120xbf16>,
    %c0_36 = arith.constant 0 : index
    %c0_37 = arith.constant 0 : index
    %59 = tpu.strided_load %arg29[%c0_36, %c0_37] {strides = array<i32: 2, 1>} : memref<33x120xf32, #tpu.memory_space<vmem>>, vector<8x120xf32>
    %60 = arith.truncf %59 : vector<8x120xf32> to vector<8x120xbf16>
    %c1_38 = arith.constant 1 : index
    %c0_39 = arith.constant 0 : index
    %61 = vector.load %arg26[%c1_38, %c0_39] : memref<20x120xbf16, #tpu.memory_space<vmem>>, vector<8x120xbf16>
    tpu.vector_store %arg26[%c1_38, %c0_39], %60 {strides = array<i32>} : memref<20x120xbf16, #tpu.memory_space<vmem>>, vector<8x120xbf16>,
    %c18 = arith.constant 18 : index
    %c0_40 = arith.constant 0 : index
    %62 = tpu.strided_load %arg29[%c18, %c0_40] {strides = array<i32: 2, 1>} : memref<33x120xf32, #tpu.memory_space<vmem>>, vector<8x120xf32>
    %63 = arith.truncf %62 : vector<8x120xf32> to vector<8x120xbf16>
    %c11 = arith.constant 11 : index
    %c0_41 = arith.constant 0 : index
    %64 = vector.load %arg26[%c11, %c0_41] : memref<20x120xbf16, #tpu.memory_space<vmem>>, vector<8x120xbf16>
    tpu.vector_store %arg26[%c11, %c0_41], %63 {strides = array<i32>} : memref<20x120xbf16, #tpu.memory_space<vmem>>, vector<8x120xbf16>,
    %c0_42 = arith.constant 0 : index
    %c0_43 = arith.constant 0 : index
    %65 = vector.load %arg26[%c0_42, %c0_43] : memref<20x120xbf16, #tpu.memory_space<vmem>>, vector<18x120xbf16>
    %c0_44 = arith.constant 0 : index
    %c0_45 = arith.constant 0 : index
    %c0_46 = arith.constant 0 : index
    %66 = vector.load %arg7[%c0_44, %c0_45, %c0_46] : memref<3x120x64xbf16, #tpu.memory_space<vmem>>, vector<1x120x64xbf16>
    %67 = vector.shape_cast %66 : vector<1x120x64xbf16> to vector<120x64xbf16>
    %cst_47 = arith.constant dense<0.000000e+00> : vector<18x64xf32>
    %68 = tpu.matmul %65, %67, %cst_47 {dimension_numbers = #tpu.dot_dimension_numbers<[1], [0], [0], [1], [0, 0, 1, 1], [], []>} : vector<18x120xbf16>, vector<120x64xbf16>, vector<18x64xf32> -> vector<18x64xf32>
    %c1_48 = arith.constant 1 : index
    %c0_49 = arith.constant 0 : index
    %69 = vector.load %arg26[%c1_48, %c0_49] : memref<20x120xbf16, #tpu.memory_space<vmem>>, vector<18x120xbf16>
    %c1_50 = arith.constant 1 : index
    %c0_51 = arith.constant 0 : index
    %c0_52 = arith.constant 0 : index
    %70 = vector.load %arg7[%c1_50, %c0_51, %c0_52] : memref<3x120x64xbf16, #tpu.memory_space<vmem>>, vector<1x120x64xbf16>
    %71 = vector.shape_cast %70 : vector<1x120x64xbf16> to vector<120x64xbf16>
    %cst_53 = arith.constant dense<0.000000e+00> : vector<18x64xf32>
    %72 = tpu.matmul %69, %71, %cst_53 {dimension_numbers = #tpu.dot_dimension_numbers<[1], [0], [0], [1], [0, 0, 1, 1], [], []>} : vector<18x120xbf16>, vector<120x64xbf16>, vector<18x64xf32> -> vector<18x64xf32>
    %73 = arith.addf %68, %72 : vector<18x64xf32>
    %c2_54 = arith.constant 2 : index
    %c0_55 = arith.constant 0 : index
    %74 = vector.load %arg26[%c2_54, %c0_55] : memref<20x120xbf16, #tpu.memory_space<vmem>>, vector<18x120xbf16>
    %c2_56 = arith.constant 2 : index
    %c0_57 = arith.constant 0 : index
    %c0_58 = arith.constant 0 : index
    %75 = vector.load %arg7[%c2_56, %c0_57, %c0_58] : memref<3x120x64xbf16, #tpu.memory_space<vmem>>, vector<1x120x64xbf16>
    %76 = vector.shape_cast %75 : vector<1x120x64xbf16> to vector<120x64xbf16>
    %cst_59 = arith.constant dense<0.000000e+00> : vector<18x64xf32>
    %77 = tpu.matmul %74, %76, %cst_59 {dimension_numbers = #tpu.dot_dimension_numbers<[1], [0], [0], [1], [0, 0, 1, 1], [], []>} : vector<18x120xbf16>, vector<120x64xbf16>, vector<18x64xf32> -> vector<18x64xf32>
    %78 = arith.addf %73, %77 : vector<18x64xf32>
    %c0_60 = arith.constant 0 : index
    %c0_61 = arith.constant 0 : index
    %79 = vector.load %arg12[%c0_60, %c0_61] : memref<18x1xf32, #tpu.memory_space<vmem>>, vector<18x1xf32>
    %80 = vector.broadcast %79 : vector<18x1xf32> to vector<18x64xf32>
    %81 = arith.mulf %78, %80 : vector<18x64xf32>
    %cst_62 = arith.constant dense<0.000000e+00> : vector<64xf32>
    %82 = vector.multi_reduction <add>, %81, %cst_62 [0] : vector<18x64xf32> to vector<64xf32>
    %83 = vector.shape_cast %82 : vector<64xf32> to vector<1x64xf32>
    %84 = arith.mulf %81, %81 : vector<18x64xf32>
    %cst_63 = arith.constant dense<0.000000e+00> : vector<64xf32>
    %85 = vector.multi_reduction <add>, %84, %cst_63 [0] : vector<18x64xf32> to vector<64xf32>
    %86 = vector.shape_cast %85 : vector<64xf32> to vector<1x64xf32>
    %87 = tpu.concatenate %83, %86 in 0 : vector<1x64xf32>, vector<1x64xf32> -> vector<2x64xf32>
    %c0_64 = arith.constant 0 : index
    %c0_65 = arith.constant 0 : index
    %88 = vector.load %arg8[%c0_64, %c0_65] : memref<64x8xf32, #tpu.memory_space<vmem>>, vector<64x8xf32>
    %cst_66 = arith.constant dense<0.000000e+00> : vector<2x8xf32>
    %89 = tpu.matmul %87, %88, %cst_66 {dimension_numbers = #tpu.dot_dimension_numbers<[1], [0], [0], [1], [0, 0, 1, 1], [], []>} : vector<2x64xf32>, vector<64x8xf32>, vector<2x8xf32> -> vector<2x8xf32>
    %cst_67 = arith.constant 1.280000e+02 : f32
    %90 = vector.broadcast %cst_67 : f32 to vector<2x8xf32>
    %91 = arith.divf %89, %90 : vector<2x8xf32>
    %92 = vector.extract_strided_slice %91 {offsets = [0, 0], sizes = [1, 8], strides = [1, 1]} : vector<2x8xf32> to vector<1x8xf32>
    %93 = vector.extract_strided_slice %91 {offsets = [1, 0], sizes = [1, 8], strides = [1, 1]} : vector<2x8xf32> to vector<1x8xf32>
    %94 = arith.mulf %92, %92 : vector<1x8xf32>
    %95 = arith.subf %93, %94 : vector<1x8xf32>
    %c0_68 = arith.constant 0 : index
    %c0_69 = arith.constant 0 : index
    %96 = vector.load %arg10[%c0_68, %c0_69] : memref<1x8xf32, #tpu.memory_space<vmem>>, vector<1x8xf32>
    %cst_70 = arith.constant 9.99999974E-6 : f32
    %97 = vector.broadcast %cst_70 : f32 to vector<1x8xf32>
    %98 = arith.addf %95, %97 : vector<1x8xf32>
    %99 = math.rsqrt %98 : vector<1x8xf32>
    %100 = arith.mulf %96, %99 : vector<1x8xf32>
    %c0_71 = arith.constant 0 : index
    %c0_72 = arith.constant 0 : index
    %101 = vector.load %arg11[%c0_71, %c0_72] : memref<1x8xf32, #tpu.memory_space<vmem>>, vector<1x8xf32>
    %102 = arith.mulf %92, %100 : vector<1x8xf32>
    %103 = arith.subf %101, %102 : vector<1x8xf32>
    %104 = tpu.concatenate %100, %103 in 0 : vector<1x8xf32>, vector<1x8xf32> -> vector<2x8xf32>
    %c0_73 = arith.constant 0 : index
    %c0_74 = arith.constant 0 : index
    %105 = vector.load %arg9[%c0_73, %c0_74] : memref<8x64xf32, #tpu.memory_space<vmem>>, vector<8x64xf32>
    %cst_75 = arith.constant dense<0.000000e+00> : vector<2x64xf32>
    %106 = tpu.matmul %104, %105, %cst_75 {dimension_numbers = #tpu.dot_dimension_numbers<[1], [0], [0], [1], [0, 0, 1, 1], [], []>} : vector<2x8xf32>, vector<8x64xf32>, vector<2x64xf32> -> vector<2x64xf32>
    %107 = vector.extract_strided_slice %106 {offsets = [0, 0], sizes = [1, 64], strides = [1, 1]} : vector<2x64xf32> to vector<1x64xf32>
    %108 = vector.broadcast %107 : vector<1x64xf32> to vector<18x64xf32>
    %109 = arith.mulf %78, %108 : vector<18x64xf32>
    %110 = vector.extract_strided_slice %106 {offsets = [1, 0], sizes = [1, 64], strides = [1, 1]} : vector<2x64xf32> to vector<1x64xf32>
    %111 = vector.broadcast %110 : vector<1x64xf32> to vector<18x64xf32>
    %112 = arith.addf %109, %111 : vector<18x64xf32>
    %cst_76 = arith.constant 0.000000e+00 : f32
    %113 = vector.broadcast %cst_76 : f32 to vector<18x64xf32>
    %114 = arith.maximumf %112, %113 : vector<18x64xf32>
    %115 = vector.extract_strided_slice %114 {offsets = [0, 0], sizes = [17, 64], strides = [1, 1]} : vector<18x64xf32> to vector<17x64xf32>
    %116 = vector.extract_strided_slice %114 {offsets = [1, 0], sizes = [17, 64], strides = [1, 1]} : vector<18x64xf32> to vector<17x64xf32>
    %117 = arith.maximumf %115, %116 : vector<17x64xf32>
    %118 = vector.extract_strided_slice %117 {offsets = [0, 0], sizes = [17, 56], strides = [1, 1]} : vector<17x64xf32> to vector<17x56xf32>
    %119 = vector.extract_strided_slice %117 {offsets = [0, 8], sizes = [17, 56], strides = [1, 1]} : vector<17x64xf32> to vector<17x56xf32>
    %120 = arith.maximumf %118, %119 : vector<17x56xf32>
    %c0_77 = arith.constant 0 : index
    %c0_78 = arith.constant 0 : index
    %121 = vector.load %arg29[%c0_77, %c0_78] : memref<33x120xf32, #tpu.memory_space<vmem>>, vector<17x56xf32>
    tpu.vector_store %arg29[%c0_77, %c0_78], %120 {strides = array<i32>} : memref<33x120xf32, #tpu.memory_space<vmem>>, vector<17x56xf32>,
    %cst_79 = arith.constant 0.000000e+00 : bf16
    %122 = vector.broadcast %cst_79 : bf16 to vector<12x56xbf16>
    %c0_80 = arith.constant 0 : index
    %c0_81 = arith.constant 0 : index
    %123 = vector.load %arg27[%c0_80, %c0_81] : memref<12x56xbf16, #tpu.memory_space<vmem>>, vector<12x56xbf16>
    tpu.vector_store %arg27[%c0_80, %c0_81], %122 {strides = array<i32>} : memref<12x56xbf16, #tpu.memory_space<vmem>>, vector<12x56xbf16>,
    %c0_82 = arith.constant 0 : index
    %c0_83 = arith.constant 0 : index
    %124 = tpu.strided_load %arg29[%c0_82, %c0_83] {strides = array<i32: 2, 1>} : memref<33x120xf32, #tpu.memory_space<vmem>>, vector<4x56xf32>
    %125 = arith.truncf %124 : vector<4x56xf32> to vector<4x56xbf16>
    %c1_84 = arith.constant 1 : index
    %c0_85 = arith.constant 0 : index
    %126 = vector.load %arg27[%c1_84, %c0_85] : memref<12x56xbf16, #tpu.memory_space<vmem>>, vector<4x56xbf16>
    tpu.vector_store %arg27[%c1_84, %c0_85], %125 {strides = array<i32>} : memref<12x56xbf16, #tpu.memory_space<vmem>>, vector<4x56xbf16>,
    %c10 = arith.constant 10 : index
    %c0_86 = arith.constant 0 : index
    %127 = tpu.strided_load %arg29[%c10, %c0_86] {strides = array<i32: 2, 1>} : memref<33x120xf32, #tpu.memory_space<vmem>>, vector<4x56xf32>
    %128 = arith.truncf %127 : vector<4x56xf32> to vector<4x56xbf16>
    %c7 = arith.constant 7 : index
    %c0_87 = arith.constant 0 : index
    %129 = vector.load %arg27[%c7, %c0_87] : memref<12x56xbf16, #tpu.memory_space<vmem>>, vector<4x56xbf16>
    tpu.vector_store %arg27[%c7, %c0_87], %128 {strides = array<i32>} : memref<12x56xbf16, #tpu.memory_space<vmem>>, vector<4x56xbf16>,
    %c0_88 = arith.constant 0 : index
    %c0_89 = arith.constant 0 : index
    %130 = vector.load %arg27[%c0_88, %c0_89] : memref<12x56xbf16, #tpu.memory_space<vmem>>, vector<10x56xbf16>
    %c0_90 = arith.constant 0 : index
    %c0_91 = arith.constant 0 : index
    %c0_92 = arith.constant 0 : index
    %131 = vector.load %arg13[%c0_90, %c0_91, %c0_92] : memref<3x56x32xbf16, #tpu.memory_space<vmem>>, vector<1x56x32xbf16>
    %132 = vector.shape_cast %131 : vector<1x56x32xbf16> to vector<56x32xbf16>
    %cst_93 = arith.constant dense<0.000000e+00> : vector<10x32xf32>
    %133 = tpu.matmul %130, %132, %cst_93 {dimension_numbers = #tpu.dot_dimension_numbers<[1], [0], [0], [1], [0, 0, 1, 1], [], []>} : vector<10x56xbf16>, vector<56x32xbf16>, vector<10x32xf32> -> vector<10x32xf32>
    %c1_94 = arith.constant 1 : index
    %c0_95 = arith.constant 0 : index
    %134 = vector.load %arg27[%c1_94, %c0_95] : memref<12x56xbf16, #tpu.memory_space<vmem>>, vector<10x56xbf16>
    %c1_96 = arith.constant 1 : index
    %c0_97 = arith.constant 0 : index
    %c0_98 = arith.constant 0 : index
    %135 = vector.load %arg13[%c1_96, %c0_97, %c0_98] : memref<3x56x32xbf16, #tpu.memory_space<vmem>>, vector<1x56x32xbf16>
    %136 = vector.shape_cast %135 : vector<1x56x32xbf16> to vector<56x32xbf16>
    %cst_99 = arith.constant dense<0.000000e+00> : vector<10x32xf32>
    %137 = tpu.matmul %134, %136, %cst_99 {dimension_numbers = #tpu.dot_dimension_numbers<[1], [0], [0], [1], [0, 0, 1, 1], [], []>} : vector<10x56xbf16>, vector<56x32xbf16>, vector<10x32xf32> -> vector<10x32xf32>
    %138 = arith.addf %133, %137 : vector<10x32xf32>
    %c2_100 = arith.constant 2 : index
    %c0_101 = arith.constant 0 : index
    %139 = vector.load %arg27[%c2_100, %c0_101] : memref<12x56xbf16, #tpu.memory_space<vmem>>, vector<10x56xbf16>
    %c2_102 = arith.constant 2 : index
    %c0_103 = arith.constant 0 : index
    %c0_104 = arith.constant 0 : index
    %140 = vector.load %arg13[%c2_102, %c0_103, %c0_104] : memref<3x56x32xbf16, #tpu.memory_space<vmem>>, vector<1x56x32xbf16>
    %141 = vector.shape_cast %140 : vector<1x56x32xbf16> to vector<56x32xbf16>
    %cst_105 = arith.constant dense<0.000000e+00> : vector<10x32xf32>
    %142 = tpu.matmul %139, %141, %cst_105 {dimension_numbers = #tpu.dot_dimension_numbers<[1], [0], [0], [1], [0, 0, 1, 1], [], []>} : vector<10x56xbf16>, vector<56x32xbf16>, vector<10x32xf32> -> vector<10x32xf32>
    %143 = arith.addf %138, %142 : vector<10x32xf32>
    %c0_106 = arith.constant 0 : index
    %c0_107 = arith.constant 0 : index
    %144 = vector.load %arg18[%c0_106, %c0_107] : memref<10x1xf32, #tpu.memory_space<vmem>>, vector<10x1xf32>
    %145 = vector.broadcast %144 : vector<10x1xf32> to vector<10x32xf32>
    %146 = arith.mulf %143, %145 : vector<10x32xf32>
    %cst_108 = arith.constant dense<0.000000e+00> : vector<32xf32>
    %147 = vector.multi_reduction <add>, %146, %cst_108 [0] : vector<10x32xf32> to vector<32xf32>
    %148 = vector.shape_cast %147 : vector<32xf32> to vector<1x32xf32>
    %149 = arith.mulf %146, %146 : vector<10x32xf32>
    %cst_109 = arith.constant dense<0.000000e+00> : vector<32xf32>
    %150 = vector.multi_reduction <add>, %149, %cst_109 [0] : vector<10x32xf32> to vector<32xf32>
    %151 = vector.shape_cast %150 : vector<32xf32> to vector<1x32xf32>
    %152 = tpu.concatenate %148, %151 in 0 : vector<1x32xf32>, vector<1x32xf32> -> vector<2x32xf32>
    %c0_110 = arith.constant 0 : index
    %c0_111 = arith.constant 0 : index
    %153 = vector.load %arg14[%c0_110, %c0_111] : memref<32x8xf32, #tpu.memory_space<vmem>>, vector<32x8xf32>
    %cst_112 = arith.constant dense<0.000000e+00> : vector<2x8xf32>
    %154 = tpu.matmul %152, %153, %cst_112 {dimension_numbers = #tpu.dot_dimension_numbers<[1], [0], [0], [1], [0, 0, 1, 1], [], []>} : vector<2x32xf32>, vector<32x8xf32>, vector<2x8xf32> -> vector<2x8xf32>
    %cst_113 = arith.constant 3.200000e+01 : f32
    %155 = vector.broadcast %cst_113 : f32 to vector<2x8xf32>
    %156 = arith.divf %154, %155 : vector<2x8xf32>
    %157 = vector.extract_strided_slice %156 {offsets = [0, 0], sizes = [1, 8], strides = [1, 1]} : vector<2x8xf32> to vector<1x8xf32>
    %158 = vector.extract_strided_slice %156 {offsets = [1, 0], sizes = [1, 8], strides = [1, 1]} : vector<2x8xf32> to vector<1x8xf32>
    %159 = arith.mulf %157, %157 : vector<1x8xf32>
    %160 = arith.subf %158, %159 : vector<1x8xf32>
    %c0_114 = arith.constant 0 : index
    %c0_115 = arith.constant 0 : index
    %161 = vector.load %arg16[%c0_114, %c0_115] : memref<1x8xf32, #tpu.memory_space<vmem>>, vector<1x8xf32>
    %cst_116 = arith.constant 9.99999974E-6 : f32
    %162 = vector.broadcast %cst_116 : f32 to vector<1x8xf32>
    %163 = arith.addf %160, %162 : vector<1x8xf32>
    %164 = math.rsqrt %163 : vector<1x8xf32>
    %165 = arith.mulf %161, %164 : vector<1x8xf32>
    %c0_117 = arith.constant 0 : index
    %c0_118 = arith.constant 0 : index
    %166 = vector.load %arg17[%c0_117, %c0_118] : memref<1x8xf32, #tpu.memory_space<vmem>>, vector<1x8xf32>
    %167 = arith.mulf %157, %165 : vector<1x8xf32>
    %168 = arith.subf %166, %167 : vector<1x8xf32>
    %169 = tpu.concatenate %165, %168 in 0 : vector<1x8xf32>, vector<1x8xf32> -> vector<2x8xf32>
    %c0_119 = arith.constant 0 : index
    %c0_120 = arith.constant 0 : index
    %170 = vector.load %arg15[%c0_119, %c0_120] : memref<8x32xf32, #tpu.memory_space<vmem>>, vector<8x32xf32>
    %cst_121 = arith.constant dense<0.000000e+00> : vector<2x32xf32>
    %171 = tpu.matmul %169, %170, %cst_121 {dimension_numbers = #tpu.dot_dimension_numbers<[1], [0], [0], [1], [0, 0, 1, 1], [], []>} : vector<2x8xf32>, vector<8x32xf32>, vector<2x32xf32> -> vector<2x32xf32>
    %172 = vector.extract_strided_slice %171 {offsets = [0, 0], sizes = [1, 32], strides = [1, 1]} : vector<2x32xf32> to vector<1x32xf32>
    %173 = vector.broadcast %172 : vector<1x32xf32> to vector<10x32xf32>
    %174 = arith.mulf %143, %173 : vector<10x32xf32>
    %175 = vector.extract_strided_slice %171 {offsets = [1, 0], sizes = [1, 32], strides = [1, 1]} : vector<2x32xf32> to vector<1x32xf32>
    %176 = vector.broadcast %175 : vector<1x32xf32> to vector<10x32xf32>
    %177 = arith.addf %174, %176 : vector<10x32xf32>
    %cst_122 = arith.constant 0.000000e+00 : f32
    %178 = vector.broadcast %cst_122 : f32 to vector<10x32xf32>
    %179 = arith.maximumf %177, %178 : vector<10x32xf32>
    %180 = vector.extract_strided_slice %179 {offsets = [0, 0], sizes = [9, 32], strides = [1, 1]} : vector<10x32xf32> to vector<9x32xf32>
    %181 = vector.extract_strided_slice %179 {offsets = [1, 0], sizes = [9, 32], strides = [1, 1]} : vector<10x32xf32> to vector<9x32xf32>
    %182 = arith.maximumf %180, %181 : vector<9x32xf32>
    %183 = vector.extract_strided_slice %182 {offsets = [0, 0], sizes = [9, 24], strides = [1, 1]} : vector<9x32xf32> to vector<9x24xf32>
    %184 = vector.extract_strided_slice %182 {offsets = [0, 8], sizes = [9, 24], strides = [1, 1]} : vector<9x32xf32> to vector<9x24xf32>
    %185 = arith.maximumf %183, %184 : vector<9x24xf32>
    %c0_123 = arith.constant 0 : index
    %c0_124 = arith.constant 0 : index
    %186 = vector.load %arg29[%c0_123, %c0_124] : memref<33x120xf32, #tpu.memory_space<vmem>>, vector<9x24xf32>
    tpu.vector_store %arg29[%c0_123, %c0_124], %185 {strides = array<i32>} : memref<33x120xf32, #tpu.memory_space<vmem>>, vector<9x24xf32>,
    %cst_125 = arith.constant 0.000000e+00 : bf16
    %187 = vector.broadcast %cst_125 : bf16 to vector<8x24xbf16>
    %c0_126 = arith.constant 0 : index
    %c0_127 = arith.constant 0 : index
    %188 = vector.load %arg28[%c0_126, %c0_127] : memref<8x24xbf16, #tpu.memory_space<vmem>>, vector<8x24xbf16>
    tpu.vector_store %arg28[%c0_126, %c0_127], %187 {strides = array<i32>} : memref<8x24xbf16, #tpu.memory_space<vmem>>, vector<8x24xbf16>,
    %c0_128 = arith.constant 0 : index
    %c0_129 = arith.constant 0 : index
    %189 = tpu.strided_load %arg29[%c0_128, %c0_129] {strides = array<i32: 2, 1>} : memref<33x120xf32, #tpu.memory_space<vmem>>, vector<2x24xf32>
    %190 = arith.truncf %189 : vector<2x24xf32> to vector<2x24xbf16>
    %c1_130 = arith.constant 1 : index
    %c0_131 = arith.constant 0 : index
    %191 = vector.load %arg28[%c1_130, %c0_131] : memref<8x24xbf16, #tpu.memory_space<vmem>>, vector<2x24xbf16>
    tpu.vector_store %arg28[%c1_130, %c0_131], %190 {strides = array<i32>} : memref<8x24xbf16, #tpu.memory_space<vmem>>, vector<2x24xbf16>,
    %c6 = arith.constant 6 : index
    %c0_132 = arith.constant 0 : index
    %192 = tpu.strided_load %arg29[%c6, %c0_132] {strides = array<i32: 2, 1>} : memref<33x120xf32, #tpu.memory_space<vmem>>, vector<2x24xf32>
    %193 = arith.truncf %192 : vector<2x24xf32> to vector<2x24xbf16>
    %c5 = arith.constant 5 : index
    %c0_133 = arith.constant 0 : index
    %194 = vector.load %arg28[%c5, %c0_133] : memref<8x24xbf16, #tpu.memory_space<vmem>>, vector<2x24xbf16>
    tpu.vector_store %arg28[%c5, %c0_133], %193 {strides = array<i32>} : memref<8x24xbf16, #tpu.memory_space<vmem>>, vector<2x24xbf16>,
    %c0_134 = arith.constant 0 : index
    %c0_135 = arith.constant 0 : index
    %195 = vector.load %arg28[%c0_134, %c0_135] : memref<8x24xbf16, #tpu.memory_space<vmem>>, vector<6x24xbf16>
    %c0_136 = arith.constant 0 : index
    %c0_137 = arith.constant 0 : index
    %c0_138 = arith.constant 0 : index
    %196 = vector.load %arg19[%c0_136, %c0_137, %c0_138] : memref<3x24x8xbf16, #tpu.memory_space<vmem>>, vector<1x24x8xbf16>
    %197 = vector.shape_cast %196 : vector<1x24x8xbf16> to vector<24x8xbf16>
    %cst_139 = arith.constant dense<0.000000e+00> : vector<6x8xf32>
    %198 = tpu.matmul %195, %197, %cst_139 {dimension_numbers = #tpu.dot_dimension_numbers<[1], [0], [0], [1], [0, 0, 1, 1], [], []>} : vector<6x24xbf16>, vector<24x8xbf16>, vector<6x8xf32> -> vector<6x8xf32>
    %c1_140 = arith.constant 1 : index
    %c0_141 = arith.constant 0 : index
    %199 = vector.load %arg28[%c1_140, %c0_141] : memref<8x24xbf16, #tpu.memory_space<vmem>>, vector<6x24xbf16>
    %c1_142 = arith.constant 1 : index
    %c0_143 = arith.constant 0 : index
    %c0_144 = arith.constant 0 : index
    %200 = vector.load %arg19[%c1_142, %c0_143, %c0_144] : memref<3x24x8xbf16, #tpu.memory_space<vmem>>, vector<1x24x8xbf16>
    %201 = vector.shape_cast %200 : vector<1x24x8xbf16> to vector<24x8xbf16>
    %cst_145 = arith.constant dense<0.000000e+00> : vector<6x8xf32>
    %202 = tpu.matmul %199, %201, %cst_145 {dimension_numbers = #tpu.dot_dimension_numbers<[1], [0], [0], [1], [0, 0, 1, 1], [], []>} : vector<6x24xbf16>, vector<24x8xbf16>, vector<6x8xf32> -> vector<6x8xf32>
    %203 = arith.addf %198, %202 : vector<6x8xf32>
    %c2_146 = arith.constant 2 : index
    %c0_147 = arith.constant 0 : index
    %204 = vector.load %arg28[%c2_146, %c0_147] : memref<8x24xbf16, #tpu.memory_space<vmem>>, vector<6x24xbf16>
    %c2_148 = arith.constant 2 : index
    %c0_149 = arith.constant 0 : index
    %c0_150 = arith.constant 0 : index
    %205 = vector.load %arg19[%c2_148, %c0_149, %c0_150] : memref<3x24x8xbf16, #tpu.memory_space<vmem>>, vector<1x24x8xbf16>
    %206 = vector.shape_cast %205 : vector<1x24x8xbf16> to vector<24x8xbf16>
    %cst_151 = arith.constant dense<0.000000e+00> : vector<6x8xf32>
    %207 = tpu.matmul %204, %206, %cst_151 {dimension_numbers = #tpu.dot_dimension_numbers<[1], [0], [0], [1], [0, 0, 1, 1], [], []>} : vector<6x24xbf16>, vector<24x8xbf16>, vector<6x8xf32> -> vector<6x8xf32>
    %208 = arith.addf %203, %207 : vector<6x8xf32>
    %c0_152 = arith.constant 0 : index
    %c0_153 = arith.constant 0 : index
    %209 = vector.load %arg24[%c0_152, %c0_153] : memref<6x1xf32, #tpu.memory_space<vmem>>, vector<6x1xf32>
    %210 = vector.broadcast %209 : vector<6x1xf32> to vector<6x8xf32>
    %211 = arith.mulf %208, %210 : vector<6x8xf32>
    %cst_154 = arith.constant dense<0.000000e+00> : vector<8xf32>
    %212 = vector.multi_reduction <add>, %211, %cst_154 [0] : vector<6x8xf32> to vector<8xf32>
    %213 = vector.shape_cast %212 : vector<8xf32> to vector<1x8xf32>
    %214 = arith.mulf %211, %211 : vector<6x8xf32>
    %cst_155 = arith.constant dense<0.000000e+00> : vector<8xf32>
    %215 = vector.multi_reduction <add>, %214, %cst_155 [0] : vector<6x8xf32> to vector<8xf32>
    %216 = vector.shape_cast %215 : vector<8xf32> to vector<1x8xf32>
    %217 = tpu.concatenate %213, %216 in 0 : vector<1x8xf32>, vector<1x8xf32> -> vector<2x8xf32>
    %c0_156 = arith.constant 0 : index
    %c0_157 = arith.constant 0 : index
    %218 = vector.load %arg20[%c0_156, %c0_157] : memref<8x4xf32, #tpu.memory_space<vmem>>, vector<8x4xf32>
    %cst_158 = arith.constant dense<0.000000e+00> : vector<2x4xf32>
    %219 = tpu.matmul %217, %218, %cst_158 {dimension_numbers = #tpu.dot_dimension_numbers<[1], [0], [0], [1], [0, 0, 1, 1], [], []>} : vector<2x8xf32>, vector<8x4xf32>, vector<2x4xf32> -> vector<2x4xf32>
    %cst_159 = arith.constant 8.000000e+00 : f32
    %220 = vector.broadcast %cst_159 : f32 to vector<2x4xf32>
    %221 = arith.divf %219, %220 : vector<2x4xf32>
    %222 = vector.extract_strided_slice %221 {offsets = [0, 0], sizes = [1, 4], strides = [1, 1]} : vector<2x4xf32> to vector<1x4xf32>
    %223 = vector.extract_strided_slice %221 {offsets = [1, 0], sizes = [1, 4], strides = [1, 1]} : vector<2x4xf32> to vector<1x4xf32>
    %224 = arith.mulf %222, %222 : vector<1x4xf32>
    %225 = arith.subf %223, %224 : vector<1x4xf32>
    %c0_160 = arith.constant 0 : index
    %c0_161 = arith.constant 0 : index
    %226 = vector.load %arg22[%c0_160, %c0_161] : memref<1x4xf32, #tpu.memory_space<vmem>>, vector<1x4xf32>
    %cst_162 = arith.constant 9.99999974E-6 : f32
    %227 = vector.broadcast %cst_162 : f32 to vector<1x4xf32>
    %228 = arith.addf %225, %227 : vector<1x4xf32>
    %229 = math.rsqrt %228 : vector<1x4xf32>
    %230 = arith.mulf %226, %229 : vector<1x4xf32>
    %c0_163 = arith.constant 0 : index
    %c0_164 = arith.constant 0 : index
    %231 = vector.load %arg23[%c0_163, %c0_164] : memref<1x4xf32, #tpu.memory_space<vmem>>, vector<1x4xf32>
    %232 = arith.mulf %222, %230 : vector<1x4xf32>
    %233 = arith.subf %231, %232 : vector<1x4xf32>
    %234 = tpu.concatenate %230, %233 in 0 : vector<1x4xf32>, vector<1x4xf32> -> vector<2x4xf32>
    %c0_165 = arith.constant 0 : index
    %c0_166 = arith.constant 0 : index
    %235 = vector.load %arg21[%c0_165, %c0_166] : memref<4x8xf32, #tpu.memory_space<vmem>>, vector<4x8xf32>
    %cst_167 = arith.constant dense<0.000000e+00> : vector<2x8xf32>
    %236 = tpu.matmul %234, %235, %cst_167 {dimension_numbers = #tpu.dot_dimension_numbers<[1], [0], [0], [1], [0, 0, 1, 1], [], []>} : vector<2x4xf32>, vector<4x8xf32>, vector<2x8xf32> -> vector<2x8xf32>
    %237 = vector.extract_strided_slice %236 {offsets = [0, 0], sizes = [1, 8], strides = [1, 1]} : vector<2x8xf32> to vector<1x8xf32>
    %238 = vector.broadcast %237 : vector<1x8xf32> to vector<6x8xf32>
    %239 = arith.mulf %208, %238 : vector<6x8xf32>
    %240 = vector.extract_strided_slice %236 {offsets = [1, 0], sizes = [1, 8], strides = [1, 1]} : vector<2x8xf32> to vector<1x8xf32>
    %241 = vector.broadcast %240 : vector<1x8xf32> to vector<6x8xf32>
    %242 = arith.addf %239, %241 : vector<6x8xf32>
    %cst_168 = arith.constant 0.000000e+00 : f32
    %243 = vector.broadcast %cst_168 : f32 to vector<6x8xf32>
    %244 = arith.maximumf %242, %243 : vector<6x8xf32>
    %245 = vector.extract_strided_slice %244 {offsets = [0, 0], sizes = [5, 8], strides = [1, 1]} : vector<6x8xf32> to vector<5x8xf32>
    %246 = vector.extract_strided_slice %244 {offsets = [1, 0], sizes = [5, 8], strides = [1, 1]} : vector<6x8xf32> to vector<5x8xf32>
    %247 = arith.maximumf %245, %246 : vector<5x8xf32>
    %248 = vector.extract_strided_slice %247 {offsets = [0, 0], sizes = [5, 4], strides = [1, 1]} : vector<5x8xf32> to vector<5x4xf32>
    %249 = vector.extract_strided_slice %247 {offsets = [0, 4], sizes = [5, 4], strides = [1, 1]} : vector<5x8xf32> to vector<5x4xf32>
    %250 = arith.maximumf %248, %249 : vector<5x4xf32>
    %c0_169 = arith.constant 0 : index
    %c0_170 = arith.constant 0 : index
    %251 = vector.load %arg29[%c0_169, %c0_170] : memref<33x120xf32, #tpu.memory_space<vmem>>, vector<5x4xf32>
    tpu.vector_store %arg29[%c0_169, %c0_170], %250 {strides = array<i32>} : memref<33x120xf32, #tpu.memory_space<vmem>>, vector<5x4xf32>,
    %c0_171 = arith.constant 0 : index
    %c0_172 = arith.constant 0 : index
    %252 = tpu.strided_load %arg29[%c0_171, %c0_172] {strides = array<i32: 4, 1>} : memref<33x120xf32, #tpu.memory_space<vmem>>, vector<2x4xf32>
    %c0_173 = arith.constant 0 : index
    %c0_174 = arith.constant 0 : index
    %253 = vector.load %arg25[%c0_173, %c0_174] : memref<2x4xf32, #tpu.memory_space<vmem>>, vector<2x4xf32>
    tpu.vector_store %arg25[%c0_173, %c0_174], %252 {strides = array<i32>} : memref<2x4xf32, #tpu.memory_space<vmem>>, vector<2x4xf32>,
    return
  }
}

</mosaic_0001>

<llo_original>
// kernel: tpu_custom_call.1
$region0: #{tpu_custom_call.1}
  #allocation0 [shape = 'u32[]', space=smem, size = 0x4, offset = 0x4, fixed_abs, tag = 'smem constant byte address 0x4 - core index']
  #allocation1 [shape = 'u32[144,128]{1,0:T(1,128)}', space=vmem, size = 0x12000, scoped, tag = 'internal scratch']
  #allocation2 [shape = 'bf16[20,120]{1,0:T(8,128)(2,1)}', space=vmem, size = 0x1800, scoped, tag = 'scratch operand']
  #allocation3 [shape = 'bf16[12,56]{1,0:T(8,128)(2,1)}', space=vmem, size = 0x1000, scoped, tag = 'scratch operand']
  #allocation4 [shape = 'bf16[8,24]{1,0:T(8,128)(2,1)}', space=vmem, size = 0x800, scoped, tag = 'scratch operand']
  #allocation5 [shape = 'f32[33,120]{1,0:T(8,128)}', space=vmem, size = 0x5000, scoped, tag = 'scratch operand']
  %s0 = inlined_call_operand.vmem [shape: bf16[36,64], index: 0, kind: input, shape index: {}]
  %s1 = inlined_call_operand.vmem [shape: bf16[3,64,128], index: 1, kind: input, shape index: {}]
  %s2 = inlined_call_operand.vmem [shape: f32[128,8], index: 2, kind: input, shape index: {}]
  %s3 = inlined_call_operand.vmem [shape: f32[8,128], index: 3, kind: input, shape index: {}]
  %s4 = inlined_call_operand.vmem [shape: f32[1,8], index: 4, kind: input, shape index: {}]
  %s5 = inlined_call_operand.vmem [shape: f32[1,8], index: 5, kind: input, shape index: {}]
  %s6 = inlined_call_operand.vmem [shape: f32[34,1], index: 6, kind: input, shape index: {}]
  %s7 = inlined_call_operand.vmem [shape: bf16[3,120,64], index: 7, kind: input, shape index: {}]
  %s8 = inlined_call_operand.vmem [shape: f32[64,8], index: 8, kind: input, shape index: {}]
  %s9 = inlined_call_operand.vmem [shape: f32[8,64], index: 9, kind: input, shape index: {}]
  %s10 = inlined_call_operand.vmem [shape: f32[1,8], index: 10, kind: input, shape index: {}]
  %s11 = inlined_call_operand.vmem [shape: f32[1,8], index: 11, kind: input, shape index: {}]
  %s12 = inlined_call_operand.vmem [shape: f32[18,1], index: 12, kind: input, shape index: {}]
  %s13 = inlined_call_operand.vmem [shape: bf16[3,56,32], index: 13, kind: input, shape index: {}]
  %s14 = inlined_call_operand.vmem [shape: f32[32,8], index: 14, kind: input, shape index: {}]
  %s15 = inlined_call_operand.vmem [shape: f32[8,32], index: 15, kind: input, shape index: {}]
  %s16 = inlined_call_operand.vmem [shape: f32[1,8], index: 16, kind: input, shape index: {}]
  %s17 = inlined_call_operand.vmem [shape: f32[1,8], index: 17, kind: input, shape index: {}]
  %s18 = inlined_call_operand.vmem [shape: f32[10,1], index: 18, kind: input, shape index: {}]
  %s19 = inlined_call_operand.vmem [shape: bf16[3,24,8], index: 19, kind: input, shape index: {}]
  %s20 = inlined_call_operand.vmem [shape: f32[8,4], index: 20, kind: input, shape index: {}]
  %s21 = inlined_call_operand.vmem [shape: f32[4,8], index: 21, kind: input, shape index: {}]
  %s22 = inlined_call_operand.vmem [shape: f32[1,4], index: 22, kind: input, shape index: {}]
  %s23 = inlined_call_operand.vmem [shape: f32[1,4], index: 23, kind: input, shape index: {}]
  %s24 = inlined_call_operand.vmem [shape: f32[6,1], index: 24, kind: input, shape index: {}]
  %s25 = inlined_call_operand.hbm [shape: f32[2,4], index: 25, kind: output, shape index: {}]
  %s26 = sld [smem:[#allocation0]]
  $region110: #{tpu_custom_call.1} parent=0
    _
  %s28 = ssub.s32 1, %s26
  %s29 = scalar_select 0, %s28, %s26
  $region1: #{tpu_custom_call.1} parent=0
    #allocation6 [shape = 'u8[1024]{0}', space=vmem, size = 0x400, scoped, tag = 'output window, operand 0, single buffered']
    #allocation7 [shape = 's32[1]{0}', space=sflag, size = 0x4, scoped, tag = 'scoped memory for tpu_custom_call.1']
    %30 = vsyncpa [#allocation7], 0
    // Predicated region
    $region2: #{tpu_custom_call.1} parent=1 // pred_check
      _
    $region3: #{tpu_custom_call.1} parent=1 // pred_check_branch
      %32 = sbr.rel (0) target = $region5
    $region4: #{tpu_custom_call.1} parent=1 // pred_region
      _
    $region5: #{tpu_custom_call.1} parent=1 // pred_fallthru
      _
    // Predicated region
    $region6: #{tpu_custom_call.1} parent=1 // pred_check
      _
    $region7: #{tpu_custom_call.1} parent=1 // pred_check_branch
      %34 = sbr.rel (0) target = $region9
    $region8: #{tpu_custom_call.1} parent=1 // pred_region
      _
    $region9: #{tpu_custom_call.1} parent=1 // pred_fallthru
      _
    // Predicated region
    $region10: #{tpu_custom_call.1} parent=1 // pred_check
      _
    $region11: #{tpu_custom_call.1} parent=1 // pred_check_branch
      %36 = sbr.rel (0) target = $region13
    $region12: #{tpu_custom_call.1} parent=1 // pred_region
      _
    $region13: #{tpu_custom_call.1} parent=1 // pred_fallthru
      _
    // Predicated region
    $region14: #{tpu_custom_call.1} parent=1 // pred_check
      _
    $region15: #{tpu_custom_call.1} parent=1 // pred_check_branch
      %38 = sbr.rel (0) target = $region17
    $region16: #{tpu_custom_call.1} parent=1 // pred_region
      _
    $region17: #{tpu_custom_call.1} parent=1 // pred_fallthru
      _
    // Predicated region
    $region18: #{tpu_custom_call.1} parent=1 // pred_check
      _
    $region19: #{tpu_custom_call.1} parent=1 // pred_check_branch
      %40 = sbr.rel (0) target = $region21
    $region20: #{tpu_custom_call.1} parent=1 // pred_region
      _
    $region21: #{tpu_custom_call.1} parent=1 // pred_fallthru
      _
    // Predicated region
    $region22: #{tpu_custom_call.1} parent=1 // pred_check
      _
    $region23: #{tpu_custom_call.1} parent=1 // pred_check_branch
      %42 = sbr.rel (0) target = $region25
    $region24: #{tpu_custom_call.1} parent=1 // pred_region
      _
    $region25: #{tpu_custom_call.1} parent=1 // pred_fallthru
      _
    // Predicated region
    $region26: #{tpu_custom_call.1} parent=1 // pred_check
      _
    $region27: #{tpu_custom_call.1} parent=1 // pred_check_branch
      %44 = sbr.rel (0) target = $region29
    $region28: #{tpu_custom_call.1} parent=1 // pred_region
      _
    $region29: #{tpu_custom_call.1} parent=1 // pred_fallthru
      _
    // Predicated region
    $region30: #{tpu_custom_call.1} parent=1 // pred_check
      _
    $region31: #{tpu_custom_call.1} parent=1 // pred_check_branch
      %46 = sbr.rel (0) target = $region33
    $region32: #{tpu_custom_call.1} parent=1 // pred_region
      _
    $region33: #{tpu_custom_call.1} parent=1 // pred_fallthru
      _
    // Predicated region
    $region34: #{tpu_custom_call.1} parent=1 // pred_check
      _
    $region35: #{tpu_custom_call.1} parent=1 // pred_check_branch
      %48 = sbr.rel (0) target = $region37
    $region36: #{tpu_custom_call.1} parent=1 // pred_region
      _
    $region37: #{tpu_custom_call.1} parent=1 // pred_fallthru
      _
    // Predicated region
    $region38: #{tpu_custom_call.1} parent=1 // pred_check
      _
    $region39: #{tpu_custom_call.1} parent=1 // pred_check_branch
      %50 = sbr.rel (0) target = $region41
    $region40: #{tpu_custom_call.1} parent=1 // pred_region
      _
    $region41: #{tpu_custom_call.1} parent=1 // pred_fallthru
      _
    // Predicated region
    $region42: #{tpu_custom_call.1} parent=1 // pred_check
      _
    $region43: #{tpu_custom_call.1} parent=1 // pred_check_branch
      %52 = sbr.rel (0) target = $region45
    $region44: #{tpu_custom_call.1} parent=1 // pred_region
      _
    $region45: #{tpu_custom_call.1} parent=1 // pred_fallthru
      _
    // Predicated region
    $region46: #{tpu_custom_call.1} parent=1 // pred_check
      _
    $region47: #{tpu_custom_call.1} parent=1 // pred_check_branch
      %54 = sbr.rel (0) target = $region49
    $region48: #{tpu_custom_call.1} parent=1 // pred_region
      _
    $region49: #{tpu_custom_call.1} parent=1 // pred_fallthru
      _
    // Predicated region
    $region50: #{tpu_custom_call.1} parent=1 // pred_check
      _
    $region51: #{tpu_custom_call.1} parent=1 // pred_check_branch
      %56 = sbr.rel (0) target = $region53
    $region52: #{tpu_custom_call.1} parent=1 // pred_region
      _
    $region53: #{tpu_custom_call.1} parent=1 // pred_fallthru
      _
    // Predicated region
    $region54: #{tpu_custom_call.1} parent=1 // pred_check
      _
    $region55: #{tpu_custom_call.1} parent=1 // pred_check_branch
      %58 = sbr.rel (0) target = $region57
    $region56: #{tpu_custom_call.1} parent=1 // pred_region
      _
    $region57: #{tpu_custom_call.1} parent=1 // pred_fallthru
      _
    // Predicated region
    $region58: #{tpu_custom_call.1} parent=1 // pred_check
      _
    $region59: #{tpu_custom_call.1} parent=1 // pred_check_branch
      %60 = sbr.rel (0) target = $region61
    $region60: #{tpu_custom_call.1} parent=1 // pred_region
      _
    $region61: #{tpu_custom_call.1} parent=1 // pred_fallthru
      _
    // Predicated region
    $region62: #{tpu_custom_call.1} parent=1 // pred_check
      _
    $region63: #{tpu_custom_call.1} parent=1 // pred_check_branch
      %62 = sbr.rel (0) target = $region65
    $region64: #{tpu_custom_call.1} parent=1 // pred_region
      _
    $region65: #{tpu_custom_call.1} parent=1 // pred_fallthru
      _
    // Predicated region
    $region66: #{tpu_custom_call.1} parent=1 // pred_check
      _
    $region67: #{tpu_custom_call.1} parent=1 // pred_check_branch
      %64 = sbr.rel (0) target = $region69
    $region68: #{tpu_custom_call.1} parent=1 // pred_region
      _
    $region69: #{tpu_custom_call.1} parent=1 // pred_fallthru
      _
    // Predicated region
    $region70: #{tpu_custom_call.1} parent=1 // pred_check
      _
    $region71: #{tpu_custom_call.1} parent=1 // pred_check_branch
      %66 = sbr.rel (0) target = $region73
    $region72: #{tpu_custom_call.1} parent=1 // pred_region
      _
    $region73: #{tpu_custom_call.1} parent=1 // pred_fallthru
      _
    // Predicated region
    $region74: #{tpu_custom_call.1} parent=1 // pred_check
      _
    $region75: #{tpu_custom_call.1} parent=1 // pred_check_branch
      %68 = sbr.rel (0) target = $region77
    $region76: #{tpu_custom_call.1} parent=1 // pred_region
      _
    $region77: #{tpu_custom_call.1} parent=1 // pred_fallthru
      _
    // Predicated region
    $region78: #{tpu_custom_call.1} parent=1 // pred_check
      _
    $region79: #{tpu_custom_call.1} parent=1 // pred_check_branch
      %70 = sbr.rel (0) target = $region81
    $region80: #{tpu_custom_call.1} parent=1 // pred_region
      _
    $region81: #{tpu_custom_call.1} parent=1 // pred_fallthru
      _
    // Predicated region
    $region82: #{tpu_custom_call.1} parent=1 // pred_check
      _
    $region83: #{tpu_custom_call.1} parent=1 // pred_check_branch
      %72 = sbr.rel (0) target = $region85
    $region84: #{tpu_custom_call.1} parent=1 // pred_region
      _
    $region85: #{tpu_custom_call.1} parent=1 // pred_fallthru
      _
    // Predicated region
    $region86: #{tpu_custom_call.1} parent=1 // pred_check
      _
    $region87: #{tpu_custom_call.1} parent=1 // pred_check_branch
      %74 = sbr.rel (0) target = $region89
    $region88: #{tpu_custom_call.1} parent=1 // pred_region
      _
    $region89: #{tpu_custom_call.1} parent=1 // pred_fallthru
      _
    // Predicated region
    $region90: #{tpu_custom_call.1} parent=1 // pred_check
      _
    $region91: #{tpu_custom_call.1} parent=1 // pred_check_branch
      %76 = sbr.rel (0) target = $region93
    $region92: #{tpu_custom_call.1} parent=1 // pred_region
      _
    $region93: #{tpu_custom_call.1} parent=1 // pred_fallthru
      _
    // Predicated region
    $region94: #{tpu_custom_call.1} parent=1 // pred_check
      _
    $region95: #{tpu_custom_call.1} parent=1 // pred_check_branch
      %78 = sbr.rel (0) target = $region97
    $region96: #{tpu_custom_call.1} parent=1 // pred_region
      _
    $region97: #{tpu_custom_call.1} parent=1 // pred_fallthru
      _
    // Predicated region
    $region98: #{tpu_custom_call.1} parent=1 // pred_check
      _
    $region99: #{tpu_custom_call.1} parent=1 // pred_check_branch
      %80 = sbr.rel (0) target = $region101
    $region100: #{tpu_custom_call.1} parent=1 // pred_region
      _
    $region101: #{tpu_custom_call.1} parent=1 // pred_fallthru
      _
    %v82 = vld [vmem:[%s0] sm:$0xf]
    %v83 = vld [vmem:[%s0 + $0x4] sm:$0xf]
    %v84 = vld [vmem:[%s0 + $0x8] sm:$0xf]
    %v85 = vld [vmem:[%s0 + $0xc] sm:$0xf]
    %v86 = vld [vmem:[%s0 + $0x10] sm:$0x1]
    %v87 = vld [vmem:[%s1] sm:$0xf]
    %v88 = vld [vmem:[%s1 + $0x4] sm:$0xf]
    %v89 = vld [vmem:[%s1 + $0x8] sm:$0xf]
    %v90 = vld [vmem:[%s1 + $0xc] sm:$0xf]
    %v91 = vld [vmem:[%s1 + $0x10] sm:$0xf]
    %v92 = vld [vmem:[%s1 + $0x14] sm:$0xf]
    %v93 = vld [vmem:[%s1 + $0x18] sm:$0xf]
    %v94 = vld [vmem:[%s1 + $0x1c] sm:$0xf]
    %v95 = vld [vmem:[%s0 + $0x10] sm:$0x3]
    %s96 = scalar_lea.vmem %s1, 32
    %v97 = vld [vmem:[%s96] sm:$0xf]
    %v98 = vld [vmem:[%s96 + $0x4] sm:$0xf]
    %v99 = vld [vmem:[%s96 + $0x8] sm:$0xf]
    %v100 = vld [vmem:[%s96 + $0xc] sm:$0xf]
    %v101 = vld [vmem:[%s96 + $0x10] sm:$0xf]
    %v102 = vld [vmem:[%s96 + $0x14] sm:$0xf]
    %v103 = vld [vmem:[%s96 + $0x18] sm:$0xf]
    %v104 = vld [vmem:[%s96 + $0x1c] sm:$0xf]
    %v110 = vunpack.c.l.b16 %v82
    %v111 = vunpack.c.l.b16 %v83
    %v112 = vunpack.c.l.b16 %v84
    %v113 = vunpack.c.l.b16 %v85
    %v114 = vunpack.c.l.b16 %v95
    %v115 = vpack.c.b16 %v111, %v110
    %v116 = vpack.c.b16 %v113, %v112
    %v117 = vpack.c.b16 %v114, %v114
    %vm118 = vsmask.f32 7424
    %v120 = vshrl.u32 %v115, 16
    %v122 = vshll.u32 %v115, 16
    %v124 = vrot.slane %v122, 1
    %v125 = vor.u32 %v120, %v124
    %v127 = vshll.u32 %v116, 16
    %v129 = vrot.slane %v127, 1
    %v130 = vsel %vm118, %v125, %v129
    %v131 = vshrl.u32 %v116, 16
    %v133 = vor.u32 %v131, %v129
    %v135 = vshll.u32 %v117, 16
    %v137 = vrot.slane %v135, 1
    %v138 = vsel %vm118, %v133, %v137
    %v139 = vshrl.u32 %v117, 16
    %v141 = vor.u32 %v139, %v137
    %v150 = vunpack.c.l.b16 %v97
    %v151 = vunpack.c.l.b16 %v98
    %v152 = vunpack.c.l.b16 %v99
    %v153 = vunpack.c.l.b16 %v100
    %v154 = vunpack.c.l.b16 %v101
    %v155 = vunpack.c.l.b16 %v102
    %v156 = vunpack.c.l.b16 %v103
    %v157 = vunpack.c.l.b16 %v104
    %v158 = vpack.c.b16 %v151, %v150
    %v159 = vpack.c.b16 %v153, %v152
    %v160 = vpack.c.b16 %v155, %v154
    %v161 = vpack.c.b16 %v157, %v156
    %vm166 = vcmask 523264
    %v168 = vsel %vm166, %v130, 0
    %v171 = vsel %vm166, %v138, 0
    %v174 = vsel %vm166, %v141, 0
    %176 = vmatprep.subr.bf16.mxu0 0
    %177 = vmatpush1.bf16.msra.mxu0 %v158
    %178 = vmatprep.subr.bf16.mxu0 0
    %179 = vmatpush1.bf16.msra.mxu0 %v159
    %180 = vmatprep.subr.bf16.mxu0 0
    %181 = vmatpush1.bf16.msra.mxu0 %v160
    %182 = vmatprep.subr.bf16.mxu0 0
    %183 = vmatpush1.bf16.msra.mxu0 %v161
    %184 = vmatprep.subr.bf16.mxu0 0
    %185 = vmatpush1.bf16.msra.mxu0 0
    %186 = vmatprep.subr.bf16.mxu0 0
    %187 = vmatpush1.bf16.msra.mxu0 0
    %188 = vmatprep.subr.bf16.mxu0 0
    %189 = vmatpush1.bf16.msra.mxu0 0
    %190 = vmatprep.subr.bf16.mxu0 0
    %191 = vmatpush1.bf16.msra.mxu0 0
    %192 = vmatprep.subr.bf16.mxu0 0
    %193 = vmatpush1.bf16.msra.mxu0 0
    %194 = vmatprep.subr.bf16.mxu0 0
    %195 = vmatpush1.bf16.msra.mxu0 0
    %196 = vmatprep.subr.bf16.mxu0 0
    %197 = vmatpush1.bf16.msra.mxu0 0
    %198 = vmatprep.subr.bf16.mxu0 0
    %199 = vmatpush1.bf16.msra.mxu0 0
    %200 = vmatprep.subr.bf16.mxu0 0
    %201 = vmatpush1.bf16.msra.mxu0 0
    %202 = vmatprep.subr.bf16.mxu0 0
    %203 = vmatpush1.bf16.msra.mxu0 0
    %204 = vmatprep.subr.bf16.mxu0 0
    %205 = vmatpush1.bf16.msra.mxu0 0
    %206 = vmatprep.subr.bf16.mxu0 0
    %207 = vmatpush1.bf16.msra.mxu0 0
    %208 = vmatprep.mubr.bf16.mxu0 0
    %209 = vmatmul.mubr.bf16.gmra.mrb[0].mxu0 %v168
    %v210 = vpop.f32.mrb[0].mxu0
    %v211 = vadd.f32 0.0, %v210
    %v212 = vpop.f32.mrb[0].mxu0
    %v213 = vpop.f32.mrb[0].mxu0
    %v214 = vadd.f32 0.0, %v213
    %v215 = vpop.f32.mrb[0].mxu0
    %216 = vmatprep.mubr.bf16.mxu0 0
    %217 = vmatmul.mubr.bf16.gmra.mrb[0].mxu0 %v171
    %v218 = vpop.f32.mrb[0].mxu0
    %v219 = vadd.f32 0.0, %v218
    %v220 = vpop.f32.mrb[0].mxu0
    %v221 = vpop.f32.mrb[0].mxu0
    %v222 = vadd.f32 0.0, %v221
    %v223 = vpop.f32.mrb[0].mxu0
    %224 = vmatprep.mubr.bf16.mxu0 0
    %225 = vmatmul.mubr.bf16.gmra.mrb[0].mxu0 %v174
    %v226 = vpop.f32.mrb[0].mxu0
    %v227 = vadd.f32 0.0, %v226
    %v228 = vpop.f32.mrb[0].mxu0
    %v229 = vpop.f32.mrb[0].mxu0
    %v230 = vpop.f32.mrb[0].mxu0
    %231 = vdwg.mxu0
    %v233 = vunpack.c.l.b16 %v86
    %v234 = vpack.c.b16 %v233, %v233
    %v243 = vunpack.c.l.b16 %v87
    %v244 = vunpack.c.l.b16 %v88
    %v245 = vunpack.c.l.b16 %v89
    %v246 = vunpack.c.l.b16 %v90
    %v247 = vunpack.c.l.b16 %v91
    %v248 = vunpack.c.l.b16 %v92
    %v249 = vunpack.c.l.b16 %v93
    %v250 = vunpack.c.l.b16 %v94
    %v251 = vpack.c.b16 %v244, %v243
    %v252 = vpack.c.b16 %v246, %v245
    %v253 = vpack.c.b16 %v248, %v247
    %v254 = vpack.c.b16 %v250, %v249
    %v259 = vsel %vm166, %v115, 0
    %v261 = vsel %vm166, %v116, 0
    %v264 = vsel %vm166, %v234, 0
    %266 = vmatprep.subr.bf16.mxu0 0
    %267 = vmatpush1.bf16.msra.mxu0 %v251
    %268 = vmatprep.subr.bf16.mxu0 0
    %269 = vmatpush1.bf16.msra.mxu0 %v252
    %270 = vmatprep.subr.bf16.mxu0 0
    %271 = vmatpush1.bf16.msra.mxu0 %v253
    %272 = vmatprep.subr.bf16.mxu0 0
    %273 = vmatpush1.bf16.msra.mxu0 %v254
    %274 = vmatprep.subr.bf16.mxu0 0
    %275 = vmatpush1.bf16.msra.mxu0 0
    %276 = vmatprep.subr.bf16.mxu0 0
    %277 = vmatpush1.bf16.msra.mxu0 0
    %278 = vmatprep.subr.bf16.mxu0 0
    %279 = vmatpush1.bf16.msra.mxu0 0
    %280 = vmatprep.subr.bf16.mxu0 0
    %281 = vmatpush1.bf16.msra.mxu0 0
    %282 = vmatprep.subr.bf16.mxu0 0
    %283 = vmatpush1.bf16.msra.mxu0 0
    %284 = vmatprep.subr.bf16.mxu0 0
    %285 = vmatpush1.bf16.msra.mxu0 0
    %286 = vmatprep.subr.bf16.mxu0 0
    %287 = vmatpush1.bf16.msra.mxu0 0
    %288 = vmatprep.subr.bf16.mxu0 0
    %289 = vmatpush1.bf16.msra.mxu0 0
    %290 = vmatprep.subr.bf16.mxu0 0
    %291 = vmatpush1.bf16.msra.mxu0 0
    %292 = vmatprep.subr.bf16.mxu0 0
    %293 = vmatpush1.bf16.msra.mxu0 0
    %294 = vmatprep.subr.bf16.mxu0 0
    %295 = vmatpush1.bf16.msra.mxu0 0
    %296 = vmatprep.subr.bf16.mxu0 0
    %297 = vmatpush1.bf16.msra.mxu0 0
    %298 = vmatprep.mubr.bf16.mxu0 0
    %299 = vmatmul.mubr.bf16.gmra.mrb[0].mxu0 %v259
    %v300 = vpop.f32.mrb[0].mxu0
    %v301 = vadd.f32 %v211, %v300
    %v302 = vpop.f32.mrb[0].mxu0
    %v303 = vpop.f32.mrb[0].mxu0
    %v304 = vadd.f32 %v214, %v303
    %v305 = vpop.f32.mrb[0].mxu0
    %306 = vmatprep.mubr.bf16.mxu0 0
    %307 = vmatmul.mubr.bf16.gmra.mrb[0].mxu0 %v261
    %v308 = vpop.f32.mrb[0].mxu0
    %v309 = vadd.f32 %v219, %v308
    %v310 = vpop.f32.mrb[0].mxu0
    %v311 = vpop.f32.mrb[0].mxu0
    %v312 = vadd.f32 %v222, %v311
    %v313 = vpop.f32.mrb[0].mxu0
    %314 = vmatprep.mubr.bf16.mxu0 0
    %315 = vmatmul.mubr.bf16.gmra.mrb[0].mxu0 %v264
    %v316 = vpop.f32.mrb[0].mxu0
    %v317 = vadd.f32 %v227, %v316
    %v318 = vpop.f32.mrb[0].mxu0
    %v319 = vpop.f32.mrb[0].mxu0
    %v320 = vpop.f32.mrb[0].mxu0
    %321 = vdwg.mxu0
    %v322 = vld [vmem:[%s0] sm:$0xe]
    %s323 = scalar_lea.vmem %s1, 64
    %v324 = vld [vmem:[%s323] sm:$0xf]
    %v325 = vld [vmem:[%s323 + $0x4] sm:$0xf]
    %v326 = vld [vmem:[%s323 + $0x8] sm:$0xf]
    %v327 = vld [vmem:[%s323 + $0xc] sm:$0xf]
    %v328 = vld [vmem:[%s323 + $0x10] sm:$0xf]
    %v329 = vld [vmem:[%s323 + $0x14] sm:$0xf]
    %v330 = vld [vmem:[%s323 + $0x18] sm:$0xf]
    %v331 = vld [vmem:[%s323 + $0x1c] sm:$0xf]
    %v333 = vunpack.c.l.b16 %v322
    %v334 = vpack.c.b16 %v111, %v333
    %vm335 = vcmask 1046528
    %v336 = vrot.slane %v334, 1
    %v337 = vrot.slane %v116, 1
    %v338 = vsel %vm335, %v336, %v337
    %v339 = vrot.slane %v117, 1
    %v340 = vsel %vm335, %v337, %v339
    %v349 = vunpack.c.l.b16 %v324
    %v350 = vunpack.c.l.b16 %v325
    %v351 = vunpack.c.l.b16 %v326
    %v352 = vunpack.c.l.b16 %v327
    %v353 = vunpack.c.l.b16 %v328
    %v354 = vunpack.c.l.b16 %v329
    %v355 = vunpack.c.l.b16 %v330
    %v356 = vunpack.c.l.b16 %v331
    %v357 = vpack.c.b16 %v350, %v349
    %v358 = vpack.c.b16 %v352, %v351
    %v359 = vpack.c.b16 %v354, %v353
    %v360 = vpack.c.b16 %v356, %v355
    %v366 = vsel %vm166, %v338, 0
    %v369 = vsel %vm166, %v340, 0
    %v372 = vsel %vm166, %v339, 0
    %374 = vmatprep.subr.bf16.mxu0 0
    %375 = vmatpush1.bf16.msra.mxu0 %v357
    %376 = vmatprep.subr.bf16.mxu0 0
    %377 = vmatpush1.bf16.msra.mxu0 %v358
    %378 = vmatprep.subr.bf16.mxu0 0
    %379 = vmatpush1.bf16.msra.mxu0 %v359
    %380 = vmatprep.subr.bf16.mxu0 0
    %381 = vmatpush1.bf16.msra.mxu0 %v360
    %382 = vmatprep.subr.bf16.mxu0 0
    %383 = vmatpush1.bf16.msra.mxu0 0
    %384 = vmatprep.subr.bf16.mxu0 0
    %385 = vmatpush1.bf16.msra.mxu0 0
    %386 = vmatprep.subr.bf16.mxu0 0
    %387 = vmatpush1.bf16.msra.mxu0 0
    %388 = vmatprep.subr.bf16.mxu0 0
    %389 = vmatpush1.bf16.msra.mxu0 0
    %390 = vmatprep.subr.bf16.mxu0 0
    %391 = vmatpush1.bf16.msra.mxu0 0
    %392 = vmatprep.subr.bf16.mxu0 0
    %393 = vmatpush1.bf16.msra.mxu0 0
    %394 = vmatprep.subr.bf16.mxu0 0
    %395 = vmatpush1.bf16.msra.mxu0 0
    %396 = vmatprep.subr.bf16.mxu0 0
    %397 = vmatpush1.bf16.msra.mxu0 0
    %398 = vmatprep.subr.bf16.mxu0 0
    %399 = vmatpush1.bf16.msra.mxu0 0
    %400 = vmatprep.subr.bf16.mxu0 0
    %401 = vmatpush1.bf16.msra.mxu0 0
    %402 = vmatprep.subr.bf16.mxu0 0
    %403 = vmatpush1.bf16.msra.mxu0 0
    %404 = vmatprep.subr.bf16.mxu0 0
    %405 = vmatpush1.bf16.msra.mxu0 0
    %406 = vmatprep.mubr.bf16.mxu0 0
    %407 = vmatmul.mubr.bf16.gmra.mrb[0].mxu0 %v366
    %v408 = vpop.f32.mrb[0].mxu0
    %v409 = vadd.f32 0.0, %v408
    %v410 = vpop.f32.mrb[0].mxu0
    %v411 = vpop.f32.mrb[0].mxu0
    %v412 = vadd.f32 0.0, %v411
    %v413 = vpop.f32.mrb[0].mxu0
    %414 = vmatprep.mubr.bf16.mxu0 0
    %415 = vmatmul.mubr.bf16.gmra.mrb[0].mxu0 %v369
    %v416 = vpop.f32.mrb[0].mxu0
    %v417 = vadd.f32 0.0, %v416
    %v418 = vpop.f32.mrb[0].mxu0
    %v419 = vpop.f32.mrb[0].mxu0
    %v420 = vadd.f32 0.0, %v419
    %v421 = vpop.f32.mrb[0].mxu0
    %422 = vmatprep.mubr.bf16.mxu0 0
    %423 = vmatmul.mubr.bf16.gmra.mrb[0].mxu0 %v372
    %v424 = vpop.f32.mrb[0].mxu0
    %v425 = vadd.f32 0.0, %v424
    %v426 = vpop.f32.mrb[0].mxu0
    %v427 = vpop.f32.mrb[0].mxu0
    %v428 = vpop.f32.mrb[0].mxu0
    %429 = vdwg.mxu0
    %v430 = vadd.f32 %v301, %v409
    %v431 = vadd.f32 %v304, %v412
    %v432 = vadd.f32 %v309, %v417
    %v433 = vadd.f32 %v312, %v420
    %v434 = vadd.f32 %v317, %v425
    %v435 = vld [vmem:[%s6] sm:$0xff]
    %v436 = vld [vmem:[%s6 + $0x8] sm:$0xff]
    %v437 = vld [vmem:[%s6 + $0x10] sm:$0xff]
    %v438 = vld [vmem:[%s6 + $0x18] sm:$0xff]
    %v439 = vld [vmem:[%s6 + $0x20] sm:$0x3]
    %441 = vset.pattern.permute.xlu0 0
    %442 = vperm.xlu0 %441, %v435
    %v443 = vpop.permute.xlu0 %442
    %446 = vset.pattern.permute.xlu0 0
    %447 = vperm.xlu0 %446, %v436
    %v448 = vpop.permute.xlu0 %447
    %451 = vset.pattern.permute.xlu0 0
    %452 = vperm.xlu0 %451, %v437
    %v453 = vpop.permute.xlu0 %452
    %456 = vset.pattern.permute.xlu0 0
    %457 = vperm.xlu0 %456, %v438
    %v458 = vpop.permute.xlu0 %457
    %461 = vset.pattern.permute.xlu0 0
    %462 = vperm.xlu0 %461, %v439
    %v463 = vpop.permute.xlu0 %462
    %v465 = vmul.f32 %v430, %v443
    %v466 = vmul.f32 %v431, %v448
    %v467 = vmul.f32 %v432, %v453
    %v468 = vmul.f32 %v433, %v458
    %v469 = vmul.f32 %v434, %v463
    %v470 = vadd.f32 %v465, %v466
    %v471 = vadd.f32 %v470, %v467
    %v472 = vadd.f32 %v471, %v468
    %vm473 = vcmask 1041408
    %v474 = vsel %vm473, %v469, 0.0
    %v475 = vadd.f32 %v472, %v474
    %v476 = vrot.slane %v475, 4
    %v477 = vadd.f32 %v475, %v476
    %v478 = vrot.slane %v477, 2
    %v479 = vadd.f32 %v477, %v478
    %v480 = vrot.slane %v479, 1
    %v481 = vadd.f32 %v479, %v480
    %v482 = vmul.f32 %v465, %v465
    %v483 = vmul.f32 %v466, %v466
    %v484 = vmul.f32 %v467, %v467
    %v485 = vmul.f32 %v468, %v468
    %v486 = vmul.f32 %v469, %v469
    %v487 = vadd.f32 %v482, %v483
    %v488 = vadd.f32 %v487, %v484
    %v489 = vadd.f32 %v488, %v485
    %v490 = vsel %vm473, %v486, 0.0
    %v491 = vadd.f32 %v489, %v490
    %v492 = vrot.slane %v491, 4
    %v493 = vadd.f32 %v491, %v492
    %v494 = vrot.slane %v493, 2
    %v495 = vadd.f32 %v493, %v494
    %v496 = vrot.slane %v495, 1
    %v497 = vadd.f32 %v495, %v496
    %vm498 = vcmask 1040384
    %v499 = vsel %vm498, %v481, %v497
    %v500 = vld [vmem:[%s2] sm:$0xff]
    %v501 = vld [vmem:[%s2 + $0x8] sm:$0xff]
    %v502 = vld [vmem:[%s2 + $0x10] sm:$0xff]
    %v503 = vld [vmem:[%s2 + $0x18] sm:$0xff]
    %v504 = vld [vmem:[%s2 + $0x20] sm:$0xff]
    %v505 = vld [vmem:[%s2 + $0x28] sm:$0xff]
    %v506 = vld [vmem:[%s2 + $0x30] sm:$0xff]
    %v507 = vld [vmem:[%s2 + $0x38] sm:$0xff]
    %v508 = vld [vmem:[%s2 + $0x40] sm:$0xff]
    %v509 = vld [vmem:[%s2 + $0x48] sm:$0xff]
    %v510 = vld [vmem:[%s2 + $0x50] sm:$0xff]
    %v511 = vld [vmem:[%s2 + $0x58] sm:$0xff]
    %v512 = vld [vmem:[%s2 + $0x60] sm:$0xff]
    %v513 = vld [vmem:[%s2 + $0x68] sm:$0xff]
    %v514 = vld [vmem:[%s2 + $0x70] sm:$0xff]
    %v515 = vld [vmem:[%s2 + $0x78] sm:$0xff]
    %516 = vmatprep.subr.mxu0 0.0
    %517 = vmatpush1.msra.mxu0 %v500
    %518 = vmatprep.subr.mxu0 0.0
    %519 = vmatpush1.msra.mxu0 %v501
    %520 = vmatprep.subr.mxu0 0.0
    %521 = vmatpush1.msra.mxu0 %v502
    %522 = vmatprep.subr.mxu0 0.0
    %523 = vmatpush1.msra.mxu0 %v503
    %524 = vmatprep.subr.mxu0 0.0
    %525 = vmatpush1.msra.mxu0 %v504
    %526 = vmatprep.subr.mxu0 0.0
    %527 = vmatpush1.msra.mxu0 %v505
    %528 = vmatprep.subr.mxu0 0.0
    %529 = vmatpush1.msra.mxu0 %v506
    %530 = vmatprep.subr.mxu0 0.0
    %531 = vmatpush1.msra.mxu0 %v507
    %532 = vmatprep.subr.mxu0 0.0
    %533 = vmatpush1.msra.mxu0 %v508
    %534 = vmatprep.subr.mxu0 0.0
    %535 = vmatpush1.msra.mxu0 %v509
    %536 = vmatprep.subr.mxu0 0.0
    %537 = vmatpush1.msra.mxu0 %v510
    %538 = vmatprep.subr.mxu0 0.0
    %539 = vmatpush1.msra.mxu0 %v511
    %540 = vmatprep.subr.mxu0 0.0
    %541 = vmatpush1.msra.mxu0 %v512
    %542 = vmatprep.subr.mxu0 0.0
    %543 = vmatpush1.msra.mxu0 %v513
    %544 = vmatprep.subr.mxu0 0.0
    %545 = vmatpush1.msra.mxu0 %v514
    %546 = vmatprep.subr.mxu0 0.0
    %547 = vmatpush1.msra.mxu0 %v515
    %548 = vmatprep.subr.mxu0 0.0
    %549 = vmatpush1.msra.mxu0 0.0
    %550 = vmatprep.subr.mxu0 0.0
    %551 = vmatpush1.msra.mxu0 0.0
    %552 = vmatprep.subr.mxu0 0.0
    %553 = vmatpush1.msra.mxu0 0.0
    %554 = vmatprep.subr.mxu0 0.0
    %555 = vmatpush1.msra.mxu0 0.0
    %556 = vmatprep.subr.mxu0 0.0
    %557 = vmatpush1.msra.mxu0 0.0
    %558 = vmatprep.subr.mxu0 0.0
    %559 = vmatpush1.msra.mxu0 0.0
    %560 = vmatprep.subr.mxu0 0.0
    %561 = vmatpush1.msra.mxu0 0.0
    %562 = vmatprep.subr.mxu0 0.0
    %563 = vmatpush1.msra.mxu0 0.0
    %564 = vmatprep.subr.mxu0 0.0
    %565 = vmatpush1.msra.mxu0 0.0
    %566 = vmatprep.subr.mxu0 0.0
    %567 = vmatpush1.msra.mxu0 0.0
    %568 = vmatprep.subr.mxu0 0.0
    %569 = vmatpush1.msra.mxu0 0.0
    %570 = vmatprep.subr.mxu0 0.0
    %571 = vmatpush1.msra.mxu0 0.0
    %572 = vmatprep.subr.mxu0 0.0
    %573 = vmatpush1.msra.mxu0 0.0
    %574 = vmatprep.subr.mxu0 0.0
    %575 = vmatpush1.msra.mxu0 0.0
    %576 = vmatprep.subr.mxu0 0.0
    %577 = vmatpush1.msra.mxu0 0.0
    %578 = vmatprep.subr.mxu0 0.0
    %579 = vmatpush1.msra.mxu0 0.0
    %580 = vmatprep.mubr.f32.mxu0 0.0
    %581 = vmatmul.mubr.f32.gmra.mrb[0].mxu0 %v499
    %v582 = vpop.f32.mrb[0].mxu0
    %v583 = vadd.f32 0.0, %v582
    %v584 = vpop.f32.mrb[0].mxu0
    %585 = vdwg.mxu0
    %v586 = vrcp.pop 512.0
    %v587 = vmul.f32 %v583, %v586
    %v588 = vmul.f32 %v587, %v587
    %v590 = vrot.slane %v588, 7
    %v592 = vsub.f32 %v587, %v590
    %v593 = vld [vmem:[%s4] sm:$0x1]
    %v594 = vadd.f32 %v592, 1e-05
    %v595 = vrsqrt.pop %v594
    %v598 = vunpack.c.l.s4 1966171168
    %v599 = vunpack.c.0.s8 %v598
    %v600 = vlaneseq
    %v601 = vshrl.u32 %v600, 7
    %v602 = vsub.s32 %v599, %v601
    %v603 = vrot.slane %v595, %v602
    %v604 = vcombine.high %v603, %v603
    %v606 = vunpack.c.l.s4 1966171168
    %v607 = vunpack.c.0.s8 %v606
    %v608 = vlaneseq
    %v609 = vshrl.u32 %v608, 7
    %v610 = vsub.s32 %v607, %v609
    %v611 = vrot.slane %v604, %v610
    %v613 = vmul.f32 %v593, %v611
    %v614 = vld [vmem:[%s5] sm:$0x1]
    %v615 = vmul.f32 %v587, %v613
    %v616 = vsub.f32 %v614, %v615
    %v618 = vlaneseq
    %v619 = vshrl.u32 %v618, 7
    %v620 = vsub.s32 0, %v619
    %v621 = vrot.slane %v616, %v620
    %v623 = vsel %vm498, %v613, %v621
    %v624 = vld [vmem:[%s3] sm:$0xff]
    %vm625 = vcmask 64512
    %v627 = vsel %vm625, %v623, 0
    %629 = vmatprep.subr.mxu0 0.0
    %630 = vmatpush1.msra.mxu0 %v624
    %631 = vmatprep.subr.mxu0 0.0
    %632 = vmatpush1.msra.mxu0 0.0
    %633 = vmatprep.subr.mxu0 0.0
    %634 = vmatpush1.msra.mxu0 0.0
    %635 = vmatprep.subr.mxu0 0.0
    %636 = vmatpush1.msra.mxu0 0.0
    %637 = vmatprep.subr.mxu0 0.0
    %638 = vmatpush1.msra.mxu0 0.0
    %639 = vmatprep.subr.mxu0 0.0
    %640 = vmatpush1.msra.mxu0 0.0
    %641 = vmatprep.subr.mxu0 0.0
    %642 = vmatpush1.msra.mxu0 0.0
    %643 = vmatprep.subr.mxu0 0.0
    %644 = vmatpush1.msra.mxu0 0.0
    %645 = vmatprep.subr.mxu0 0.0
    %646 = vmatpush1.msra.mxu0 0.0
    %647 = vmatprep.subr.mxu0 0.0
    %648 = vmatpush1.msra.mxu0 0.0
    %649 = vmatprep.subr.mxu0 0.0
    %650 = vmatpush1.msra.mxu0 0.0
    %651 = vmatprep.subr.mxu0 0.0
    %652 = vmatpush1.msra.mxu0 0.0
    %653 = vmatprep.subr.mxu0 0.0
    %654 = vmatpush1.msra.mxu0 0.0
    %655 = vmatprep.subr.mxu0 0.0
    %656 = vmatpush1.msra.mxu0 0.0
    %657 = vmatprep.subr.mxu0 0.0
    %658 = vmatpush1.msra.mxu0 0.0
    %659 = vmatprep.subr.mxu0 0.0
    %660 = vmatpush1.msra.mxu0 0.0
    %661 = vmatprep.subr.mxu0 0.0
    %662 = vmatpush1.msra.mxu0 0.0
    %663 = vmatprep.subr.mxu0 0.0
    %664 = vmatpush1.msra.mxu0 0.0
    %665 = vmatprep.subr.mxu0 0.0
    %666 = vmatpush1.msra.mxu0 0.0
    %667 = vmatprep.subr.mxu0 0.0
    %668 = vmatpush1.msra.mxu0 0.0
    %669 = vmatprep.subr.mxu0 0.0
    %670 = vmatpush1.msra.mxu0 0.0
    %671 = vmatprep.subr.mxu0 0.0
    %672 = vmatpush1.msra.mxu0 0.0
    %673 = vmatprep.subr.mxu0 0.0
    %674 = vmatpush1.msra.mxu0 0.0
    %675 = vmatprep.subr.mxu0 0.0
    %676 = vmatpush1.msra.mxu0 0.0
    %677 = vmatprep.subr.mxu0 0.0
    %678 = vmatpush1.msra.mxu0 0.0
    %679 = vmatprep.subr.mxu0 0.0
    %680 = vmatpush1.msra.mxu0 0.0
    %681 = vmatprep.subr.mxu0 0.0
    %682 = vmatpush1.msra.mxu0 0.0
    %683 = vmatprep.subr.mxu0 0.0
    %684 = vmatpush1.msra.mxu0 0.0
    %685 = vmatprep.subr.mxu0 0.0
    %686 = vmatpush1.msra.mxu0 0.0
    %687 = vmatprep.subr.mxu0 0.0
    %688 = vmatpush1.msra.mxu0 0.0
    %689 = vmatprep.subr.mxu0 0.0
    %690 = vmatpush1.msra.mxu0 0.0
    %691 = vmatprep.subr.mxu0 0.0
    %692 = vmatpush1.msra.mxu0 0.0
    %693 = vmatprep.mubr.f32.mxu0 0.0
    %694 = vmatmul.mubr.f32.gmra.mrb[0].mxu0 %v627
    %v695 = vpop.f32.mrb[0].mxu0
    %v696 = vadd.f32 0.0, %v695
    %v697 = vpop.f32.mrb[0].mxu0
    %698 = vdwg.mxu0
    %v699 = vlaneseq
    %v700 = vshrl.u32 %v699, 7
    %v701 = vsub.s32 0, %v700
    %v702 = vrot.slane %v696, %v701
    %v703 = vmul.f32 %v430, %v702
    %v704 = vmul.f32 %v431, %v702
    %v705 = vmul.f32 %v432, %v702
    %v706 = vmul.f32 %v433, %v702
    %v707 = vmul.f32 %v434, %v702
    %v708 = vlaneseq
    %v709 = vshrl.u32 %v708, 7
    %v710 = vsub.s32 1, %v709
    %v711 = vrot.slane %v696, %v710
    %v712 = vadd.f32 %v703, %v711
    %v713 = vadd.f32 %v704, %v711
    %v714 = vadd.f32 %v705, %v711
    %v715 = vadd.f32 %v706, %v711
    %v716 = vadd.f32 %v707, %v711
    %v717 = vmax.f32 %v712, 0.0
    %v718 = vmax.f32 %v713, 0.0
    %v719 = vmax.f32 %v714, 0.0
    %v720 = vmax.f32 %v715, 0.0
    %v721 = vmax.f32 %v716, 0.0
    %vm727 = vcmask 1046528
    %v728 = vrot.slane %v717, 1
    %v729 = vrot.slane %v718, 1
    %v730 = vsel %vm727, %v728, %v729
    %v731 = vrot.slane %v719, 1
    %v732 = vsel %vm727, %v729, %v731
    %v733 = vrot.slane %v720, 1
    %v734 = vsel %vm727, %v731, %v733
    %v735 = vrot.slane %v721, 1
    %v736 = vsel %vm727, %v733, %v735
    %v742 = vmax.f32 %v717, %v730
    %v743 = vmax.f32 %v718, %v732
    %v744 = vmax.f32 %v719, %v734
    %v745 = vmax.f32 %v720, %v736
    %v746 = vmax.f32 %v721, %v735
    %752 = vrot.lane.b32.xlu0 %v742, 120
    %v753 = vpop.permute.xlu0 %752
    %754 = vrot.lane.b32.xlu0 %v743, 120
    %v755 = vpop.permute.xlu0 %754
    %756 = vrot.lane.b32.xlu0 %v744, 120
    %v757 = vpop.permute.xlu0 %756
    %758 = vrot.lane.b32.xlu0 %v745, 120
    %v759 = vpop.permute.xlu0 %758
    %760 = vrot.lane.b32.xlu0 %v746, 120
    %v761 = vpop.permute.xlu0 %760
    %v767 = vmax.f32 %v742, %v753
    %v768 = vmax.f32 %v743, %v755
    %v769 = vmax.f32 %v744, %v757
    %v770 = vmax.f32 %v745, %v759
    %v771 = vmax.f32 %v746, %v761
    %vm772 = vcmask 982016
    %773 = vst.msk [vmem:[#allocation5] sm:$0xff] %vm772, %v767
    %774 = vst.msk [vmem:[#allocation5 + $0x8] sm:$0xff] %vm772, %v768
    %775 = vst.msk [vmem:[#allocation5 + $0x10] sm:$0xff] %vm772, %v769
    %776 = vst.msk [vmem:[#allocation5 + $0x18] sm:$0xff] %vm772, %v770
    %vm777 = vcmask 974848
    %778 = vst.msk [vmem:[#allocation5 + $0x20] sm:$0x1] %vm777, %v771
    %vm779 = vcmask 977920
    %780 = vst.msk [vmem:[#allocation2] sm:$0xf] %vm779, 0
    %781 = vst.msk [vmem:[#allocation2 + $0x4] sm:$0xf] %vm779, 0
    %vm782 = vcmask 975872
    %783 = vst.msk [vmem:[#allocation2 + $0x8] sm:$0x3] %vm782, 0
    %v784 = vld [vmem:[#allocation5] ss:$2 sm:$0xff]
    %v785 = vpack.c.bf16 %v784, %v784
    %v787 = vunpack.c.l.b16 %v785
    %v788 = vpack.c.b16 %v787, %v787
    %v790 = vshrl.u32 %v788, 16
    %v792 = vrot.slane %v790, 7
    %v793 = vshll.u32 %v788, 16
    %v795 = vor.u32 %v792, %v793
    %v796 = vrot.slane %v792, 4
    %vm799 = vcmask 977920
    %vm800 = vsmask.f32 7938
    %vm801 = vmand %vm799, %vm800
    %v802 = vld [vmem:[#allocation2] sm:$0xf]
    %v803 = vsel %vm801, %v795, %v802
    %804 = vst [vmem:[#allocation2] sm:$0xf] %v803
    %vm805 = vcmask 974848
    %vm806 = vsmask.f32 256
    %vm807 = vmand %vm805, %vm806
    %v808 = vld [vmem:[#allocation2 + $0x4] sm:$0x1]
    %v809 = vsel %vm807, %v796, %v808
    %810 = vst [vmem:[#allocation2 + $0x4] sm:$0x1] %v809
    %s811 = scalar_lea.vmem [#allocation5], 18
    %v812 = vld [vmem:[%s811] ss:$2 sm:$0xff]
    %v813 = vpack.c.bf16 %v812, %v812
    %v815 = vunpack.c.l.b16 %v813
    %v816 = vpack.c.b16 %v815, %v815
    %v818 = vshrl.u32 %v816, 16
    %v820 = vrot.slane %v818, 6
    %v821 = vshll.u32 %v816, 16
    %v823 = vrot.slane %v821, 7
    %v824 = vor.u32 %v820, %v823
    %v825 = vrot.slane %v824, 4
    %vm828 = vcmask 977921
    %vm829 = vsmask.f32 7942
    %vm830 = vmand %vm828, %vm829
    %v831 = vld [vmem:[#allocation2 + $0x4] sm:$0xe]
    %v832 = vsel %vm830, %v824, %v831
    %833 = vst [vmem:[#allocation2 + $0x4] sm:$0xe] %v832
    %vm834 = vcmask 975872
    %vm835 = vsmask.f32 1280
    %vm836 = vmand %vm834, %vm835
    %v837 = vld [vmem:[#allocation2 + $0x8] sm:$0x3]
    %v838 = vsel %vm836, %v825, %v837
    %839 = vst [vmem:[#allocation2 + $0x8] sm:$0x3] %v838
    %v840 = vld [vmem:[#allocation2] sm:$0xf]
    %v841 = vld [vmem:[#allocation2 + $0x4] sm:$0xf]
    %v842 = vld [vmem:[#allocation2 + $0x8] sm:$0x1]
    %v843 = vld [vmem:[%s7] sm:$0xf]
    %v844 = vld [vmem:[%s7 + $0x4] sm:$0xf]
    %v845 = vld [vmem:[%s7 + $0x8] sm:$0xf]
    %v846 = vld [vmem:[%s7 + $0xc] sm:$0xf]
    %v847 = vld [vmem:[%s7 + $0x10] sm:$0xf]
    %v848 = vld [vmem:[%s7 + $0x14] sm:$0xf]
    %v849 = vld [vmem:[%s7 + $0x18] sm:$0xf]
    %v850 = vld [vmem:[%s7 + $0x1c] sm:$0xf]
    %v851 = vld [vmem:[%s7 + $0x20] sm:$0xf]
    %v852 = vld [vmem:[%s7 + $0x24] sm:$0xf]
    %v853 = vld [vmem:[%s7 + $0x28] sm:$0xf]
    %v854 = vld [vmem:[%s7 + $0x2c] sm:$0xf]
    %v855 = vld [vmem:[%s7 + $0x30] sm:$0xf]
    %v856 = vld [vmem:[%s7 + $0x34] sm:$0xf]
    %v857 = vld [vmem:[%s7 + $0x38] sm:$0xf]
    %v858 = vld [vmem:[#allocation2 + $0x8] sm:$0x3]
    %s859 = scalar_lea.vmem %s7, 60
    %v860 = vld [vmem:[%s859] sm:$0xf]
    %v861 = vld [vmem:[%s859 + $0x4] sm:$0xf]
    %v862 = vld [vmem:[%s859 + $0x8] sm:$0xf]
    %v863 = vld [vmem:[%s859 + $0xc] sm:$0xf]
    %v864 = vld [vmem:[%s859 + $0x10] sm:$0xf]
    %v865 = vld [vmem:[%s859 + $0x14] sm:$0xf]
    %v866 = vld [vmem:[%s859 + $0x18] sm:$0xf]
    %v867 = vld [vmem:[%s859 + $0x1c] sm:$0xf]
    %v868 = vld [vmem:[%s859 + $0x20] sm:$0xf]
    %v869 = vld [vmem:[%s859 + $0x24] sm:$0xf]
    %v870 = vld [vmem:[%s859 + $0x28] sm:$0xf]
    %v871 = vld [vmem:[%s859 + $0x2c] sm:$0xf]
    %v872 = vld [vmem:[%s859 + $0x30] sm:$0xf]
    %v873 = vld [vmem:[%s859 + $0x34] sm:$0xf]
    %v874 = vld [vmem:[%s859 + $0x38] sm:$0xf]
    %v878 = vunpack.c.l.b16 %v840
    %v879 = vunpack.c.l.b16 %v841
    %v880 = vunpack.c.l.b16 %v858
    %v881 = vpack.c.b16 %v879, %v878
    %v882 = vpack.c.b16 %v880, %v880
    %v884 = vshrl.u32 %v881, 16
    %v886 = vshll.u32 %v881, 16
    %v888 = vrot.slane %v886, 1
    %v889 = vor.u32 %v884, %v888
    %v891 = vshll.u32 %v882, 16
    %v893 = vrot.slane %v891, 1
    %v894 = vsel %vm118, %v889, %v893
    %v895 = vshrl.u32 %v882, 16
    %v897 = vor.u32 %v895, %v893
    %v913 = vunpack.c.l.b16 %v860
    %v914 = vunpack.c.l.b16 %v861
    %v915 = vunpack.c.l.b16 %v862
    %v916 = vunpack.c.l.b16 %v863
    %v917 = vunpack.c.l.b16 %v864
    %v918 = vunpack.c.l.b16 %v865
    %v919 = vunpack.c.l.b16 %v866
    %v920 = vunpack.c.l.b16 %v867
    %v921 = vunpack.c.l.b16 %v868
    %v922 = vunpack.c.l.b16 %v869
    %v923 = vunpack.c.l.b16 %v870
    %v924 = vunpack.c.l.b16 %v871
    %v925 = vunpack.c.l.b16 %v872
    %v926 = vunpack.c.l.b16 %v873
    %v927 = vunpack.c.l.b16 %v874
    %v928 = vpack.c.b16 %v914, %v913
    %v929 = vpack.c.b16 %v916, %v915
    %v930 = vpack.c.b16 %v918, %v917
    %v931 = vpack.c.b16 %v920, %v919
    %v932 = vpack.c.b16 %v922, %v921
    %v933 = vpack.c.b16 %v924, %v923
    %v934 = vpack.c.b16 %v926, %v925
    %v935 = vpack.c.b16 %v927, %v927
    %v944 = vsel %vm772, %v894, 0
    %v947 = vsel %vm772, %v897, 0
    %vm949 = vcmask 1043456
    %v951 = vsel %vm949, %v935, 0
    %953 = vmatprep.subr.bf16.mxu0 0
    %954 = vmatpush1.bf16.msra.mxu0 %v928
    %955 = vmatprep.subr.bf16.mxu0 0
    %956 = vmatpush1.bf16.msra.mxu0 %v929
    %957 = vmatprep.subr.bf16.mxu0 0
    %958 = vmatpush1.bf16.msra.mxu0 %v930
    %959 = vmatprep.subr.bf16.mxu0 0
    %960 = vmatpush1.bf16.msra.mxu0 %v931
    %961 = vmatprep.subr.bf16.mxu0 0
    %962 = vmatpush1.bf16.msra.mxu0 %v932
    %963 = vmatprep.subr.bf16.mxu0 0
    %964 = vmatpush1.bf16.msra.mxu0 %v933
    %965 = vmatprep.subr.bf16.mxu0 0
    %966 = vmatpush1.bf16.msra.mxu0 %v934
    %967 = vmatprep.subr.bf16.mxu0 0
    %968 = vmatpush1.bf16.msra.mxu0 %v951
    %969 = vmatprep.subr.bf16.mxu0 0
    %970 = vmatpush1.bf16.msra.mxu0 0
    %971 = vmatprep.subr.bf16.mxu0 0
    %972 = vmatpush1.bf16.msra.mxu0 0
    %973 = vmatprep.subr.bf16.mxu0 0
    %974 = vmatpush1.bf16.msra.mxu0 0
    %975 = vmatprep.subr.bf16.mxu0 0
    %976 = vmatpush1.bf16.msra.mxu0 0
    %977 = vmatprep.subr.bf16.mxu0 0
    %978 = vmatpush1.bf16.msra.mxu0 0
    %979 = vmatprep.subr.bf16.mxu0 0
    %980 = vmatpush1.bf16.msra.mxu0 0
    %981 = vmatprep.subr.bf16.mxu0 0
    %982 = vmatpush1.bf16.msra.mxu0 0
    %983 = vmatprep.subr.bf16.mxu0 0
    %984 = vmatpush1.bf16.msra.mxu0 0
    %985 = vmatprep.mubr.bf16.mxu0 0
    %986 = vmatmul.mubr.bf16.gmra.mrb[0].mxu0 %v944
    %v987 = vpop.f32.mrb[0].mxu0
    %v988 = vadd.f32 0.0, %v987
    %v989 = vpop.f32.mrb[0].mxu0
    %v990 = vpop.f32.mrb[0].mxu0
    %v991 = vadd.f32 0.0, %v990
    %v992 = vpop.f32.mrb[0].mxu0
    %993 = vmatprep.mubr.bf16.mxu0 0
    %994 = vmatmul.mubr.bf16.gmra.mrb[0].mxu0 %v947
    %v995 = vpop.f32.mrb[0].mxu0
    %v996 = vadd.f32 0.0, %v995
    %v997 = vpop.f32.mrb[0].mxu0
    %v998 = vpop.f32.mrb[0].mxu0
    %v999 = vpop.f32.mrb[0].mxu0
    %1000 = vdwg.mxu0
    %v1002 = vunpack.c.l.b16 %v842
    %v1003 = vpack.c.b16 %v1002, %v1002
    %v1019 = vunpack.c.l.b16 %v843
    %v1020 = vunpack.c.l.b16 %v844
    %v1021 = vunpack.c.l.b16 %v845
    %v1022 = vunpack.c.l.b16 %v846
    %v1023 = vunpack.c.l.b16 %v847
    %v1024 = vunpack.c.l.b16 %v848
    %v1025 = vunpack.c.l.b16 %v849
    %v1026 = vunpack.c.l.b16 %v850
    %v1027 = vunpack.c.l.b16 %v851
    %v1028 = vunpack.c.l.b16 %v852
    %v1029 = vunpack.c.l.b16 %v853
    %v1030 = vunpack.c.l.b16 %v854
    %v1031 = vunpack.c.l.b16 %v855
    %v1032 = vunpack.c.l.b16 %v856
    %v1033 = vunpack.c.l.b16 %v857
    %v1034 = vpack.c.b16 %v1020, %v1019
    %v1035 = vpack.c.b16 %v1022, %v1021
    %v1036 = vpack.c.b16 %v1024, %v1023
    %v1037 = vpack.c.b16 %v1026, %v1025
    %v1038 = vpack.c.b16 %v1028, %v1027
    %v1039 = vpack.c.b16 %v1030, %v1029
    %v1040 = vpack.c.b16 %v1032, %v1031
    %v1041 = vpack.c.b16 %v1033, %v1033
    %v1049 = vsel %vm772, %v881, 0
    %v1052 = vsel %vm772, %v1003, 0
    %v1055 = vsel %vm949, %v1041, 0
    %1057 = vmatprep.subr.bf16.mxu0 0
    %1058 = vmatpush1.bf16.msra.mxu0 %v1034
    %1059 = vmatprep.subr.bf16.mxu0 0
    %1060 = vmatpush1.bf16.msra.mxu0 %v1035
    %1061 = vmatprep.subr.bf16.mxu0 0
    %1062 = vmatpush1.bf16.msra.mxu0 %v1036
    %1063 = vmatprep.subr.bf16.mxu0 0
    %1064 = vmatpush1.bf16.msra.mxu0 %v1037
    %1065 = vmatprep.subr.bf16.mxu0 0
    %1066 = vmatpush1.bf16.msra.mxu0 %v1038
    %1067 = vmatprep.subr.bf16.mxu0 0
    %1068 = vmatpush1.bf16.msra.mxu0 %v1039
    %1069 = vmatprep.subr.bf16.mxu0 0
    %1070 = vmatpush1.bf16.msra.mxu0 %v1040
    %1071 = vmatprep.subr.bf16.mxu0 0
    %1072 = vmatpush1.bf16.msra.mxu0 %v1055
    %1073 = vmatprep.subr.bf16.mxu0 0
    %1074 = vmatpush1.bf16.msra.mxu0 0
    %1075 = vmatprep.subr.bf16.mxu0 0
    %1076 = vmatpush1.bf16.msra.mxu0 0
    %1077 = vmatprep.subr.bf16.mxu0 0
    %1078 = vmatpush1.bf16.msra.mxu0 0
    %1079 = vmatprep.subr.bf16.mxu0 0
    %1080 = vmatpush1.bf16.msra.mxu0 0
    %1081 = vmatprep.subr.bf16.mxu0 0
    %1082 = vmatpush1.bf16.msra.mxu0 0
    %1083 = vmatprep.subr.bf16.mxu0 0
    %1084 = vmatpush1.bf16.msra.mxu0 0
    %1085 = vmatprep.subr.bf16.mxu0 0
    %1086 = vmatpush1.bf16.msra.mxu0 0
    %1087 = vmatprep.subr.bf16.mxu0 0
    %1088 = vmatpush1.bf16.msra.mxu0 0
    %1089 = vmatprep.mubr.bf16.mxu0 0
    %1090 = vmatmul.mubr.bf16.gmra.mrb[0].mxu0 %v1049
    %v1091 = vpop.f32.mrb[0].mxu0
    %v1092 = vadd.f32 %v988, %v1091
    %v1093 = vpop.f32.mrb[0].mxu0
    %v1094 = vpop.f32.mrb[0].mxu0
    %v1095 = vadd.f32 %v991, %v1094
    %v1096 = vpop.f32.mrb[0].mxu0
    %1097 = vmatprep.mubr.bf16.mxu0 0
    %1098 = vmatmul.mubr.bf16.gmra.mrb[0].mxu0 %v1052
    %v1099 = vpop.f32.mrb[0].mxu0
    %v1100 = vadd.f32 %v996, %v1099
    %v1101 = vpop.f32.mrb[0].mxu0
    %v1102 = vpop.f32.mrb[0].mxu0
    %v1103 = vpop.f32.mrb[0].mxu0
    %1104 = vdwg.mxu0
    %v1105 = vld [vmem:[#allocation2] sm:$0xe]
    %s1106 = scalar_lea.vmem %s7, 120
    %v1107 = vld [vmem:[%s1106] sm:$0xf]
    %v1108 = vld [vmem:[%s1106 + $0x4] sm:$0xf]
    %v1109 = vld [vmem:[%s1106 + $0x8] sm:$0xf]
    %v1110 = vld [vmem:[%s1106 + $0xc] sm:$0xf]
    %v1111 = vld [vmem:[%s1106 + $0x10] sm:$0xf]
    %v1112 = vld [vmem:[%s1106 + $0x14] sm:$0xf]
    %v1113 = vld [vmem:[%s1106 + $0x18] sm:$0xf]
    %v1114 = vld [vmem:[%s1106 + $0x1c] sm:$0xf]
    %v1115 = vld [vmem:[%s1106 + $0x20] sm:$0xf]
    %v1116 = vld [vmem:[%s1106 + $0x24] sm:$0xf]
    %v1117 = vld [vmem:[%s1106 + $0x28] sm:$0xf]
    %v1118 = vld [vmem:[%s1106 + $0x2c] sm:$0xf]
    %v1119 = vld [vmem:[%s1106 + $0x30] sm:$0xf]
    %v1120 = vld [vmem:[%s1106 + $0x34] sm:$0xf]
    %v1121 = vld [vmem:[%s1106 + $0x38] sm:$0xf]
    %v1123 = vunpack.c.l.b16 %v1105
    %v1124 = vpack.c.b16 %v879, %v1123
    %v1125 = vrot.slane %v1124, 1
    %v1126 = vrot.slane %v882, 1
    %v1127 = vsel %vm335, %v1125, %v1126
    %v1143 = vunpack.c.l.b16 %v1107
    %v1144 = vunpack.c.l.b16 %v1108
    %v1145 = vunpack.c.l.b16 %v1109
    %v1146 = vunpack.c.l.b16 %v1110
    %v1147 = vunpack.c.l.b16 %v1111
    %v1148 = vunpack.c.l.b16 %v1112
    %v1149 = vunpack.c.l.b16 %v1113
    %v1150 = vunpack.c.l.b16 %v1114
    %v1151 = vunpack.c.l.b16 %v1115
    %v1152 = vunpack.c.l.b16 %v1116
    %v1153 = vunpack.c.l.b16 %v1117
    %v1154 = vunpack.c.l.b16 %v1118
    %v1155 = vunpack.c.l.b16 %v1119
    %v1156 = vunpack.c.l.b16 %v1120
    %v1157 = vunpack.c.l.b16 %v1121
    %v1158 = vpack.c.b16 %v1144, %v1143
    %v1159 = vpack.c.b16 %v1146, %v1145
    %v1160 = vpack.c.b16 %v1148, %v1147
    %v1161 = vpack.c.b16 %v1150, %v1149
    %v1162 = vpack.c.b16 %v1152, %v1151
    %v1163 = vpack.c.b16 %v1154, %v1153
    %v1164 = vpack.c.b16 %v1156, %v1155
    %v1165 = vpack.c.b16 %v1157, %v1157
    %v1174 = vsel %vm772, %v1127, 0
    %v1177 = vsel %vm772, %v1126, 0
    %v1180 = vsel %vm949, %v1165, 0
    %1182 = vmatprep.subr.bf16.mxu0 0
    %1183 = vmatpush1.bf16.msra.mxu0 %v1158
    %1184 = vmatprep.subr.bf16.mxu0 0
    %1185 = vmatpush1.bf16.msra.mxu0 %v1159
    %1186 = vmatprep.subr.bf16.mxu0 0
    %1187 = vmatpush1.bf16.msra.mxu0 %v1160
    %1188 = vmatprep.subr.bf16.mxu0 0
    %1189 = vmatpush1.bf16.msra.mxu0 %v1161
    %1190 = vmatprep.subr.bf16.mxu0 0
    %1191 = vmatpush1.bf16.msra.mxu0 %v1162
    %1192 = vmatprep.subr.bf16.mxu0 0
    %1193 = vmatpush1.bf16.msra.mxu0 %v1163
    %1194 = vmatprep.subr.bf16.mxu0 0
    %1195 = vmatpush1.bf16.msra.mxu0 %v1164
    %1196 = vmatprep.subr.bf16.mxu0 0
    %1197 = vmatpush1.bf16.msra.mxu0 %v1180
    %1198 = vmatprep.subr.bf16.mxu0 0
    %1199 = vmatpush1.bf16.msra.mxu0 0
    %1200 = vmatprep.subr.bf16.mxu0 0
    %1201 = vmatpush1.bf16.msra.mxu0 0
    %1202 = vmatprep.subr.bf16.mxu0 0
    %1203 = vmatpush1.bf16.msra.mxu0 0
    %1204 = vmatprep.subr.bf16.mxu0 0
    %1205 = vmatpush1.bf16.msra.mxu0 0
    %1206 = vmatprep.subr.bf16.mxu0 0
    %1207 = vmatpush1.bf16.msra.mxu0 0
    %1208 = vmatprep.subr.bf16.mxu0 0
    %1209 = vmatpush1.bf16.msra.mxu0 0
    %1210 = vmatprep.subr.bf16.mxu0 0
    %1211 = vmatpush1.bf16.msra.mxu0 0
    %1212 = vmatprep.subr.bf16.mxu0 0
    %1213 = vmatpush1.bf16.msra.mxu0 0
    %1214 = vmatprep.mubr.bf16.mxu0 0
    %1215 = vmatmul.mubr.bf16.gmra.mrb[0].mxu0 %v1174
    %v1216 = vpop.f32.mrb[0].mxu0
    %v1217 = vadd.f32 0.0, %v1216
    %v1218 = vpop.f32.mrb[0].mxu0
    %v1219 = vpop.f32.mrb[0].mxu0
    %v1220 = vadd.f32 0.0, %v1219
    %v1221 = vpop.f32.mrb[0].mxu0
    %1222 = vmatprep.mubr.bf16.mxu0 0
    %1223 = vmatmul.mubr.bf16.gmra.mrb[0].mxu0 %v1177
    %v1224 = vpop.f32.mrb[0].mxu0
    %v1225 = vadd.f32 0.0, %v1224
    %v1226 = vpop.f32.mrb[0].mxu0
    %v1227 = vpop.f32.mrb[0].mxu0
    %v1228 = vpop.f32.mrb[0].mxu0
    %1229 = vdwg.mxu0
    %v1230 = vadd.f32 %v1092, %v1217
    %v1231 = vadd.f32 %v1095, %v1220
    %v1232 = vadd.f32 %v1100, %v1225
    %v1233 = vld [vmem:[%s12] sm:$0xff]
    %v1234 = vld [vmem:[%s12 + $0x8] sm:$0xff]
    %v1235 = vld [vmem:[%s12 + $0x10] sm:$0x3]
    %1237 = vset.pattern.permute.xlu0 0
    %1238 = vperm.xlu0 %1237, %v1233
    %v1239 = vpop.permute.xlu0 %1238
    %1242 = vset.pattern.permute.xlu0 0
    %1243 = vperm.xlu0 %1242, %v1234
    %v1244 = vpop.permute.xlu0 %1243
    %1247 = vset.pattern.permute.xlu0 0
    %1248 = vperm.xlu0 %1247, %v1235
    %v1249 = vpop.permute.xlu0 %1248
    %v1251 = vmul.f32 %v1230, %v1239
    %v1252 = vmul.f32 %v1231, %v1244
    %v1253 = vmul.f32 %v1232, %v1249
    %v1254 = vsel %vm166, %v1251, 0.0
    %v1255 = vsel %vm166, %v1252, 0.0
    %v1256 = vadd.f32 %v1254, %v1255
    %vm1257 = vcmask 517120
    %v1258 = vsel %vm1257, %v1253, 0.0
    %v1259 = vadd.f32 %v1256, %v1258
    %v1260 = vrot.slane %v1259, 4
    %v1261 = vadd.f32 %v1259, %v1260
    %v1262 = vrot.slane %v1261, 2
    %v1263 = vadd.f32 %v1261, %v1262
    %v1264 = vrot.slane %v1263, 1
    %v1265 = vadd.f32 %v1263, %v1264
    %v1266 = vmul.f32 %v1251, %v1251
    %v1267 = vmul.f32 %v1252, %v1252
    %v1268 = vmul.f32 %v1253, %v1253
    %v1269 = vsel %vm166, %v1266, 0.0
    %v1270 = vsel %vm166, %v1267, 0.0
    %v1271 = vadd.f32 %v1269, %v1270
    %v1272 = vsel %vm1257, %v1268, 0.0
    %v1273 = vadd.f32 %v1271, %v1272
    %v1274 = vrot.slane %v1273, 4
    %v1275 = vadd.f32 %v1273, %v1274
    %v1276 = vrot.slane %v1275, 2
    %v1277 = vadd.f32 %v1275, %v1276
    %v1278 = vrot.slane %v1277, 1
    %v1279 = vadd.f32 %v1277, %v1278
    %v1280 = vsel %vm498, %v1265, %v1279
    %v1281 = vld [vmem:[%s8] sm:$0xff]
    %v1282 = vld [vmem:[%s8 + $0x8] sm:$0xff]
    %v1283 = vld [vmem:[%s8 + $0x10] sm:$0xff]
    %v1284 = vld [vmem:[%s8 + $0x18] sm:$0xff]
    %v1285 = vld [vmem:[%s8 + $0x20] sm:$0xff]
    %v1286 = vld [vmem:[%s8 + $0x28] sm:$0xff]
    %v1287 = vld [vmem:[%s8 + $0x30] sm:$0xff]
    %v1288 = vld [vmem:[%s8 + $0x38] sm:$0xff]
    %v1290 = vsel %vm166, %v1280, 0
    %1292 = vmatprep.subr.mxu0 0.0
    %1293 = vmatpush1.msra.mxu0 %v1281
    %1294 = vmatprep.subr.mxu0 0.0
    %1295 = vmatpush1.msra.mxu0 %v1282
    %1296 = vmatprep.subr.mxu0 0.0
    %1297 = vmatpush1.msra.mxu0 %v1283
    %1298 = vmatprep.subr.mxu0 0.0
    %1299 = vmatpush1.msra.mxu0 %v1284
    %1300 = vmatprep.subr.mxu0 0.0
    %1301 = vmatpush1.msra.mxu0 %v1285
    %1302 = vmatprep.subr.mxu0 0.0
    %1303 = vmatpush1.msra.mxu0 %v1286
    %1304 = vmatprep.subr.mxu0 0.0
    %1305 = vmatpush1.msra.mxu0 %v1287
    %1306 = vmatprep.subr.mxu0 0.0
    %1307 = vmatpush1.msra.mxu0 %v1288
    %1308 = vmatprep.subr.mxu0 0.0
    %1309 = vmatpush1.msra.mxu0 0.0
    %1310 = vmatprep.subr.mxu0 0.0
    %1311 = vmatpush1.msra.mxu0 0.0
    %1312 = vmatprep.subr.mxu0 0.0
    %1313 = vmatpush1.msra.mxu0 0.0
    %1314 = vmatprep.subr.mxu0 0.0
    %1315 = vmatpush1.msra.mxu0 0.0
    %1316 = vmatprep.subr.mxu0 0.0
    %1317 = vmatpush1.msra.mxu0 0.0
    %1318 = vmatprep.subr.mxu0 0.0
    %1319 = vmatpush1.msra.mxu0 0.0
    %1320 = vmatprep.subr.mxu0 0.0
    %1321 = vmatpush1.msra.mxu0 0.0
    %1322 = vmatprep.subr.mxu0 0.0
    %1323 = vmatpush1.msra.mxu0 0.0
    %1324 = vmatprep.subr.mxu0 0.0
    %1325 = vmatpush1.msra.mxu0 0.0
    %1326 = vmatprep.subr.mxu0 0.0
    %1327 = vmatpush1.msra.mxu0 0.0
    %1328 = vmatprep.subr.mxu0 0.0
    %1329 = vmatpush1.msra.mxu0 0.0
    %1330 = vmatprep.subr.mxu0 0.0
    %1331 = vmatpush1.msra.mxu0 0.0
    %1332 = vmatprep.subr.mxu0 0.0
    %1333 = vmatpush1.msra.mxu0 0.0
    %1334 = vmatprep.subr.mxu0 0.0
    %1335 = vmatpush1.msra.mxu0 0.0
    %1336 = vmatprep.subr.mxu0 0.0
    %1337 = vmatpush1.msra.mxu0 0.0
    %1338 = vmatprep.subr.mxu0 0.0
    %1339 = vmatpush1.msra.mxu0 0.0
    %1340 = vmatprep.subr.mxu0 0.0
    %1341 = vmatpush1.msra.mxu0 0.0
    %1342 = vmatprep.subr.mxu0 0.0
    %1343 = vmatpush1.msra.mxu0 0.0
    %1344 = vmatprep.subr.mxu0 0.0
    %1345 = vmatpush1.msra.mxu0 0.0
    %1346 = vmatprep.subr.mxu0 0.0
    %1347 = vmatpush1.msra.mxu0 0.0
    %1348 = vmatprep.subr.mxu0 0.0
    %1349 = vmatpush1.msra.mxu0 0.0
    %1350 = vmatprep.subr.mxu0 0.0
    %1351 = vmatpush1.msra.mxu0 0.0
    %1352 = vmatprep.subr.mxu0 0.0
    %1353 = vmatpush1.msra.mxu0 0.0
    %1354 = vmatprep.subr.mxu0 0.0
    %1355 = vmatpush1.msra.mxu0 0.0
    %1356 = vmatprep.mubr.f32.mxu0 0.0
    %1357 = vmatmul.mubr.f32.gmra.mrb[0].mxu0 %v1290
    %v1358 = vpop.f32.mrb[0].mxu0
    %v1359 = vadd.f32 0.0, %v1358
    %v1360 = vpop.f32.mrb[0].mxu0
    %1361 = vdwg.mxu0
    %v1362 = vrcp.pop 128.0
    %v1363 = vmul.f32 %v1359, %v1362
    %v1364 = vmul.f32 %v1363, %v1363
    %v1366 = vrot.slane %v1364, 7
    %v1368 = vsub.f32 %v1363, %v1366
    %v1369 = vld [vmem:[%s10] sm:$0x1]
    %v1370 = vadd.f32 %v1368, 1e-05
    %v1371 = vrsqrt.pop %v1370
    %v1374 = vunpack.c.l.s4 1966171168
    %v1375 = vunpack.c.0.s8 %v1374
    %v1376 = vlaneseq
    %v1377 = vshrl.u32 %v1376, 7
    %v1378 = vsub.s32 %v1375, %v1377
    %v1379 = vrot.slane %v1371, %v1378
    %v1380 = vcombine.high %v1379, %v1379
    %v1382 = vunpack.c.l.s4 1966171168
    %v1383 = vunpack.c.0.s8 %v1382
    %v1384 = vlaneseq
    %v1385 = vshrl.u32 %v1384, 7
    %v1386 = vsub.s32 %v1383, %v1385
    %v1387 = vrot.slane %v1380, %v1386
    %v1389 = vmul.f32 %v1369, %v1387
    %v1390 = vld [vmem:[%s11] sm:$0x1]
    %v1391 = vmul.f32 %v1363, %v1389
    %v1392 = vsub.f32 %v1390, %v1391
    %v1394 = vlaneseq
    %v1395 = vshrl.u32 %v1394, 7
    %v1396 = vsub.s32 0, %v1395
    %v1397 = vrot.slane %v1392, %v1396
    %v1399 = vsel %vm498, %v1389, %v1397
    %v1400 = vld [vmem:[%s9] sm:$0xff]
    %v1402 = vsel %vm625, %v1399, 0
    %1404 = vmatprep.subr.mxu0 0.0
    %1405 = vmatpush1.msra.mxu0 %v1400
    %1406 = vmatprep.subr.mxu0 0.0
    %1407 = vmatpush1.msra.mxu0 0.0
    %1408 = vmatprep.subr.mxu0 0.0
    %1409 = vmatpush1.msra.mxu0 0.0
    %1410 = vmatprep.subr.mxu0 0.0
    %1411 = vmatpush1.msra.mxu0 0.0
    %1412 = vmatprep.subr.mxu0 0.0
    %1413 = vmatpush1.msra.mxu0 0.0
    %1414 = vmatprep.subr.mxu0 0.0
    %1415 = vmatpush1.msra.mxu0 0.0
    %1416 = vmatprep.subr.mxu0 0.0
    %1417 = vmatpush1.msra.mxu0 0.0
    %1418 = vmatprep.subr.mxu0 0.0
    %1419 = vmatpush1.msra.mxu0 0.0
    %1420 = vmatprep.subr.mxu0 0.0
    %1421 = vmatpush1.msra.mxu0 0.0
    %1422 = vmatprep.subr.mxu0 0.0
    %1423 = vmatpush1.msra.mxu0 0.0
    %1424 = vmatprep.subr.mxu0 0.0
    %1425 = vmatpush1.msra.mxu0 0.0
    %1426 = vmatprep.subr.mxu0 0.0
    %1427 = vmatpush1.msra.mxu0 0.0
    %1428 = vmatprep.subr.mxu0 0.0
    %1429 = vmatpush1.msra.mxu0 0.0
    %1430 = vmatprep.subr.mxu0 0.0
    %1431 = vmatpush1.msra.mxu0 0.0
    %1432 = vmatprep.subr.mxu0 0.0
    %1433 = vmatpush1.msra.mxu0 0.0
    %1434 = vmatprep.subr.mxu0 0.0
    %1435 = vmatpush1.msra.mxu0 0.0
    %1436 = vmatprep.subr.mxu0 0.0
    %1437 = vmatpush1.msra.mxu0 0.0
    %1438 = vmatprep.subr.mxu0 0.0
    %1439 = vmatpush1.msra.mxu0 0.0
    %1440 = vmatprep.subr.mxu0 0.0
    %1441 = vmatpush1.msra.mxu0 0.0
    %1442 = vmatprep.subr.mxu0 0.0
    %1443 = vmatpush1.msra.mxu0 0.0
    %1444 = vmatprep.subr.mxu0 0.0
    %1445 = vmatpush1.msra.mxu0 0.0
    %1446 = vmatprep.subr.mxu0 0.0
    %1447 = vmatpush1.msra.mxu0 0.0
    %1448 = vmatprep.subr.mxu0 0.0
    %1449 = vmatpush1.msra.mxu0 0.0
    %1450 = vmatprep.subr.mxu0 0.0
    %1451 = vmatpush1.msra.mxu0 0.0
    %1452 = vmatprep.subr.mxu0 0.0
    %1453 = vmatpush1.msra.mxu0 0.0
    %1454 = vmatprep.subr.mxu0 0.0
    %1455 = vmatpush1.msra.mxu0 0.0
    %1456 = vmatprep.subr.mxu0 0.0
    %1457 = vmatpush1.msra.mxu0 0.0
    %1458 = vmatprep.subr.mxu0 0.0
    %1459 = vmatpush1.msra.mxu0 0.0
    %1460 = vmatprep.subr.mxu0 0.0
    %1461 = vmatpush1.msra.mxu0 0.0
    %1462 = vmatprep.subr.mxu0 0.0
    %1463 = vmatpush1.msra.mxu0 0.0
    %1464 = vmatprep.subr.mxu0 0.0
    %1465 = vmatpush1.msra.mxu0 0.0
    %1466 = vmatprep.subr.mxu0 0.0
    %1467 = vmatpush1.msra.mxu0 0.0
    %1468 = vmatprep.mubr.f32.mxu0 0.0
    %1469 = vmatmul.mubr.f32.gmra.mrb[0].mxu0 %v1402
    %v1470 = vpop.f32.mrb[0].mxu0
    %v1471 = vadd.f32 0.0, %v1470
    %v1472 = vpop.f32.mrb[0].mxu0
    %1473 = vdwg.mxu0
    %v1474 = vlaneseq
    %v1475 = vshrl.u32 %v1474, 7
    %v1476 = vsub.s32 0, %v1475
    %v1477 = vrot.slane %v1471, %v1476
    %v1478 = vmul.f32 %v1230, %v1477
    %v1479 = vmul.f32 %v1231, %v1477
    %v1480 = vmul.f32 %v1232, %v1477
    %v1481 = vlaneseq
    %v1482 = vshrl.u32 %v1481, 7
    %v1483 = vsub.s32 1, %v1482
    %v1484 = vrot.slane %v1471, %v1483
    %v1485 = vadd.f32 %v1478, %v1484
    %v1486 = vadd.f32 %v1479, %v1484
    %v1487 = vadd.f32 %v1480, %v1484
    %v1488 = vmax.f32 %v1485, 0.0
    %v1489 = vmax.f32 %v1486, 0.0
    %v1490 = vmax.f32 %v1487, 0.0
    %v1494 = vrot.slane %v1488, 1
    %v1495 = vrot.slane %v1489, 1
    %v1496 = vsel %vm727, %v1494, %v1495
    %v1497 = vrot.slane %v1490, 1
    %v1498 = vsel %vm727, %v1495, %v1497
    %v1502 = vmax.f32 %v1488, %v1496
    %v1503 = vmax.f32 %v1489, %v1498
    %v1504 = vmax.f32 %v1490, %v1497
    %1508 = vrot.lane.b32.xlu0 %v1502, 120
    %v1509 = vpop.permute.xlu0 %1508
    %1510 = vrot.lane.b32.xlu0 %v1503, 120
    %v1511 = vpop.permute.xlu0 %1510
    %1512 = vrot.lane.b32.xlu0 %v1504, 120
    %v1513 = vpop.permute.xlu0 %1512
    %v1517 = vmax.f32 %v1502, %v1509
    %v1518 = vmax.f32 %v1503, %v1511
    %v1519 = vmax.f32 %v1504, %v1513
    %vm1520 = vcmask 457728
    %1521 = vst.msk [vmem:[#allocation5] sm:$0xff] %vm1520, %v1517
    %1522 = vst.msk [vmem:[#allocation5 + $0x8] sm:$0xff] %vm1520, %v1518
    %vm1523 = vcmask 450560
    %1524 = vst.msk [vmem:[#allocation5 + $0x10] sm:$0x1] %vm1523, %v1519
    %vm1525 = vcmask 453632
    %1526 = vst.msk [vmem:[#allocation3] sm:$0xf] %vm1525, 0
    %vm1527 = vcmask 451584
    %1528 = vst.msk [vmem:[#allocation3 + $0x4] sm:$0x3] %vm1527, 0
    %v1529 = vld [vmem:[#allocation5] ss:$2 sm:$0xf]
    %v1530 = vpack.c.bf16 %v1529, %v1529
    %v1532 = vunpack.c.l.b16 %v1530
    %v1533 = vpack.c.b16 %v1532, %v1532
    %v1535 = vshrl.u32 %v1533, 16
    %v1537 = vrot.slane %v1535, 7
    %v1538 = vshll.u32 %v1533, 16
    %v1540 = vor.u32 %v1537, %v1538
    %vm1542 = vcmask 452608
    %vm1543 = vsmask.f32 2306
    %vm1544 = vmand %vm1542, %vm1543
    %v1545 = vld [vmem:[#allocation3] sm:$0x7]
    %v1546 = vsel %vm1544, %v1540, %v1545
    %1547 = vst [vmem:[#allocation3] sm:$0x7] %v1546
    %s1548 = scalar_lea.vmem [#allocation5], 10
    %v1549 = vld [vmem:[%s1548] ss:$2 sm:$0xf]
    %v1550 = vpack.c.bf16 %v1549, %v1549
    %v1552 = vunpack.c.l.b16 %v1550
    %v1553 = vpack.c.b16 %v1552, %v1552
    %v1555 = vshll.u32 %v1553, 16
    %v1557 = vrot.slane %v1555, 5
    %v1558 = vshrl.u32 %v1553, 16
    %v1560 = vrot.slane %v1558, 4
    %v1561 = vor.u32 %v1560, %v1557
    %v1562 = vrot.slane %v1561, 4
    %vm1565 = vcmask 453635
    %vm1566 = vsmask.f32 7950
    %vm1567 = vmand %vm1565, %vm1566
    %v1568 = vld [vmem:[#allocation3] sm:$0x8]
    %v1569 = vsel %vm1567, %v1557, %v1568
    %1570 = vst [vmem:[#allocation3] sm:$0x8] %v1569
    %vm1571 = vcmask 451584
    %vm1572 = vmand %vm1571, %vm835
    %v1573 = vld [vmem:[#allocation3 + $0x4] sm:$0x3]
    %v1574 = vsel %vm1572, %v1562, %v1573
    %1575 = vst [vmem:[#allocation3 + $0x4] sm:$0x3] %v1574
    %v1576 = vld [vmem:[#allocation3] sm:$0xf]
    %v1577 = vld [vmem:[#allocation3 + $0x4] sm:$0x1]
    %v1578 = vld [vmem:[%s13] sm:$0xf]
    %v1579 = vld [vmem:[%s13 + $0x4] sm:$0xf]
    %v1580 = vld [vmem:[%s13 + $0x8] sm:$0xf]
    %v1581 = vld [vmem:[%s13 + $0xc] sm:$0xf]
    %v1582 = vld [vmem:[%s13 + $0x10] sm:$0xf]
    %v1583 = vld [vmem:[%s13 + $0x14] sm:$0xf]
    %v1584 = vld [vmem:[%s13 + $0x18] sm:$0xf]
    %v1585 = vld [vmem:[#allocation3 + $0x4] sm:$0x3]
    %s1586 = scalar_lea.vmem %s13, 28
    %v1587 = vld [vmem:[%s1586] sm:$0xf]
    %v1588 = vld [vmem:[%s1586 + $0x4] sm:$0xf]
    %v1589 = vld [vmem:[%s1586 + $0x8] sm:$0xf]
    %v1590 = vld [vmem:[%s1586 + $0xc] sm:$0xf]
    %v1591 = vld [vmem:[%s1586 + $0x10] sm:$0xf]
    %v1592 = vld [vmem:[%s1586 + $0x14] sm:$0xf]
    %v1593 = vld [vmem:[%s1586 + $0x18] sm:$0xf]
    %v1596 = vunpack.c.l.b16 %v1576
    %v1597 = vunpack.c.l.b16 %v1585
    %v1598 = vpack.c.b16 %v1597, %v1596
    %v1600 = vshrl.u32 %v1598, 16
    %v1602 = vshll.u32 %v1598, 16
    %v1604 = vrot.slane %v1602, 1
    %v1605 = vor.u32 %v1600, %v1604
    %v1613 = vunpack.c.l.b16 %v1587
    %v1614 = vunpack.c.l.b16 %v1588
    %v1615 = vunpack.c.l.b16 %v1589
    %v1616 = vunpack.c.l.b16 %v1590
    %v1617 = vunpack.c.l.b16 %v1591
    %v1618 = vunpack.c.l.b16 %v1592
    %v1619 = vunpack.c.l.b16 %v1593
    %v1620 = vpack.c.b16 %v1614, %v1613
    %v1621 = vpack.c.b16 %v1616, %v1615
    %v1622 = vpack.c.b16 %v1618, %v1617
    %v1623 = vpack.c.b16 %v1619, %v1619
    %v1628 = vsel %vm1520, %v1605, 0
    %v1631 = vsel %vm949, %v1623, 0
    %1633 = vmatprep.subr.bf16.mxu0 0
    %1634 = vmatpush1.bf16.msra.mxu0 %v1620
    %1635 = vmatprep.subr.bf16.mxu0 0
    %1636 = vmatpush1.bf16.msra.mxu0 %v1621
    %1637 = vmatprep.subr.bf16.mxu0 0
    %1638 = vmatpush1.bf16.msra.mxu0 %v1622
    %1639 = vmatprep.subr.bf16.mxu0 0
    %1640 = vmatpush1.bf16.msra.mxu0 %v1631
    %1641 = vmatprep.subr.bf16.mxu0 0
    %1642 = vmatpush1.bf16.msra.mxu0 0
    %1643 = vmatprep.subr.bf16.mxu0 0
    %1644 = vmatpush1.bf16.msra.mxu0 0
    %1645 = vmatprep.subr.bf16.mxu0 0
    %1646 = vmatpush1.bf16.msra.mxu0 0
    %1647 = vmatprep.subr.bf16.mxu0 0
    %1648 = vmatpush1.bf16.msra.mxu0 0
    %1649 = vmatprep.subr.bf16.mxu0 0
    %1650 = vmatpush1.bf16.msra.mxu0 0
    %1651 = vmatprep.subr.bf16.mxu0 0
    %1652 = vmatpush1.bf16.msra.mxu0 0
    %1653 = vmatprep.subr.bf16.mxu0 0
    %1654 = vmatpush1.bf16.msra.mxu0 0
    %1655 = vmatprep.subr.bf16.mxu0 0
    %1656 = vmatpush1.bf16.msra.mxu0 0
    %1657 = vmatprep.subr.bf16.mxu0 0
    %1658 = vmatpush1.bf16.msra.mxu0 0
    %1659 = vmatprep.subr.bf16.mxu0 0
    %1660 = vmatpush1.bf16.msra.mxu0 0
    %1661 = vmatprep.subr.bf16.mxu0 0
    %1662 = vmatpush1.bf16.msra.mxu0 0
    %1663 = vmatprep.subr.bf16.mxu0 0
    %1664 = vmatpush1.bf16.msra.mxu0 0
    %1665 = vmatprep.mubr.bf16.mxu0 0
    %1666 = vmatmul.mubr.bf16.gmra.mrb[0].mxu0 %v1628
    %v1667 = vpop.f32.mrb[0].mxu0
    %v1668 = vadd.f32 0.0, %v1667
    %v1669 = vpop.f32.mrb[0].mxu0
    %v1670 = vpop.f32.mrb[0].mxu0
    %v1671 = vadd.f32 0.0, %v1670
    %v1672 = vpop.f32.mrb[0].mxu0
    %1673 = vdwg.mxu0
    %v1675 = vunpack.c.l.b16 %v1577
    %v1676 = vpack.c.b16 %v1675, %v1596
    %v1684 = vunpack.c.l.b16 %v1578
    %v1685 = vunpack.c.l.b16 %v1579
    %v1686 = vunpack.c.l.b16 %v1580
    %v1687 = vunpack.c.l.b16 %v1581
    %v1688 = vunpack.c.l.b16 %v1582
    %v1689 = vunpack.c.l.b16 %v1583
    %v1690 = vunpack.c.l.b16 %v1584
    %v1691 = vpack.c.b16 %v1685, %v1684
    %v1692 = vpack.c.b16 %v1687, %v1686
    %v1693 = vpack.c.b16 %v1689, %v1688
    %v1694 = vpack.c.b16 %v1690, %v1690
    %v1699 = vsel %vm1520, %v1676, 0
    %v1702 = vsel %vm949, %v1694, 0
    %1704 = vmatprep.subr.bf16.mxu0 0
    %1705 = vmatpush1.bf16.msra.mxu0 %v1691
    %1706 = vmatprep.subr.bf16.mxu0 0
    %1707 = vmatpush1.bf16.msra.mxu0 %v1692
    %1708 = vmatprep.subr.bf16.mxu0 0
    %1709 = vmatpush1.bf16.msra.mxu0 %v1693
    %1710 = vmatprep.subr.bf16.mxu0 0
    %1711 = vmatpush1.bf16.msra.mxu0 %v1702
    %1712 = vmatprep.subr.bf16.mxu0 0
    %1713 = vmatpush1.bf16.msra.mxu0 0
    %1714 = vmatprep.subr.bf16.mxu0 0
    %1715 = vmatpush1.bf16.msra.mxu0 0
    %1716 = vmatprep.subr.bf16.mxu0 0
    %1717 = vmatpush1.bf16.msra.mxu0 0
    %1718 = vmatprep.subr.bf16.mxu0 0
    %1719 = vmatpush1.bf16.msra.mxu0 0
    %1720 = vmatprep.subr.bf16.mxu0 0
    %1721 = vmatpush1.bf16.msra.mxu0 0
    %1722 = vmatprep.subr.bf16.mxu0 0
    %1723 = vmatpush1.bf16.msra.mxu0 0
    %1724 = vmatprep.subr.bf16.mxu0 0
    %1725 = vmatpush1.bf16.msra.mxu0 0
    %1726 = vmatprep.subr.bf16.mxu0 0
    %1727 = vmatpush1.bf16.msra.mxu0 0
    %1728 = vmatprep.subr.bf16.mxu0 0
    %1729 = vmatpush1.bf16.msra.mxu0 0
    %1730 = vmatprep.subr.bf16.mxu0 0
    %1731 = vmatpush1.bf16.msra.mxu0 0
    %1732 = vmatprep.subr.bf16.mxu0 0
    %1733 = vmatpush1.bf16.msra.mxu0 0
    %1734 = vmatprep.subr.bf16.mxu0 0
    %1735 = vmatpush1.bf16.msra.mxu0 0
    %1736 = vmatprep.mubr.bf16.mxu0 0
    %1737 = vmatmul.mubr.bf16.gmra.mrb[0].mxu0 %v1699
    %v1738 = vpop.f32.mrb[0].mxu0
    %v1739 = vadd.f32 %v1668, %v1738
    %v1740 = vpop.f32.mrb[0].mxu0
    %v1741 = vpop.f32.mrb[0].mxu0
    %v1742 = vadd.f32 %v1671, %v1741
    %v1743 = vpop.f32.mrb[0].mxu0
    %1744 = vdwg.mxu0
    %v1745 = vld [vmem:[#allocation3] sm:$0xe]
    %s1746 = scalar_lea.vmem %s13, 56
    %v1747 = vld [vmem:[%s1746] sm:$0xf]
    %v1748 = vld [vmem:[%s1746 + $0x4] sm:$0xf]
    %v1749 = vld [vmem:[%s1746 + $0x8] sm:$0xf]
    %v1750 = vld [vmem:[%s1746 + $0xc] sm:$0xf]
    %v1751 = vld [vmem:[%s1746 + $0x10] sm:$0xf]
    %v1752 = vld [vmem:[%s1746 + $0x14] sm:$0xf]
    %v1753 = vld [vmem:[%s1746 + $0x18] sm:$0xf]
    %v1755 = vunpack.c.l.b16 %v1745
    %v1756 = vpack.c.b16 %v1597, %v1755
    %v1757 = vrot.slane %v1756, 1
    %v1765 = vunpack.c.l.b16 %v1747
    %v1766 = vunpack.c.l.b16 %v1748
    %v1767 = vunpack.c.l.b16 %v1749
    %v1768 = vunpack.c.l.b16 %v1750
    %v1769 = vunpack.c.l.b16 %v1751
    %v1770 = vunpack.c.l.b16 %v1752
    %v1771 = vunpack.c.l.b16 %v1753
    %v1772 = vpack.c.b16 %v1766, %v1765
    %v1773 = vpack.c.b16 %v1768, %v1767
    %v1774 = vpack.c.b16 %v1770, %v1769
    %v1775 = vpack.c.b16 %v1771, %v1771
    %v1780 = vsel %vm1520, %v1757, 0
    %v1783 = vsel %vm949, %v1775, 0
    %1785 = vmatprep.subr.bf16.mxu0 0
    %1786 = vmatpush1.bf16.msra.mxu0 %v1772
    %1787 = vmatprep.subr.bf16.mxu0 0
    %1788 = vmatpush1.bf16.msra.mxu0 %v1773
    %1789 = vmatprep.subr.bf16.mxu0 0
    %1790 = vmatpush1.bf16.msra.mxu0 %v1774
    %1791 = vmatprep.subr.bf16.mxu0 0
    %1792 = vmatpush1.bf16.msra.mxu0 %v1783
    %1793 = vmatprep.subr.bf16.mxu0 0
    %1794 = vmatpush1.bf16.msra.mxu0 0
    %1795 = vmatprep.subr.bf16.mxu0 0
    %1796 = vmatpush1.bf16.msra.mxu0 0
    %1797 = vmatprep.subr.bf16.mxu0 0
    %1798 = vmatpush1.bf16.msra.mxu0 0
    %1799 = vmatprep.subr.bf16.mxu0 0
    %1800 = vmatpush1.bf16.msra.mxu0 0
    %1801 = vmatprep.subr.bf16.mxu0 0
    %1802 = vmatpush1.bf16.msra.mxu0 0
    %1803 = vmatprep.subr.bf16.mxu0 0
    %1804 = vmatpush1.bf16.msra.mxu0 0
    %1805 = vmatprep.subr.bf16.mxu0 0
    %1806 = vmatpush1.bf16.msra.mxu0 0
    %1807 = vmatprep.subr.bf16.mxu0 0
    %1808 = vmatpush1.bf16.msra.mxu0 0
    %1809 = vmatprep.subr.bf16.mxu0 0
    %1810 = vmatpush1.bf16.msra.mxu0 0
    %1811 = vmatprep.subr.bf16.mxu0 0
    %1812 = vmatpush1.bf16.msra.mxu0 0
    %1813 = vmatprep.subr.bf16.mxu0 0
    %1814 = vmatpush1.bf16.msra.mxu0 0
    %1815 = vmatprep.subr.bf16.mxu0 0
    %1816 = vmatpush1.bf16.msra.mxu0 0
    %1817 = vmatprep.mubr.bf16.mxu0 0
    %1818 = vmatmul.mubr.bf16.gmra.mrb[0].mxu0 %v1780
    %v1819 = vpop.f32.mrb[0].mxu0
    %v1820 = vadd.f32 0.0, %v1819
    %v1821 = vpop.f32.mrb[0].mxu0
    %v1822 = vpop.f32.mrb[0].mxu0
    %v1823 = vadd.f32 0.0, %v1822
    %v1824 = vpop.f32.mrb[0].mxu0
    %1825 = vdwg.mxu0
    %v1826 = vadd.f32 %v1739, %v1820
    %v1827 = vadd.f32 %v1742, %v1823
    %v1828 = vld [vmem:[%s18] sm:$0xff]
    %v1829 = vld [vmem:[%s18 + $0x8] sm:$0x3]
    %1831 = vset.pattern.permute.xlu0 0
    %1832 = vperm.xlu0 %1831, %v1828
    %v1833 = vpop.permute.xlu0 %1832
    %1836 = vset.pattern.permute.xlu0 0
    %1837 = vperm.xlu0 %1836, %v1829
    %v1838 = vpop.permute.xlu0 %1837
    %v1840 = vmul.f32 %v1826, %v1833
    %v1841 = vmul.f32 %v1827, %v1838
    %vm1842 = vcmask 261120
    %v1843 = vsel %vm1842, %v1840, 0.0
    %vm1844 = vcmask 254976
    %v1845 = vsel %vm1844, %v1841, 0.0
    %v1846 = vadd.f32 %v1843, %v1845
    %v1847 = vrot.slane %v1846, 4
    %v1848 = vadd.f32 %v1846, %v1847
    %v1849 = vrot.slane %v1848, 2
    %v1850 = vadd.f32 %v1848, %v1849
    %v1851 = vrot.slane %v1850, 1
    %v1852 = vadd.f32 %v1850, %v1851
    %v1853 = vmul.f32 %v1840, %v1840
    %v1854 = vmul.f32 %v1841, %v1841
    %v1855 = vsel %vm1842, %v1853, 0.0
    %v1856 = vsel %vm1844, %v1854, 0.0
    %v1857 = vadd.f32 %v1855, %v1856
    %v1858 = vrot.slane %v1857, 4
    %v1859 = vadd.f32 %v1857, %v1858
    %v1860 = vrot.slane %v1859, 2
    %v1861 = vadd.f32 %v1859, %v1860
    %v1862 = vrot.slane %v1861, 1
    %v1863 = vadd.f32 %v1861, %v1862
    %v1864 = vsel %vm498, %v1852, %v1863
    %v1865 = vld [vmem:[%s14] sm:$0xff]
    %v1866 = vld [vmem:[%s14 + $0x8] sm:$0xff]
    %v1867 = vld [vmem:[%s14 + $0x10] sm:$0xff]
    %v1868 = vld [vmem:[%s14 + $0x18] sm:$0xff]
    %v1870 = vsel %vm1842, %v1864, 0
    %1872 = vmatprep.subr.mxu0 0.0
    %1873 = vmatpush1.msra.mxu0 %v1865
    %1874 = vmatprep.subr.mxu0 0.0
    %1875 = vmatpush1.msra.mxu0 %v1866
    %1876 = vmatprep.subr.mxu0 0.0
    %1877 = vmatpush1.msra.mxu0 %v1867
    %1878 = vmatprep.subr.mxu0 0.0
    %1879 = vmatpush1.msra.mxu0 %v1868
    %1880 = vmatprep.subr.mxu0 0.0
    %1881 = vmatpush1.msra.mxu0 0.0
    %1882 = vmatprep.subr.mxu0 0.0
    %1883 = vmatpush1.msra.mxu0 0.0
    %1884 = vmatprep.subr.mxu0 0.0
    %1885 = vmatpush1.msra.mxu0 0.0
    %1886 = vmatprep.subr.mxu0 0.0
    %1887 = vmatpush1.msra.mxu0 0.0
    %1888 = vmatprep.subr.mxu0 0.0
    %1889 = vmatpush1.msra.mxu0 0.0
    %1890 = vmatprep.subr.mxu0 0.0
    %1891 = vmatpush1.msra.mxu0 0.0
    %1892 = vmatprep.subr.mxu0 0.0
    %1893 = vmatpush1.msra.mxu0 0.0
    %1894 = vmatprep.subr.mxu0 0.0
    %1895 = vmatpush1.msra.mxu0 0.0
    %1896 = vmatprep.subr.mxu0 0.0
    %1897 = vmatpush1.msra.mxu0 0.0
    %1898 = vmatprep.subr.mxu0 0.0
    %1899 = vmatpush1.msra.mxu0 0.0
    %1900 = vmatprep.subr.mxu0 0.0
    %1901 = vmatpush1.msra.mxu0 0.0
    %1902 = vmatprep.subr.mxu0 0.0
    %1903 = vmatpush1.msra.mxu0 0.0
    %1904 = vmatprep.subr.mxu0 0.0
    %1905 = vmatpush1.msra.mxu0 0.0
    %1906 = vmatprep.subr.mxu0 0.0
    %1907 = vmatpush1.msra.mxu0 0.0
    %1908 = vmatprep.subr.mxu0 0.0
    %1909 = vmatpush1.msra.mxu0 0.0
    %1910 = vmatprep.subr.mxu0 0.0
    %1911 = vmatpush1.msra.mxu0 0.0
    %1912 = vmatprep.subr.mxu0 0.0
    %1913 = vmatpush1.msra.mxu0 0.0
    %1914 = vmatprep.subr.mxu0 0.0
    %1915 = vmatpush1.msra.mxu0 0.0
    %1916 = vmatprep.subr.mxu0 0.0
    %1917 = vmatpush1.msra.mxu0 0.0
    %1918 = vmatprep.subr.mxu0 0.0
    %1919 = vmatpush1.msra.mxu0 0.0
    %1920 = vmatprep.subr.mxu0 0.0
    %1921 = vmatpush1.msra.mxu0 0.0
    %1922 = vmatprep.subr.mxu0 0.0
    %1923 = vmatpush1.msra.mxu0 0.0
    %1924 = vmatprep.subr.mxu0 0.0
    %1925 = vmatpush1.msra.mxu0 0.0
    %1926 = vmatprep.subr.mxu0 0.0
    %1927 = vmatpush1.msra.mxu0 0.0
    %1928 = vmatprep.subr.mxu0 0.0
    %1929 = vmatpush1.msra.mxu0 0.0
    %1930 = vmatprep.subr.mxu0 0.0
    %1931 = vmatpush1.msra.mxu0 0.0
    %1932 = vmatprep.subr.mxu0 0.0
    %1933 = vmatpush1.msra.mxu0 0.0
    %1934 = vmatprep.subr.mxu0 0.0
    %1935 = vmatpush1.msra.mxu0 0.0
    %1936 = vmatprep.mubr.f32.mxu0 0.0
    %1937 = vmatmul.mubr.f32.gmra.mrb[0].mxu0 %v1870
    %v1938 = vpop.f32.mrb[0].mxu0
    %v1939 = vadd.f32 0.0, %v1938
    %v1940 = vpop.f32.mrb[0].mxu0
    %1941 = vdwg.mxu0
    %v1942 = vrcp.pop 32.0
    %v1943 = vmul.f32 %v1939, %v1942
    %v1944 = vmul.f32 %v1943, %v1943
    %v1946 = vrot.slane %v1944, 7
    %v1948 = vsub.f32 %v1943, %v1946
    %v1949 = vld [vmem:[%s16] sm:$0x1]
    %v1950 = vadd.f32 %v1948, 1e-05
    %v1951 = vrsqrt.pop %v1950
    %v1954 = vunpack.c.l.s4 1966171168
    %v1955 = vunpack.c.0.s8 %v1954
    %v1956 = vlaneseq
    %v1957 = vshrl.u32 %v1956, 7
    %v1958 = vsub.s32 %v1955, %v1957
    %v1959 = vrot.slane %v1951, %v1958
    %v1960 = vcombine.high %v1959, %v1959
    %v1962 = vunpack.c.l.s4 1966171168
    %v1963 = vunpack.c.0.s8 %v1962
    %v1964 = vlaneseq
    %v1965 = vshrl.u32 %v1964, 7
    %v1966 = vsub.s32 %v1963, %v1965
    %v1967 = vrot.slane %v1960, %v1966
    %v1969 = vmul.f32 %v1949, %v1967
    %v1970 = vld [vmem:[%s17] sm:$0x1]
    %v1971 = vmul.f32 %v1943, %v1969
    %v1972 = vsub.f32 %v1970, %v1971
    %v1974 = vlaneseq
    %v1975 = vshrl.u32 %v1974, 7
    %v1976 = vsub.s32 0, %v1975
    %v1977 = vrot.slane %v1972, %v1976
    %v1979 = vsel %vm498, %v1969, %v1977
    %v1980 = vld [vmem:[%s15] sm:$0xff]
    %v1982 = vsel %vm625, %v1979, 0
    %1984 = vmatprep.subr.mxu0 0.0
    %1985 = vmatpush1.msra.mxu0 %v1980
    %1986 = vmatprep.subr.mxu0 0.0
    %1987 = vmatpush1.msra.mxu0 0.0
    %1988 = vmatprep.subr.mxu0 0.0
    %1989 = vmatpush1.msra.mxu0 0.0
    %1990 = vmatprep.subr.mxu0 0.0
    %1991 = vmatpush1.msra.mxu0 0.0
    %1992 = vmatprep.subr.mxu0 0.0
    %1993 = vmatpush1.msra.mxu0 0.0
    %1994 = vmatprep.subr.mxu0 0.0
    %1995 = vmatpush1.msra.mxu0 0.0
    %1996 = vmatprep.subr.mxu0 0.0
    %1997 = vmatpush1.msra.mxu0 0.0
    %1998 = vmatprep.subr.mxu0 0.0
    %1999 = vmatpush1.msra.mxu0 0.0
    %2000 = vmatprep.subr.mxu0 0.0
    %2001 = vmatpush1.msra.mxu0 0.0
    %2002 = vmatprep.subr.mxu0 0.0
    %2003 = vmatpush1.msra.mxu0 0.0
    %2004 = vmatprep.subr.mxu0 0.0
    %2005 = vmatpush1.msra.mxu0 0.0
    %2006 = vmatprep.subr.mxu0 0.0
    %2007 = vmatpush1.msra.mxu0 0.0
    %2008 = vmatprep.subr.mxu0 0.0
    %2009 = vmatpush1.msra.mxu0 0.0
    %2010 = vmatprep.subr.mxu0 0.0
    %2011 = vmatpush1.msra.mxu0 0.0
    %2012 = vmatprep.subr.mxu0 0.0
    %2013 = vmatpush1.msra.mxu0 0.0
    %2014 = vmatprep.subr.mxu0 0.0
    %2015 = vmatpush1.msra.mxu0 0.0
    %2016 = vmatprep.subr.mxu0 0.0
    %2017 = vmatpush1.msra.mxu0 0.0
    %2018 = vmatprep.subr.mxu0 0.0
    %2019 = vmatpush1.msra.mxu0 0.0
    %2020 = vmatprep.subr.mxu0 0.0
    %2021 = vmatpush1.msra.mxu0 0.0
    %2022 = vmatprep.subr.mxu0 0.0
    %2023 = vmatpush1.msra.mxu0 0.0
    %2024 = vmatprep.subr.mxu0 0.0
    %2025 = vmatpush1.msra.mxu0 0.0
    %2026 = vmatprep.subr.mxu0 0.0
    %2027 = vmatpush1.msra.mxu0 0.0
    %2028 = vmatprep.subr.mxu0 0.0
    %2029 = vmatpush1.msra.mxu0 0.0
    %2030 = vmatprep.subr.mxu0 0.0
    %2031 = vmatpush1.msra.mxu0 0.0
    %2032 = vmatprep.subr.mxu0 0.0
    %2033 = vmatpush1.msra.mxu0 0.0
    %2034 = vmatprep.subr.mxu0 0.0
    %2035 = vmatpush1.msra.mxu0 0.0
    %2036 = vmatprep.subr.mxu0 0.0
    %2037 = vmatpush1.msra.mxu0 0.0
    %2038 = vmatprep.subr.mxu0 0.0
    %2039 = vmatpush1.msra.mxu0 0.0
    %2040 = vmatprep.subr.mxu0 0.0
    %2041 = vmatpush1.msra.mxu0 0.0
    %2042 = vmatprep.subr.mxu0 0.0
    %2043 = vmatpush1.msra.mxu0 0.0
    %2044 = vmatprep.subr.mxu0 0.0
    %2045 = vmatpush1.msra.mxu0 0.0
    %2046 = vmatprep.subr.mxu0 0.0
    %2047 = vmatpush1.msra.mxu0 0.0
    %2048 = vmatprep.mubr.f32.mxu0 0.0
    %2049 = vmatmul.mubr.f32.gmra.mrb[0].mxu0 %v1982
    %v2050 = vpop.f32.mrb[0].mxu0
    %v2051 = vadd.f32 0.0, %v2050
    %v2052 = vpop.f32.mrb[0].mxu0
    %2053 = vdwg.mxu0
    %v2054 = vlaneseq
    %v2055 = vshrl.u32 %v2054, 7
    %v2056 = vsub.s32 0, %v2055
    %v2057 = vrot.slane %v2051, %v2056
    %v2058 = vmul.f32 %v1826, %v2057
    %v2059 = vmul.f32 %v1827, %v2057
    %v2060 = vlaneseq
    %v2061 = vshrl.u32 %v2060, 7
    %v2062 = vsub.s32 1, %v2061
    %v2063 = vrot.slane %v2051, %v2062
    %v2064 = vadd.f32 %v2058, %v2063
    %v2065 = vadd.f32 %v2059, %v2063
    %v2066 = vmax.f32 %v2064, 0.0
    %v2067 = vmax.f32 %v2065, 0.0
    %v2070 = vrot.slane %v2066, 1
    %v2071 = vrot.slane %v2067, 1
    %v2072 = vsel %vm727, %v2070, %v2071
    %v2075 = vmax.f32 %v2066, %v2072
    %v2076 = vmax.f32 %v2067, %v2071
    %2079 = vrot.lane.b32.xlu0 %v2075, 120
    %v2080 = vpop.permute.xlu0 %2079
    %2081 = vrot.lane.b32.xlu0 %v2076, 120
    %v2082 = vpop.permute.xlu0 %2081
    %v2085 = vmax.f32 %v2075, %v2080
    %v2086 = vmax.f32 %v2076, %v2082
    %vm2087 = vcmask 195584
    %2088 = vst.msk [vmem:[#allocation5] sm:$0xff] %vm2087, %v2085
    %vm2089 = vcmask 188416
    %2090 = vst.msk [vmem:[#allocation5 + $0x8] sm:$0x1] %vm2089, %v2086
    %vm2091 = vcmask 191488
    %2092 = vst.msk [vmem:[#allocation4] sm:$0xf] %vm2091, 0
    %v2093 = vld [vmem:[#allocation5] ss:$2 sm:$0x3]
    %v2094 = vpack.c.bf16 %v2093, %v2093
    %v2096 = vunpack.c.l.b16 %v2094
    %v2097 = vpack.c.b16 %v2096, %v2096
    %v2099 = vshrl.u32 %v2097, 16
    %v2101 = vrot.slane %v2099, 7
    %v2102 = vshll.u32 %v2097, 16
    %v2104 = vor.u32 %v2101, %v2102
    %vm2106 = vcmask 189440
    %vm2107 = vsmask.f32 1282
    %vm2108 = vmand %vm2106, %vm2107
    %v2109 = vld [vmem:[#allocation4] sm:$0x3]
    %v2110 = vsel %vm2108, %v2104, %v2109
    %2111 = vst [vmem:[#allocation4] sm:$0x3] %v2110
    %s2112 = scalar_lea.vmem [#allocation5], 6
    %v2113 = vld [vmem:[%s2112] ss:$2 sm:$0x3]
    %v2114 = vpack.c.bf16 %v2113, %v2113
    %v2116 = vunpack.c.l.b16 %v2114
    %v2117 = vpack.c.b16 %v2116, %v2116
    %v2119 = vshrl.u32 %v2117, 16
    %v2121 = vrot.slane %v2119, 5
    %v2122 = vshll.u32 %v2117, 16
    %v2124 = vrot.slane %v2122, 6
    %v2125 = vor.u32 %v2121, %v2124
    %vm2127 = vcmask 191490
    %vm2128 = vsmask.f32 3338
    %vm2129 = vmand %vm2127, %vm2128
    %v2130 = vld [vmem:[#allocation4] sm:$0xc]
    %v2131 = vsel %vm2129, %v2125, %v2130
    %2132 = vst [vmem:[#allocation4] sm:$0xc] %v2131
    %v2133 = vld [vmem:[#allocation4] sm:$0x7]
    %v2134 = vld [vmem:[%s19] sm:$0xf]
    %v2135 = vld [vmem:[%s19 + $0x4] sm:$0xf]
    %v2136 = vld [vmem:[%s19 + $0x8] sm:$0xf]
    %v2137 = vld [vmem:[#allocation4] sm:$0xf]
    %s2138 = scalar_lea.vmem %s19, 12
    %v2139 = vld [vmem:[%s2138] sm:$0xf]
    %v2140 = vld [vmem:[%s2138 + $0x4] sm:$0xf]
    %v2141 = vld [vmem:[%s2138 + $0x8] sm:$0xf]
    %v2143 = vunpack.c.l.b16 %v2137
    %v2144 = vpack.c.b16 %v2143, %v2143
    %v2146 = vshrl.u32 %v2144, 16
    %v2148 = vshll.u32 %v2144, 16
    %v2150 = vrot.slane %v2148, 1
    %v2151 = vor.u32 %v2146, %v2150
    %v2155 = vunpack.c.l.b16 %v2139
    %v2156 = vunpack.c.l.b16 %v2140
    %v2157 = vunpack.c.l.b16 %v2141
    %v2158 = vpack.c.b16 %v2156, %v2155
    %v2159 = vpack.c.b16 %v2157, %v2157
    %v2162 = vsel %vm2087, %v2151, 0
    %v2165 = vsel %vm949, %v2159, 0
    %2167 = vmatprep.subr.bf16.mxu0 0
    %2168 = vmatpush1.bf16.msra.mxu0 %v2158
    %2169 = vmatprep.subr.bf16.mxu0 0
    %2170 = vmatpush1.bf16.msra.mxu0 %v2165
    %2171 = vmatprep.subr.bf16.mxu0 0
    %2172 = vmatpush1.bf16.msra.mxu0 0
    %2173 = vmatprep.subr.bf16.mxu0 0
    %2174 = vmatpush1.bf16.msra.mxu0 0
    %2175 = vmatprep.subr.bf16.mxu0 0
    %2176 = vmatpush1.bf16.msra.mxu0 0
    %2177 = vmatprep.subr.bf16.mxu0 0
    %2178 = vmatpush1.bf16.msra.mxu0 0
    %2179 = vmatprep.subr.bf16.mxu0 0
    %2180 = vmatpush1.bf16.msra.mxu0 0
    %2181 = vmatprep.subr.bf16.mxu0 0
    %2182 = vmatpush1.bf16.msra.mxu0 0
    %2183 = vmatprep.subr.bf16.mxu0 0
    %2184 = vmatpush1.bf16.msra.mxu0 0
    %2185 = vmatprep.subr.bf16.mxu0 0
    %2186 = vmatpush1.bf16.msra.mxu0 0
    %2187 = vmatprep.subr.bf16.mxu0 0
    %2188 = vmatpush1.bf16.msra.mxu0 0
    %2189 = vmatprep.subr.bf16.mxu0 0
    %2190 = vmatpush1.bf16.msra.mxu0 0
    %2191 = vmatprep.subr.bf16.mxu0 0
    %2192 = vmatpush1.bf16.msra.mxu0 0
    %2193 = vmatprep.subr.bf16.mxu0 0
    %2194 = vmatpush1.bf16.msra.mxu0 0
    %2195 = vmatprep.subr.bf16.mxu0 0
    %2196 = vmatpush1.bf16.msra.mxu0 0
    %2197 = vmatprep.subr.bf16.mxu0 0
    %2198 = vmatpush1.bf16.msra.mxu0 0
    %2199 = vmatprep.mubr.bf16.mxu0 0
    %2200 = vmatmul.mubr.bf16.gmra.mrb[0].mxu0 %v2162
    %v2201 = vpop.f32.mrb[0].mxu0
    %v2202 = vadd.f32 0.0, %v2201
    %v2203 = vpop.f32.mrb[0].mxu0
    %v2204 = vpop.f32.mrb[0].mxu0
    %v2205 = vpop.f32.mrb[0].mxu0
    %2206 = vdwg.mxu0
    %v2210 = vunpack.c.l.b16 %v2134
    %v2211 = vunpack.c.l.b16 %v2135
    %v2212 = vunpack.c.l.b16 %v2136
    %v2213 = vpack.c.b16 %v2211, %v2210
    %v2214 = vpack.c.b16 %v2212, %v2212
    %v2217 = vsel %vm2087, %v2133, 0
    %v2220 = vsel %vm949, %v2214, 0
    %2222 = vmatprep.subr.bf16.mxu0 0
    %2223 = vmatpush1.bf16.msra.mxu0 %v2213
    %2224 = vmatprep.subr.bf16.mxu0 0
    %2225 = vmatpush1.bf16.msra.mxu0 %v2220
    %2226 = vmatprep.subr.bf16.mxu0 0
    %2227 = vmatpush1.bf16.msra.mxu0 0
    %2228 = vmatprep.subr.bf16.mxu0 0
    %2229 = vmatpush1.bf16.msra.mxu0 0
    %2230 = vmatprep.subr.bf16.mxu0 0
    %2231 = vmatpush1.bf16.msra.mxu0 0
    %2232 = vmatprep.subr.bf16.mxu0 0
    %2233 = vmatpush1.bf16.msra.mxu0 0
    %2234 = vmatprep.subr.bf16.mxu0 0
    %2235 = vmatpush1.bf16.msra.mxu0 0
    %2236 = vmatprep.subr.bf16.mxu0 0
    %2237 = vmatpush1.bf16.msra.mxu0 0
    %2238 = vmatprep.subr.bf16.mxu0 0
    %2239 = vmatpush1.bf16.msra.mxu0 0
    %2240 = vmatprep.subr.bf16.mxu0 0
    %2241 = vmatpush1.bf16.msra.mxu0 0
    %2242 = vmatprep.subr.bf16.mxu0 0
    %2243 = vmatpush1.bf16.msra.mxu0 0
    %2244 = vmatprep.subr.bf16.mxu0 0
    %2245 = vmatpush1.bf16.msra.mxu0 0
    %2246 = vmatprep.subr.bf16.mxu0 0
    %2247 = vmatpush1.bf16.msra.mxu0 0
    %2248 = vmatprep.subr.bf16.mxu0 0
    %2249 = vmatpush1.bf16.msra.mxu0 0
    %2250 = vmatprep.subr.bf16.mxu0 0
    %2251 = vmatpush1.bf16.msra.mxu0 0
    %2252 = vmatprep.subr.bf16.mxu0 0
    %2253 = vmatpush1.bf16.msra.mxu0 0
    %2254 = vmatprep.mubr.bf16.mxu0 0
    %2255 = vmatmul.mubr.bf16.gmra.mrb[0].mxu0 %v2217
    %v2256 = vpop.f32.mrb[0].mxu0
    %v2257 = vadd.f32 %v2202, %v2256
    %v2258 = vpop.f32.mrb[0].mxu0
    %v2259 = vpop.f32.mrb[0].mxu0
    %v2260 = vpop.f32.mrb[0].mxu0
    %2261 = vdwg.mxu0
    %v2262 = vld [vmem:[#allocation4] sm:$0xe]
    %s2263 = scalar_lea.vmem %s19, 24
    %v2264 = vld [vmem:[%s2263] sm:$0xf]
    %v2265 = vld [vmem:[%s2263 + $0x4] sm:$0xf]
    %v2266 = vld [vmem:[%s2263 + $0x8] sm:$0xf]
    %v2268 = vunpack.c.l.b16 %v2262
    %v2269 = vpack.c.b16 %v2268, %v2268
    %v2270 = vrot.slane %v2269, 1
    %v2274 = vunpack.c.l.b16 %v2264
    %v2275 = vunpack.c.l.b16 %v2265
    %v2276 = vunpack.c.l.b16 %v2266
    %v2277 = vpack.c.b16 %v2275, %v2274
    %v2278 = vpack.c.b16 %v2276, %v2276
    %v2281 = vsel %vm2087, %v2270, 0
    %v2284 = vsel %vm949, %v2278, 0
    %2286 = vmatprep.subr.bf16.mxu0 0
    %2287 = vmatpush1.bf16.msra.mxu0 %v2277
    %2288 = vmatprep.subr.bf16.mxu0 0
    %2289 = vmatpush1.bf16.msra.mxu0 %v2284
    %2290 = vmatprep.subr.bf16.mxu0 0
    %2291 = vmatpush1.bf16.msra.mxu0 0
    %2292 = vmatprep.subr.bf16.mxu0 0
    %2293 = vmatpush1.bf16.msra.mxu0 0
    %2294 = vmatprep.subr.bf16.mxu0 0
    %2295 = vmatpush1.bf16.msra.mxu0 0
    %2296 = vmatprep.subr.bf16.mxu0 0
    %2297 = vmatpush1.bf16.msra.mxu0 0
    %2298 = vmatprep.subr.bf16.mxu0 0
    %2299 = vmatpush1.bf16.msra.mxu0 0
    %2300 = vmatprep.subr.bf16.mxu0 0
    %2301 = vmatpush1.bf16.msra.mxu0 0
    %2302 = vmatprep.subr.bf16.mxu0 0
    %2303 = vmatpush1.bf16.msra.mxu0 0
    %2304 = vmatprep.subr.bf16.mxu0 0
    %2305 = vmatpush1.bf16.msra.mxu0 0
    %2306 = vmatprep.subr.bf16.mxu0 0
    %2307 = vmatpush1.bf16.msra.mxu0 0
    %2308 = vmatprep.subr.bf16.mxu0 0
    %2309 = vmatpush1.bf16.msra.mxu0 0
    %2310 = vmatprep.subr.bf16.mxu0 0
    %2311 = vmatpush1.bf16.msra.mxu0 0
    %2312 = vmatprep.subr.bf16.mxu0 0
    %2313 = vmatpush1.bf16.msra.mxu0 0
    %2314 = vmatprep.subr.bf16.mxu0 0
    %2315 = vmatpush1.bf16.msra.mxu0 0
    %2316 = vmatprep.subr.bf16.mxu0 0
    %2317 = vmatpush1.bf16.msra.mxu0 0
    %2318 = vmatprep.mubr.bf16.mxu0 0
    %2319 = vmatmul.mubr.bf16.gmra.mrb[0].mxu0 %v2281
    %v2320 = vpop.f32.mrb[0].mxu0
    %v2321 = vadd.f32 0.0, %v2320
    %v2322 = vpop.f32.mrb[0].mxu0
    %v2323 = vpop.f32.mrb[0].mxu0
    %v2324 = vpop.f32.mrb[0].mxu0
    %2325 = vdwg.mxu0
    %v2326 = vadd.f32 %v2257, %v2321
    %v2327 = vld [vmem:[%s24] sm:$0x3f]
    %2329 = vset.pattern.permute.xlu0 0
    %2330 = vperm.xlu0 %2329, %v2327
    %v2331 = vpop.permute.xlu0 %2330
    %v2333 = vmul.f32 %v2326, %v2331
    %vm2334 = vcmask 62464
    %v2335 = vsel %vm2334, %v2333, 0.0
    %v2336 = vrot.slane %v2335, 4
    %v2337 = vadd.f32 %v2335, %v2336
    %v2338 = vrot.slane %v2337, 2
    %v2339 = vadd.f32 %v2337, %v2338
    %v2340 = vrot.slane %v2339, 1
    %v2341 = vadd.f32 %v2339, %v2340
    %v2342 = vmul.f32 %v2333, %v2333
    %v2343 = vsel %vm2334, %v2342, 0.0
    %v2344 = vrot.slane %v2343, 4
    %v2345 = vadd.f32 %v2343, %v2344
    %v2346 = vrot.slane %v2345, 2
    %v2347 = vadd.f32 %v2345, %v2346
    %v2348 = vrot.slane %v2347, 1
    %v2349 = vadd.f32 %v2347, %v2348
    %v2350 = vsel %vm498, %v2341, %v2349
    %v2351 = vld [vmem:[%s20] sm:$0xff]
    %v2353 = vsel %vm625, %v2350, 0
    %2355 = vmatprep.subr.mxu0 0.0
    %2356 = vmatpush1.msra.mxu0 %v2351
    %2357 = vmatprep.subr.mxu0 0.0
    %2358 = vmatpush1.msra.mxu0 0.0
    %2359 = vmatprep.subr.mxu0 0.0
    %2360 = vmatpush1.msra.mxu0 0.0
    %2361 = vmatprep.subr.mxu0 0.0
    %2362 = vmatpush1.msra.mxu0 0.0
    %2363 = vmatprep.subr.mxu0 0.0
    %2364 = vmatpush1.msra.mxu0 0.0
    %2365 = vmatprep.subr.mxu0 0.0
    %2366 = vmatpush1.msra.mxu0 0.0
    %2367 = vmatprep.subr.mxu0 0.0
    %2368 = vmatpush1.msra.mxu0 0.0
    %2369 = vmatprep.subr.mxu0 0.0
    %2370 = vmatpush1.msra.mxu0 0.0
    %2371 = vmatprep.subr.mxu0 0.0
    %2372 = vmatpush1.msra.mxu0 0.0
    %2373 = vmatprep.subr.mxu0 0.0
    %2374 = vmatpush1.msra.mxu0 0.0
    %2375 = vmatprep.subr.mxu0 0.0
    %2376 = vmatpush1.msra.mxu0 0.0
    %2377 = vmatprep.subr.mxu0 0.0
    %2378 = vmatpush1.msra.mxu0 0.0
    %2379 = vmatprep.subr.mxu0 0.0
    %2380 = vmatpush1.msra.mxu0 0.0
    %2381 = vmatprep.subr.mxu0 0.0
    %2382 = vmatpush1.msra.mxu0 0.0
    %2383 = vmatprep.subr.mxu0 0.0
    %2384 = vmatpush1.msra.mxu0 0.0
    %2385 = vmatprep.subr.mxu0 0.0
    %2386 = vmatpush1.msra.mxu0 0.0
    %2387 = vmatprep.subr.mxu0 0.0
    %2388 = vmatpush1.msra.mxu0 0.0
    %2389 = vmatprep.subr.mxu0 0.0
    %2390 = vmatpush1.msra.mxu0 0.0
    %2391 = vmatprep.subr.mxu0 0.0
    %2392 = vmatpush1.msra.mxu0 0.0
    %2393 = vmatprep.subr.mxu0 0.0
    %2394 = vmatpush1.msra.mxu0 0.0
    %2395 = vmatprep.subr.mxu0 0.0
    %2396 = vmatpush1.msra.mxu0 0.0
    %2397 = vmatprep.subr.mxu0 0.0
    %2398 = vmatpush1.msra.mxu0 0.0
    %2399 = vmatprep.subr.mxu0 0.0
    %2400 = vmatpush1.msra.mxu0 0.0
    %2401 = vmatprep.subr.mxu0 0.0
    %2402 = vmatpush1.msra.mxu0 0.0
    %2403 = vmatprep.subr.mxu0 0.0
    %2404 = vmatpush1.msra.mxu0 0.0
    %2405 = vmatprep.subr.mxu0 0.0
    %2406 = vmatpush1.msra.mxu0 0.0
    %2407 = vmatprep.subr.mxu0 0.0
    %2408 = vmatpush1.msra.mxu0 0.0
    %2409 = vmatprep.subr.mxu0 0.0
    %2410 = vmatpush1.msra.mxu0 0.0
    %2411 = vmatprep.subr.mxu0 0.0
    %2412 = vmatpush1.msra.mxu0 0.0
    %2413 = vmatprep.subr.mxu0 0.0
    %2414 = vmatpush1.msra.mxu0 0.0
    %2415 = vmatprep.subr.mxu0 0.0
    %2416 = vmatpush1.msra.mxu0 0.0
    %2417 = vmatprep.subr.mxu0 0.0
    %2418 = vmatpush1.msra.mxu0 0.0
    %2419 = vmatprep.mubr.f32.mxu0 0.0
    %2420 = vmatmul.mubr.f32.gmra.mrb[0].mxu0 %v2353
    %v2421 = vpop.f32.mrb[0].mxu0
    %v2422 = vadd.f32 0.0, %v2421
    %v2423 = vpop.f32.mrb[0].mxu0
    %2424 = vdwg.mxu0
    %v2425 = vrcp.pop 8.0
    %v2426 = vmul.f32 %v2422, %v2425
    %v2427 = vmul.f32 %v2426, %v2426
    %v2429 = vrot.slane %v2427, 7
    %v2431 = vsub.f32 %v2426, %v2429
    %v2432 = vld [vmem:[%s22] sm:$0x1]
    %v2433 = vadd.f32 %v2431, 1e-05
    %v2434 = vrsqrt.pop %v2433
    %v2437 = vunpack.c.l.s4 1966171168
    %v2438 = vunpack.c.0.s8 %v2437
    %v2439 = vlaneseq
    %v2440 = vshrl.u32 %v2439, 7
    %v2441 = vsub.s32 %v2438, %v2440
    %v2442 = vrot.slane %v2434, %v2441
    %v2443 = vcombine.high %v2442, %v2442
    %v2445 = vunpack.c.l.s4 1966171168
    %v2446 = vunpack.c.0.s8 %v2445
    %v2447 = vlaneseq
    %v2448 = vshrl.u32 %v2447, 7
    %v2449 = vsub.s32 %v2446, %v2448
    %v2450 = vrot.slane %v2443, %v2449
    %v2452 = vmul.f32 %v2432, %v2450
    %v2453 = vld [vmem:[%s23] sm:$0x1]
    %v2454 = vmul.f32 %v2426, %v2452
    %v2455 = vsub.f32 %v2453, %v2454
    %v2457 = vlaneseq
    %v2458 = vshrl.u32 %v2457, 7
    %v2459 = vsub.s32 0, %v2458
    %v2460 = vrot.slane %v2455, %v2459
    %v2462 = vsel %vm498, %v2452, %v2460
    %v2463 = vld [vmem:[%s21] sm:$0xf]
    %vm2464 = vcmask 31744
    %v2466 = vsel %vm2464, %v2462, 0
    %v2469 = vsel %vm949, %v2463, 0
    %2471 = vmatprep.subr.mxu0 0.0
    %2472 = vmatpush1.msra.mxu0 %v2469
    %2473 = vmatprep.subr.mxu0 0.0
    %2474 = vmatpush1.msra.mxu0 0.0
    %2475 = vmatprep.subr.mxu0 0.0
    %2476 = vmatpush1.msra.mxu0 0.0
    %2477 = vmatprep.subr.mxu0 0.0
    %2478 = vmatpush1.msra.mxu0 0.0
    %2479 = vmatprep.subr.mxu0 0.0
    %2480 = vmatpush1.msra.mxu0 0.0
    %2481 = vmatprep.subr.mxu0 0.0
    %2482 = vmatpush1.msra.mxu0 0.0
    %2483 = vmatprep.subr.mxu0 0.0
    %2484 = vmatpush1.msra.mxu0 0.0
    %2485 = vmatprep.subr.mxu0 0.0
    %2486 = vmatpush1.msra.mxu0 0.0
    %2487 = vmatprep.subr.mxu0 0.0
    %2488 = vmatpush1.msra.mxu0 0.0
    %2489 = vmatprep.subr.mxu0 0.0
    %2490 = vmatpush1.msra.mxu0 0.0
    %2491 = vmatprep.subr.mxu0 0.0
    %2492 = vmatpush1.msra.mxu0 0.0
    %2493 = vmatprep.subr.mxu0 0.0
    %2494 = vmatpush1.msra.mxu0 0.0
    %2495 = vmatprep.subr.mxu0 0.0
    %2496 = vmatpush1.msra.mxu0 0.0
    %2497 = vmatprep.subr.mxu0 0.0
    %2498 = vmatpush1.msra.mxu0 0.0
    %2499 = vmatprep.subr.mxu0 0.0
    %2500 = vmatpush1.msra.mxu0 0.0
    %2501 = vmatprep.subr.mxu0 0.0
    %2502 = vmatpush1.msra.mxu0 0.0
    %2503 = vmatprep.subr.mxu0 0.0
    %2504 = vmatpush1.msra.mxu0 0.0
    %2505 = vmatprep.subr.mxu0 0.0
    %2506 = vmatpush1.msra.mxu0 0.0
    %2507 = vmatprep.subr.mxu0 0.0
    %2508 = vmatpush1.msra.mxu0 0.0
    %2509 = vmatprep.subr.mxu0 0.0
    %2510 = vmatpush1.msra.mxu0 0.0
    %2511 = vmatprep.subr.mxu0 0.0
    %2512 = vmatpush1.msra.mxu0 0.0
    %2513 = vmatprep.subr.mxu0 0.0
    %2514 = vmatpush1.msra.mxu0 0.0
    %2515 = vmatprep.subr.mxu0 0.0
    %2516 = vmatpush1.msra.mxu0 0.0
    %2517 = vmatprep.subr.mxu0 0.0
    %2518 = vmatpush1.msra.mxu0 0.0
    %2519 = vmatprep.subr.mxu0 0.0
    %2520 = vmatpush1.msra.mxu0 0.0
    %2521 = vmatprep.subr.mxu0 0.0
    %2522 = vmatpush1.msra.mxu0 0.0
    %2523 = vmatprep.subr.mxu0 0.0
    %2524 = vmatpush1.msra.mxu0 0.0
    %2525 = vmatprep.subr.mxu0 0.0
    %2526 = vmatpush1.msra.mxu0 0.0
    %2527 = vmatprep.subr.mxu0 0.0
    %2528 = vmatpush1.msra.mxu0 0.0
    %2529 = vmatprep.subr.mxu0 0.0
    %2530 = vmatpush1.msra.mxu0 0.0
    %2531 = vmatprep.subr.mxu0 0.0
    %2532 = vmatpush1.msra.mxu0 0.0
    %2533 = vmatprep.subr.mxu0 0.0
    %2534 = vmatpush1.msra.mxu0 0.0
    %2535 = vmatprep.mubr.f32.mxu0 0.0
    %2536 = vmatmul.mubr.f32.gmra.mrb[0].mxu0 %v2466
    %v2537 = vpop.f32.mrb[0].mxu0
    %v2538 = vadd.f32 0.0, %v2537
    %v2539 = vpop.f32.mrb[0].mxu0
    %2540 = vdwg.mxu0
    %v2541 = vlaneseq
    %v2542 = vshrl.u32 %v2541, 7
    %v2543 = vsub.s32 0, %v2542
    %v2544 = vrot.slane %v2538, %v2543
    %v2545 = vmul.f32 %v2326, %v2544
    %v2546 = vlaneseq
    %v2547 = vshrl.u32 %v2546, 7
    %v2548 = vsub.s32 1, %v2547
    %v2549 = vrot.slane %v2538, %v2548
    %v2550 = vadd.f32 %v2545, %v2549
    %v2551 = vmax.f32 %v2550, 0.0
    %v2553 = vrot.slane %v2551, 1
    %v2555 = vmax.f32 %v2551, %v2553
    %2557 = vrot.lane.b32.xlu0 %v2555, 124
    %v2558 = vpop.permute.xlu0 %2557
    %v2560 = vmax.f32 %v2555, %v2558
    %vm2561 = vcmask 28672
    %2562 = vst.msk [vmem:[#allocation5] sm:$0x1f] %vm2561, %v2560
    %v2563 = vld [vmem:[#allocation5] ss:$4 sm:$0x3]
    %vm2564 = vcmask 25600
    %2565 = vst.msk [vmem:[#allocation6] sm:$0x3] %vm2564, %v2563
    // Predicated region
    $region102: #{tpu_custom_call.1} parent=1 // pred_check
      _
    $region103: #{tpu_custom_call.1} parent=1 // pred_check_branch
      %2567 = sbr.rel (0) target = $region105
    $region104: #{tpu_custom_call.1} parent=1 // pred_region
      %s2569 = ssub.s32 32, 32
      %2570 = vsyncadd [#allocation7], %s2569
      %s2572 = sshll.u32 [#allocation6], 4
      %s2573 = int_to_ptr.vmem [resolvable:$true] %s2572
      %2575 = dma.vmem_to_hbm [thread:$0]  %s2573, 32, %s25, [#allocation7]
    $region105: #{tpu_custom_call.1} parent=1 // pred_fallthru
      _
    // Predicated region
    $region106: #{tpu_custom_call.1} parent=1 // pred_check
      _
    $region107: #{tpu_custom_call.1} parent=1 // pred_check_branch
      %2577 = sbr.rel (0) target = $region109
    $region108: #{tpu_custom_call.1} parent=1 // pred_region
      %2578 = dma.done [#allocation7], 32
    $region109: #{tpu_custom_call.1} parent=1 // pred_fallthru
      _
    %2579 = vsyncpa [#allocation7], 1

</llo_original>
